<compile_context>
chip_gen: v7x
topology: tpu7x:2x2x1
jax: 0.10.0
libtpu: 0.0.40
codegen_flags: <defaults>
</compile_context>

<pallas_src>
import functools

import jax
import jax.numpy as jnp
from jax.experimental import pallas as pl
from jax.experimental.pallas import tpu as pltpu


def _sigmoid(z):
    # exp routes to the EUP; exact divide keeps numerics close to the XLA reference.
    return 1.0 / (1.0 + jnp.exp(-z))


# ------------------------------------------------------------------------------ kernel
def _cbam_fused_kernel(h, w, k, pad, inv_s, inv_c,
                       wsp_ref, x_ref, wd_ref, wu_ref,      # inputs
                       o_ref,                               # output
                       pad_ref, sg_ref, pool_ref):          # VMEM scratch
    """Whole CBAM forward for one batch element; x_ref block is (1, C, S), lane axis = S."""
    f32 = jnp.float32
    x = x_ref[0].astype(f32)                                # (C, S) slab, resident in VMEM

    # ---- channel attention: global max / avg pool over S (lane reduce) + tiny MLP gate.
    mx = jnp.max(x, axis=1, keepdims=True)                  # (C, 1)
    av = jnp.sum(x, axis=1, keepdims=True) * inv_s          # (C, 1)
    # Stack both pooling branches into one (C, 2) operand -> single matmul pair.
    pool_ref[:, 0:1] = mx
    pool_ref[:, 1:2] = av
    pooled = pool_ref[...]                                  # (C, 2)
    hid = jnp.maximum(
        jnp.dot(wd_ref[...], pooled, preferred_element_type=f32), 0.0)   # (Cr, 2)
    z = jnp.dot(wu_ref[...], hid, preferred_element_type=f32)            # (C, 2)
    gate = _sigmoid(z[:, 0:1] + z[:, 1:2])                  # (C, 1) channel gate

    x1 = x * gate                                           # (C, S), VMEM only

    # ---- spatial attention: channel max / mean (sublane reduce) -> padded (H, W) maps.
    cmax = jnp.max(x1, axis=0, keepdims=True)               # (1, S)
    cmean = jnp.sum(x1, axis=0, keepdims=True) * inv_c      # (1, S)

    pad_ref[...] = jnp.zeros_like(pad_ref)                  # zero the K//2 halo border
    for r in range(h):                                      # lane-dense (1,S) -> padded (H,W)
        pad_ref[0, pad + r:pad + r + 1, pad:pad + w] = cmax[:, r * w:(r + 1) * w]
        pad_ref[1, pad + r:pad + r + 1, pad:pad + w] = cmean[:, r * w:(r + 1) * w]

    # KxK, 2-in / 1-out conv as an unrolled VPU tap sum; weights read as SMEM scalars.
    acc = jnp.zeros((h, w), f32)
    for j in range(k):                                      # lane (W) tap offset via ref window
        win_max = pad_ref[0, :, j:j + w]                    # (H + k - 1, W)
        win_mean = pad_ref[1, :, j:j + w]
        for i in range(k):                                  # sublane (H) tap offset via value slice
            acc = acc + wsp_ref[i * k + j] * win_max[i:i + h, :]
            acc = acc + wsp_ref[k * k + i * k + j] * win_mean[i:i + h, :]

    for r in range(h):                                      # (H, W) logits -> lane-dense (1, S)
        sg_ref[:, r * w:(r + 1) * w] = acc[r:r + 1, :]
    sgate = _sigmoid(sg_ref[...])                           # (1, S) spatial gate

    # ---- out = spatial_gate * channel_gate * x, single HBM write.
    o_ref[0] = (x1 * sgate).astype(o_ref.dtype)


# ------------------------------------------------------------------------------ forward
def cbam2d_forward(x_nchw, w_mlp_down, w_mlp_up, w_spatial):
    """CBAM2D.forward.  x: (N,C,H,W); w_mlp_down: (C//r, C, 1, 1); w_mlp_up: (C, C//r, 1, 1);
    w_spatial: (1, 2, k, k).  Returns (N, C, H, W)."""
    N, C, H, W = x_nchw.shape
    Cr = w_mlp_down.shape[0]
    K = w_spatial.shape[-1]
    pad = K // 2
    S = H * W
    Hp, Wp = H + 2 * pad, W + 2 * pad
    f32 = jnp.float32

    # Free, transpose-less views / tiny weight reshapes (no extra HBM pass over x).
    x_ncs = x_nchw.reshape(N, C, S)
    w_down = w_mlp_down.reshape(Cr, C)                      # (Cr, C)
    w_up = w_mlp_up.reshape(C, Cr)                          # (C, Cr)
    w_sp_flat = w_spatial.reshape(-1).astype(f32)           # (2*K*K,): [max taps | mean taps]

    # VMEM budget: in + out slabs (double-buffered by the pipeline) + value temps + scratch.
    slab = C * S * x_nchw.dtype.itemsize
    scratch = (2 * Hp * Wp + S + 2 * C) * 4 + 2 * C * Cr * 4
    vmem_need = 4 * slab + 3 * C * S * 4 + scratch
    vmem_limit = int(min(max(vmem_need * 3 // 2, 32 << 20), 96 << 20))
    # TODO(synk): per-batch slabs beyond ~20-40 MiB (v7x/v6e budgets) need the S-tiled
    # two-pass fallback (pool+MLP pass, then stats/conv/apply pass); not needed here.
    # TODO(synk): for N == 1 on v7x, split H rows into a second "parallel" grid axis so
    # both TensorCores are used.

    kernel = functools.partial(_cbam_fused_kernel, H, W, K, pad, 1.0 / S, 1.0 / C)
    out_ncs = pl.pallas_call(
        kernel,
        out_shape=jax.ShapeDtypeStruct((N, C, S), x_nchw.dtype),
        grid=(N,),
        in_specs=[pl.BlockSpec(memory_space=pltpu.MemorySpace.SMEM),   # conv tap weights
                  pl.BlockSpec((1, C, S), lambda n: (n, 0, 0)),        # x slab for batch n
                  pl.BlockSpec((Cr, C), lambda n: (0, 0)),             # MLP down weight
                  pl.BlockSpec((C, Cr), lambda n: (0, 0))],            # MLP up weight
        out_specs=pl.BlockSpec((1, C, S), lambda n: (n, 0, 0)),
        scratch_shapes=[pltpu.VMEM((2, Hp, Wp), f32),                  # padded max/mean maps
                        pltpu.VMEM((1, S), f32),                       # spatial-gate logits
                        pltpu.VMEM((C, 2), f32)],                      # stacked pooled stats
        compiler_params=pltpu.CompilerParams(
            dimension_semantics=("parallel",),
            vmem_limit_bytes=vmem_limit),
    )(w_sp_flat, x_ncs, w_down, w_up)

    return out_ncs.reshape(N, C, H, W)


# ---------------------------------------------------------------------------- reference
def cbam2d_reference(x, w_mlp_down, w_mlp_up, w_spatial):
    """Pure-JAX mirror of the PyTorch CBAM2D.forward (validation only)."""
    n, c, h, w = x.shape
    cr = w_mlp_down.shape[0]
    k = w_spatial.shape[-1]
    mx = jnp.max(x, axis=(2, 3))
    av = jnp.mean(x, axis=(2, 3))

    def mlp(v):
        return jnp.maximum(v @ w_mlp_down.reshape(cr, c).T, 0.0) @ w_mlp_up.reshape(c, cr).T

    gate = jax.nn.sigmoid(mlp(mx) + mlp(av))[:, :, None, None]
    x1 = gate * x
    sp_in = jnp.concatenate([jnp.max(x1, axis=1, keepdims=True),
                             jnp.mean(x1, axis=1, keepdims=True)], axis=1)
    logit = jax.lax.conv_general_dilated(
        sp_in, w_spatial, window_strides=(1, 1),
        padding=[(k // 2, k // 2), (k // 2, k // 2)],
        dimension_numbers=("NCHW", "OIHW", "NCHW"))
    return jax.nn.sigmoid(logit) * x1


# --------------------------------------------------------------------------------- main
if __name__ == "__main__":
    key = jax.random.PRNGKey(0)
    k1, k2, k3, k4 = jax.random.split(key, 4)

    # CBAM2D(channel=256, reduction=16, spatial_kernel=7) on a small NCHW activation.
    N, C, H, W = 2, 256, 16, 16
    reduction, K = 16, 7
    Cr = C // reduction

    x = jax.random.normal(k1, (N, C, H, W), dtype=jnp.float32)
    w_mlp_down = jax.random.normal(k2, (Cr, C, 1, 1), dtype=jnp.float32) * (C ** -0.5)
    w_mlp_up = jax.random.normal(k3, (C, Cr, 1, 1), dtype=jnp.float32) * (Cr ** -0.5)
    w_spatial = jax.random.normal(k4, (1, 2, K, K), dtype=jnp.float32) * (1.0 / K)

    fwd = jax.jit(cbam2d_forward)
    out = fwd(x, w_mlp_down, w_mlp_up, w_spatial)
    jax.block_until_ready(out)

    ref = cbam2d_reference(x, w_mlp_down, w_mlp_up, w_spatial)
    assert out.shape == (N, C, H, W)
    assert bool(jnp.all(jnp.isfinite(out)))
    # Tolerance covers TPU default-precision matmul/conv drift between Pallas and XLA.
    assert bool(jnp.allclose(out, ref, atol=1e-2, rtol=1e-2)), float(
        jnp.max(jnp.abs(out - ref)))
    print("KERNEL_OK")
</pallas_src>

<mosaic_0001>
module attributes {stable_mosaic.version = 11 : i64} {
  func.func @_cbam_fused_kernel(%arg0: i32, %arg1: memref<98xf32, #tpu.memory_space<smem>>, %arg2: memref<1x256x256xf32, #tpu.memory_space<vmem>>, %arg3: memref<16x256xf32, #tpu.memory_space<vmem>>, %arg4: memref<256x16xf32, #tpu.memory_space<vmem>>, %arg5: memref<1x256x256xf32, #tpu.memory_space<vmem>>, %arg6: memref<2x22x22xf32, #tpu.memory_space<vmem>>, %arg7: memref<1x256xf32, #tpu.memory_space<vmem>>, %arg8: memref<256x2xf32, #tpu.memory_space<vmem>>) attributes {dimension_semantics = [#tpu.dimension_semantics<parallel>], iteration_bounds = array<i64: 2>, scalar_prefetch = 0 : i64, scratch_operands = 3 : i64, tpu.core_type = #tpu.core_type<tc>, window_params = [{transform_indices = @transform_0, window_bounds = array<i64: 98>}, {transform_indices = @transform_1, window_bounds = array<i64: 1, 256, 256>}, {pipeline_mode = #tpu.pipeline_mode<synchronous>, transform_indices = @transform_2, window_bounds = array<i64: 16, 256>}, {pipeline_mode = #tpu.pipeline_mode<synchronous>, transform_indices = @transform_3, window_bounds = array<i64: 256, 16>}, {transform_indices = @transform_4, window_bounds = array<i64: 1, 256, 256>}]} {
    %c0 = arith.constant 0 : index
    %c0_0 = arith.constant 0 : index
    %c0_1 = arith.constant 0 : index
    %0 = vector.load %arg2[%c0, %c0_0, %c0_1] : memref<1x256x256xf32, #tpu.memory_space<vmem>>, vector<1x256x256xf32>
    %1 = vector.shape_cast %0 : vector<1x256x256xf32> to vector<256x256xf32>
    %cst = arith.constant dense<0xFF800000> : vector<256xf32>
    %2 = vector.multi_reduction <maximumf>, %1, %cst [1] : vector<256x256xf32> to vector<256xf32>
    %3 = vector.shape_cast %2 : vector<256xf32> to vector<256x1xf32>
    %cst_2 = arith.constant dense<0.000000e+00> : vector<256xf32>
    %4 = vector.multi_reduction <add>, %1, %cst_2 [1] : vector<256x256xf32> to vector<256xf32>
    %5 = vector.shape_cast %4 : vector<256xf32> to vector<256x1xf32>
    %cst_3 = arith.constant 3.906250e-03 : f32
    %6 = vector.broadcast %cst_3 : f32 to vector<256x1xf32>
    %7 = arith.mulf %5, %6 : vector<256x1xf32>
    %c0_4 = arith.constant 0 : index
    %c0_5 = arith.constant 0 : index
    %8 = vector.load %arg8[%c0_4, %c0_5] : memref<256x2xf32, #tpu.memory_space<vmem>>, vector<256x1xf32>
    tpu.vector_store %arg8[%c0_4, %c0_5], %3 {strides = array<i32>} : memref<256x2xf32, #tpu.memory_space<vmem>>, vector<256x1xf32>,
    %c0_6 = arith.constant 0 : index
    %c1 = arith.constant 1 : index
    %9 = vector.load %arg8[%c0_6, %c1] : memref<256x2xf32, #tpu.memory_space<vmem>>, vector<256x1xf32>
    tpu.vector_store %arg8[%c0_6, %c1], %7 {strides = array<i32>} : memref<256x2xf32, #tpu.memory_space<vmem>>, vector<256x1xf32>,
    %c0_7 = arith.constant 0 : index
    %c0_8 = arith.constant 0 : index
    %10 = vector.load %arg8[%c0_7, %c0_8] : memref<256x2xf32, #tpu.memory_space<vmem>>, vector<256x2xf32>
    %c0_9 = arith.constant 0 : index
    %c0_10 = arith.constant 0 : index
    %11 = vector.load %arg3[%c0_9, %c0_10] : memref<16x256xf32, #tpu.memory_space<vmem>>, vector<16x256xf32>
    %cst_11 = arith.constant dense<0.000000e+00> : vector<16x2xf32>
    %12 = tpu.matmul %11, %10, %cst_11 {dimension_numbers = #tpu.dot_dimension_numbers<[1], [0], [0], [1], [0, 0, 1, 1], [], []>} : vector<16x256xf32>, vector<256x2xf32>, vector<16x2xf32> -> vector<16x2xf32>
    %cst_12 = arith.constant 0.000000e+00 : f32
    %13 = vector.broadcast %cst_12 : f32 to vector<16x2xf32>
    %14 = arith.maximumf %12, %13 : vector<16x2xf32>
    %c0_13 = arith.constant 0 : index
    %c0_14 = arith.constant 0 : index
    %15 = vector.load %arg4[%c0_13, %c0_14] : memref<256x16xf32, #tpu.memory_space<vmem>>, vector<256x16xf32>
    %cst_15 = arith.constant dense<0.000000e+00> : vector<256x2xf32>
    %16 = tpu.matmul %15, %14, %cst_15 {dimension_numbers = #tpu.dot_dimension_numbers<[1], [0], [0], [1], [0, 0, 1, 1], [], []>} : vector<256x16xf32>, vector<16x2xf32>, vector<256x2xf32> -> vector<256x2xf32>
    %17 = vector.extract_strided_slice %16 {offsets = [0, 0], sizes = [256, 1], strides = [1, 1]} : vector<256x2xf32> to vector<256x1xf32>
    %18 = vector.extract_strided_slice %16 {offsets = [0, 1], sizes = [256, 1], strides = [1, 1]} : vector<256x2xf32> to vector<256x1xf32>
    %19 = arith.addf %17, %18 : vector<256x1xf32>
    %cst_16 = arith.constant 0.000000e+00 : f32
    %20 = vector.broadcast %cst_16 : f32 to vector<256x1xf32>
    %21 = arith.subf %20, %19 : vector<256x1xf32>
    %22 = math.exp %21 : vector<256x1xf32>
    %cst_17 = arith.constant 1.000000e+00 : f32
    %23 = vector.broadcast %cst_17 : f32 to vector<256x1xf32>
    %24 = arith.addf %23, %22 : vector<256x1xf32>
    %cst_18 = arith.constant 1.000000e+00 : f32
    %25 = vector.broadcast %cst_18 : f32 to vector<256x1xf32>
    %26 = arith.divf %25, %24 : vector<256x1xf32>
    %27 = vector.broadcast %26 : vector<256x1xf32> to vector<256x256xf32>
    %28 = arith.mulf %1, %27 : vector<256x256xf32>
    %cst_19 = arith.constant dense<0xFF800000> : vector<256xf32>
    %29 = vector.multi_reduction <maximumf>, %28, %cst_19 [0] : vector<256x256xf32> to vector<256xf32>
    %30 = vector.shape_cast %29 : vector<256xf32> to vector<1x256xf32>
    %cst_20 = arith.constant dense<0.000000e+00> : vector<256xf32>
    %31 = vector.multi_reduction <add>, %28, %cst_20 [0] : vector<256x256xf32> to vector<256xf32>
    %32 = vector.shape_cast %31 : vector<256xf32> to vector<1x256xf32>
    %cst_21 = arith.constant 3.906250e-03 : f32
    %33 = vector.broadcast %cst_21 : f32 to vector<1x256xf32>
    %34 = arith.mulf %32, %33 : vector<1x256xf32>
    %cst_22 = arith.constant 0.000000e+00 : f32
    %35 = vector.broadcast %cst_22 : f32 to vector<2x22x22xf32>
    %c0_23 = arith.constant 0 : index
    %c0_24 = arith.constant 0 : index
    %c0_25 = arith.constant 0 : index
    %36 = vector.load %arg6[%c0_23, %c0_24, %c0_25] : memref<2x22x22xf32, #tpu.memory_space<vmem>>, vector<2x22x22xf32>
    tpu.vector_store %arg6[%c0_23, %c0_24, %c0_25], %35 {strides = array<i32>} : memref<2x22x22xf32, #tpu.memory_space<vmem>>, vector<2x22x22xf32>,
    %37 = vector.extract_strided_slice %30 {offsets = [0, 0], sizes = [1, 16], strides = [1, 1]} : vector<1x256xf32> to vector<1x16xf32>
    %c0_26 = arith.constant 0 : index
    %c3 = arith.constant 3 : index
    %c3_27 = arith.constant 3 : index
    %38 = vector.load %arg6[%c0_26, %c3, %c3_27] : memref<2x22x22xf32, #tpu.memory_space<vmem>>, vector<1x1x16xf32>
    %39 = vector.shape_cast %38 : vector<1x1x16xf32> to vector<1x16xf32>
    %40 = vector.shape_cast %37 : vector<1x16xf32> to vector<1x1x16xf32>
    tpu.vector_store %arg6[%c0_26, %c3, %c3_27], %40 {strides = array<i32>} : memref<2x22x22xf32, #tpu.memory_space<vmem>>, vector<1x1x16xf32>,
    %41 = vector.extract_strided_slice %34 {offsets = [0, 0], sizes = [1, 16], strides = [1, 1]} : vector<1x256xf32> to vector<1x16xf32>
    %c1_28 = arith.constant 1 : index
    %c3_29 = arith.constant 3 : index
    %c3_30 = arith.constant 3 : index
    %42 = vector.load %arg6[%c1_28, %c3_29, %c3_30] : memref<2x22x22xf32, #tpu.memory_space<vmem>>, vector<1x1x16xf32>
    %43 = vector.shape_cast %42 : vector<1x1x16xf32> to vector<1x16xf32>
    %44 = vector.shape_cast %41 : vector<1x16xf32> to vector<1x1x16xf32>
    tpu.vector_store %arg6[%c1_28, %c3_29, %c3_30], %44 {strides = array<i32>} : memref<2x22x22xf32, #tpu.memory_space<vmem>>, vector<1x1x16xf32>,
    %45 = vector.extract_strided_slice %30 {offsets = [0, 16], sizes = [1, 16], strides = [1, 1]} : vector<1x256xf32> to vector<1x16xf32>
    %c0_31 = arith.constant 0 : index
    %c4 = arith.constant 4 : index
    %c3_32 = arith.constant 3 : index
    %46 = vector.load %arg6[%c0_31, %c4, %c3_32] : memref<2x22x22xf32, #tpu.memory_space<vmem>>, vector<1x1x16xf32>
    %47 = vector.shape_cast %46 : vector<1x1x16xf32> to vector<1x16xf32>
    %48 = vector.shape_cast %45 : vector<1x16xf32> to vector<1x1x16xf32>
    tpu.vector_store %arg6[%c0_31, %c4, %c3_32], %48 {strides = array<i32>} : memref<2x22x22xf32, #tpu.memory_space<vmem>>, vector<1x1x16xf32>,
    %49 = vector.extract_strided_slice %34 {offsets = [0, 16], sizes = [1, 16], strides = [1, 1]} : vector<1x256xf32> to vector<1x16xf32>
    %c1_33 = arith.constant 1 : index
    %c4_34 = arith.constant 4 : index
    %c3_35 = arith.constant 3 : index
    %50 = vector.load %arg6[%c1_33, %c4_34, %c3_35] : memref<2x22x22xf32, #tpu.memory_space<vmem>>, vector<1x1x16xf32>
    %51 = vector.shape_cast %50 : vector<1x1x16xf32> to vector<1x16xf32>
    %52 = vector.shape_cast %49 : vector<1x16xf32> to vector<1x1x16xf32>
    tpu.vector_store %arg6[%c1_33, %c4_34, %c3_35], %52 {strides = array<i32>} : memref<2x22x22xf32, #tpu.memory_space<vmem>>, vector<1x1x16xf32>,
    %53 = vector.extract_strided_slice %30 {offsets = [0, 32], sizes = [1, 16], strides = [1, 1]} : vector<1x256xf32> to vector<1x16xf32>
    %c0_36 = arith.constant 0 : index
    %c5 = arith.constant 5 : index
    %c3_37 = arith.constant 3 : index
    %54 = vector.load %arg6[%c0_36, %c5, %c3_37] : memref<2x22x22xf32, #tpu.memory_space<vmem>>, vector<1x1x16xf32>
    %55 = vector.shape_cast %54 : vector<1x1x16xf32> to vector<1x16xf32>
    %56 = vector.shape_cast %53 : vector<1x16xf32> to vector<1x1x16xf32>
    tpu.vector_store %arg6[%c0_36, %c5, %c3_37], %56 {strides = array<i32>} : memref<2x22x22xf32, #tpu.memory_space<vmem>>, vector<1x1x16xf32>,
    %57 = vector.extract_strided_slice %34 {offsets = [0, 32], sizes = [1, 16], strides = [1, 1]} : vector<1x256xf32> to vector<1x16xf32>
    %c1_38 = arith.constant 1 : index
    %c5_39 = arith.constant 5 : index
    %c3_40 = arith.constant 3 : index
    %58 = vector.load %arg6[%c1_38, %c5_39, %c3_40] : memref<2x22x22xf32, #tpu.memory_space<vmem>>, vector<1x1x16xf32>
    %59 = vector.shape_cast %58 : vector<1x1x16xf32> to vector<1x16xf32>
    %60 = vector.shape_cast %57 : vector<1x16xf32> to vector<1x1x16xf32>
    tpu.vector_store %arg6[%c1_38, %c5_39, %c3_40], %60 {strides = array<i32>} : memref<2x22x22xf32, #tpu.memory_space<vmem>>, vector<1x1x16xf32>,
    %61 = vector.extract_strided_slice %30 {offsets = [0, 48], sizes = [1, 16], strides = [1, 1]} : vector<1x256xf32> to vector<1x16xf32>
    %c0_41 = arith.constant 0 : index
    %c6 = arith.constant 6 : index
    %c3_42 = arith.constant 3 : index
    %62 = vector.load %arg6[%c0_41, %c6, %c3_42] : memref<2x22x22xf32, #tpu.memory_space<vmem>>, vector<1x1x16xf32>
    %63 = vector.shape_cast %62 : vector<1x1x16xf32> to vector<1x16xf32>
    %64 = vector.shape_cast %61 : vector<1x16xf32> to vector<1x1x16xf32>
    tpu.vector_store %arg6[%c0_41, %c6, %c3_42], %64 {strides = array<i32>} : memref<2x22x22xf32, #tpu.memory_space<vmem>>, vector<1x1x16xf32>,
    %65 = vector.extract_strided_slice %34 {offsets = [0, 48], sizes = [1, 16], strides = [1, 1]} : vector<1x256xf32> to vector<1x16xf32>
    %c1_43 = arith.constant 1 : index
    %c6_44 = arith.constant 6 : index
    %c3_45 = arith.constant 3 : index
    %66 = vector.load %arg6[%c1_43, %c6_44, %c3_45] : memref<2x22x22xf32, #tpu.memory_space<vmem>>, vector<1x1x16xf32>
    %67 = vector.shape_cast %66 : vector<1x1x16xf32> to vector<1x16xf32>
    %68 = vector.shape_cast %65 : vector<1x16xf32> to vector<1x1x16xf32>
    tpu.vector_store %arg6[%c1_43, %c6_44, %c3_45], %68 {strides = array<i32>} : memref<2x22x22xf32, #tpu.memory_space<vmem>>, vector<1x1x16xf32>,
    %69 = vector.extract_strided_slice %30 {offsets = [0, 64], sizes = [1, 16], strides = [1, 1]} : vector<1x256xf32> to vector<1x16xf32>
    %c0_46 = arith.constant 0 : index
    %c7 = arith.constant 7 : index
    %c3_47 = arith.constant 3 : index
    %70 = vector.load %arg6[%c0_46, %c7, %c3_47] : memref<2x22x22xf32, #tpu.memory_space<vmem>>, vector<1x1x16xf32>
    %71 = vector.shape_cast %70 : vector<1x1x16xf32> to vector<1x16xf32>
    %72 = vector.shape_cast %69 : vector<1x16xf32> to vector<1x1x16xf32>
    tpu.vector_store %arg6[%c0_46, %c7, %c3_47], %72 {strides = array<i32>} : memref<2x22x22xf32, #tpu.memory_space<vmem>>, vector<1x1x16xf32>,
    %73 = vector.extract_strided_slice %34 {offsets = [0, 64], sizes = [1, 16], strides = [1, 1]} : vector<1x256xf32> to vector<1x16xf32>
    %c1_48 = arith.constant 1 : index
    %c7_49 = arith.constant 7 : index
    %c3_50 = arith.constant 3 : index
    %74 = vector.load %arg6[%c1_48, %c7_49, %c3_50] : memref<2x22x22xf32, #tpu.memory_space<vmem>>, vector<1x1x16xf32>
    %75 = vector.shape_cast %74 : vector<1x1x16xf32> to vector<1x16xf32>
    %76 = vector.shape_cast %73 : vector<1x16xf32> to vector<1x1x16xf32>
    tpu.vector_store %arg6[%c1_48, %c7_49, %c3_50], %76 {strides = array<i32>} : memref<2x22x22xf32, #tpu.memory_space<vmem>>, vector<1x1x16xf32>,
    %77 = vector.extract_strided_slice %30 {offsets = [0, 80], sizes = [1, 16], strides = [1, 1]} : vector<1x256xf32> to vector<1x16xf32>
    %c0_51 = arith.constant 0 : index
    %c8 = arith.constant 8 : index
    %c3_52 = arith.constant 3 : index
    %78 = vector.load %arg6[%c0_51, %c8, %c3_52] : memref<2x22x22xf32, #tpu.memory_space<vmem>>, vector<1x1x16xf32>
    %79 = vector.shape_cast %78 : vector<1x1x16xf32> to vector<1x16xf32>
    %80 = vector.shape_cast %77 : vector<1x16xf32> to vector<1x1x16xf32>
    tpu.vector_store %arg6[%c0_51, %c8, %c3_52], %80 {strides = array<i32>} : memref<2x22x22xf32, #tpu.memory_space<vmem>>, vector<1x1x16xf32>,
    %81 = vector.extract_strided_slice %34 {offsets = [0, 80], sizes = [1, 16], strides = [1, 1]} : vector<1x256xf32> to vector<1x16xf32>
    %c1_53 = arith.constant 1 : index
    %c8_54 = arith.constant 8 : index
    %c3_55 = arith.constant 3 : index
    %82 = vector.load %arg6[%c1_53, %c8_54, %c3_55] : memref<2x22x22xf32, #tpu.memory_space<vmem>>, vector<1x1x16xf32>
    %83 = vector.shape_cast %82 : vector<1x1x16xf32> to vector<1x16xf32>
    %84 = vector.shape_cast %81 : vector<1x16xf32> to vector<1x1x16xf32>
    tpu.vector_store %arg6[%c1_53, %c8_54, %c3_55], %84 {strides = array<i32>} : memref<2x22x22xf32, #tpu.memory_space<vmem>>, vector<1x1x16xf32>,
    %85 = vector.extract_strided_slice %30 {offsets = [0, 96], sizes = [1, 16], strides = [1, 1]} : vector<1x256xf32> to vector<1x16xf32>
    %c0_56 = arith.constant 0 : index
    %c9 = arith.constant 9 : index
    %c3_57 = arith.constant 3 : index
    %86 = vector.load %arg6[%c0_56, %c9, %c3_57] : memref<2x22x22xf32, #tpu.memory_space<vmem>>, vector<1x1x16xf32>
    %87 = vector.shape_cast %86 : vector<1x1x16xf32> to vector<1x16xf32>
    %88 = vector.shape_cast %85 : vector<1x16xf32> to vector<1x1x16xf32>
    tpu.vector_store %arg6[%c0_56, %c9, %c3_57], %88 {strides = array<i32>} : memref<2x22x22xf32, #tpu.memory_space<vmem>>, vector<1x1x16xf32>,
    %89 = vector.extract_strided_slice %34 {offsets = [0, 96], sizes = [1, 16], strides = [1, 1]} : vector<1x256xf32> to vector<1x16xf32>
    %c1_58 = arith.constant 1 : index
    %c9_59 = arith.constant 9 : index
    %c3_60 = arith.constant 3 : index
    %90 = vector.load %arg6[%c1_58, %c9_59, %c3_60] : memref<2x22x22xf32, #tpu.memory_space<vmem>>, vector<1x1x16xf32>
    %91 = vector.shape_cast %90 : vector<1x1x16xf32> to vector<1x16xf32>
    %92 = vector.shape_cast %89 : vector<1x16xf32> to vector<1x1x16xf32>
    tpu.vector_store %arg6[%c1_58, %c9_59, %c3_60], %92 {strides = array<i32>} : memref<2x22x22xf32, #tpu.memory_space<vmem>>, vector<1x1x16xf32>,
    %93 = vector.extract_strided_slice %30 {offsets = [0, 112], sizes = [1, 16], strides = [1, 1]} : vector<1x256xf32> to vector<1x16xf32>
    %c0_61 = arith.constant 0 : index
    %c10 = arith.constant 10 : index
    %c3_62 = arith.constant 3 : index
    %94 = vector.load %arg6[%c0_61, %c10, %c3_62] : memref<2x22x22xf32, #tpu.memory_space<vmem>>, vector<1x1x16xf32>
    %95 = vector.shape_cast %94 : vector<1x1x16xf32> to vector<1x16xf32>
    %96 = vector.shape_cast %93 : vector<1x16xf32> to vector<1x1x16xf32>
    tpu.vector_store %arg6[%c0_61, %c10, %c3_62], %96 {strides = array<i32>} : memref<2x22x22xf32, #tpu.memory_space<vmem>>, vector<1x1x16xf32>,
    %97 = vector.extract_strided_slice %34 {offsets = [0, 112], sizes = [1, 16], strides = [1, 1]} : vector<1x256xf32> to vector<1x16xf32>
    %c1_63 = arith.constant 1 : index
    %c10_64 = arith.constant 10 : index
    %c3_65 = arith.constant 3 : index
    %98 = vector.load %arg6[%c1_63, %c10_64, %c3_65] : memref<2x22x22xf32, #tpu.memory_space<vmem>>, vector<1x1x16xf32>
    %99 = vector.shape_cast %98 : vector<1x1x16xf32> to vector<1x16xf32>
    %100 = vector.shape_cast %97 : vector<1x16xf32> to vector<1x1x16xf32>
    tpu.vector_store %arg6[%c1_63, %c10_64, %c3_65], %100 {strides = array<i32>} : memref<2x22x22xf32, #tpu.memory_space<vmem>>, vector<1x1x16xf32>,
    %101 = vector.extract_strided_slice %30 {offsets = [0, 128], sizes = [1, 16], strides = [1, 1]} : vector<1x256xf32> to vector<1x16xf32>
    %c0_66 = arith.constant 0 : index
    %c11 = arith.constant 11 : index
    %c3_67 = arith.constant 3 : index
    %102 = vector.load %arg6[%c0_66, %c11, %c3_67] : memref<2x22x22xf32, #tpu.memory_space<vmem>>, vector<1x1x16xf32>
    %103 = vector.shape_cast %102 : vector<1x1x16xf32> to vector<1x16xf32>
    %104 = vector.shape_cast %101 : vector<1x16xf32> to vector<1x1x16xf32>
    tpu.vector_store %arg6[%c0_66, %c11, %c3_67], %104 {strides = array<i32>} : memref<2x22x22xf32, #tpu.memory_space<vmem>>, vector<1x1x16xf32>,
    %105 = vector.extract_strided_slice %34 {offsets = [0, 128], sizes = [1, 16], strides = [1, 1]} : vector<1x256xf32> to vector<1x16xf32>
    %c1_68 = arith.constant 1 : index
    %c11_69 = arith.constant 11 : index
    %c3_70 = arith.constant 3 : index
    %106 = vector.load %arg6[%c1_68, %c11_69, %c3_70] : memref<2x22x22xf32, #tpu.memory_space<vmem>>, vector<1x1x16xf32>
    %107 = vector.shape_cast %106 : vector<1x1x16xf32> to vector<1x16xf32>
    %108 = vector.shape_cast %105 : vector<1x16xf32> to vector<1x1x16xf32>
    tpu.vector_store %arg6[%c1_68, %c11_69, %c3_70], %108 {strides = array<i32>} : memref<2x22x22xf32, #tpu.memory_space<vmem>>, vector<1x1x16xf32>,
    %109 = vector.extract_strided_slice %30 {offsets = [0, 144], sizes = [1, 16], strides = [1, 1]} : vector<1x256xf32> to vector<1x16xf32>
    %c0_71 = arith.constant 0 : index
    %c12 = arith.constant 12 : index
    %c3_72 = arith.constant 3 : index
    %110 = vector.load %arg6[%c0_71, %c12, %c3_72] : memref<2x22x22xf32, #tpu.memory_space<vmem>>, vector<1x1x16xf32>
    %111 = vector.shape_cast %110 : vector<1x1x16xf32> to vector<1x16xf32>
    %112 = vector.shape_cast %109 : vector<1x16xf32> to vector<1x1x16xf32>
    tpu.vector_store %arg6[%c0_71, %c12, %c3_72], %112 {strides = array<i32>} : memref<2x22x22xf32, #tpu.memory_space<vmem>>, vector<1x1x16xf32>,
    %113 = vector.extract_strided_slice %34 {offsets = [0, 144], sizes = [1, 16], strides = [1, 1]} : vector<1x256xf32> to vector<1x16xf32>
    %c1_73 = arith.constant 1 : index
    %c12_74 = arith.constant 12 : index
    %c3_75 = arith.constant 3 : index
    %114 = vector.load %arg6[%c1_73, %c12_74, %c3_75] : memref<2x22x22xf32, #tpu.memory_space<vmem>>, vector<1x1x16xf32>
    %115 = vector.shape_cast %114 : vector<1x1x16xf32> to vector<1x16xf32>
    %116 = vector.shape_cast %113 : vector<1x16xf32> to vector<1x1x16xf32>
    tpu.vector_store %arg6[%c1_73, %c12_74, %c3_75], %116 {strides = array<i32>} : memref<2x22x22xf32, #tpu.memory_space<vmem>>, vector<1x1x16xf32>,
    %117 = vector.extract_strided_slice %30 {offsets = [0, 160], sizes = [1, 16], strides = [1, 1]} : vector<1x256xf32> to vector<1x16xf32>
    %c0_76 = arith.constant 0 : index
    %c13 = arith.constant 13 : index
    %c3_77 = arith.constant 3 : index
    %118 = vector.load %arg6[%c0_76, %c13, %c3_77] : memref<2x22x22xf32, #tpu.memory_space<vmem>>, vector<1x1x16xf32>
    %119 = vector.shape_cast %118 : vector<1x1x16xf32> to vector<1x16xf32>
    %120 = vector.shape_cast %117 : vector<1x16xf32> to vector<1x1x16xf32>
    tpu.vector_store %arg6[%c0_76, %c13, %c3_77], %120 {strides = array<i32>} : memref<2x22x22xf32, #tpu.memory_space<vmem>>, vector<1x1x16xf32>,
    %121 = vector.extract_strided_slice %34 {offsets = [0, 160], sizes = [1, 16], strides = [1, 1]} : vector<1x256xf32> to vector<1x16xf32>
    %c1_78 = arith.constant 1 : index
    %c13_79 = arith.constant 13 : index
    %c3_80 = arith.constant 3 : index
    %122 = vector.load %arg6[%c1_78, %c13_79, %c3_80] : memref<2x22x22xf32, #tpu.memory_space<vmem>>, vector<1x1x16xf32>
    %123 = vector.shape_cast %122 : vector<1x1x16xf32> to vector<1x16xf32>
    %124 = vector.shape_cast %121 : vector<1x16xf32> to vector<1x1x16xf32>
    tpu.vector_store %arg6[%c1_78, %c13_79, %c3_80], %124 {strides = array<i32>} : memref<2x22x22xf32, #tpu.memory_space<vmem>>, vector<1x1x16xf32>,
    %125 = vector.extract_strided_slice %30 {offsets = [0, 176], sizes = [1, 16], strides = [1, 1]} : vector<1x256xf32> to vector<1x16xf32>
    %c0_81 = arith.constant 0 : index
    %c14 = arith.constant 14 : index
    %c3_82 = arith.constant 3 : index
    %126 = vector.load %arg6[%c0_81, %c14, %c3_82] : memref<2x22x22xf32, #tpu.memory_space<vmem>>, vector<1x1x16xf32>
    %127 = vector.shape_cast %126 : vector<1x1x16xf32> to vector<1x16xf32>
    %128 = vector.shape_cast %125 : vector<1x16xf32> to vector<1x1x16xf32>
    tpu.vector_store %arg6[%c0_81, %c14, %c3_82], %128 {strides = array<i32>} : memref<2x22x22xf32, #tpu.memory_space<vmem>>, vector<1x1x16xf32>,
    %129 = vector.extract_strided_slice %34 {offsets = [0, 176], sizes = [1, 16], strides = [1, 1]} : vector<1x256xf32> to vector<1x16xf32>
    %c1_83 = arith.constant 1 : index
    %c14_84 = arith.constant 14 : index
    %c3_85 = arith.constant 3 : index
    %130 = vector.load %arg6[%c1_83, %c14_84, %c3_85] : memref<2x22x22xf32, #tpu.memory_space<vmem>>, vector<1x1x16xf32>
    %131 = vector.shape_cast %130 : vector<1x1x16xf32> to vector<1x16xf32>
    %132 = vector.shape_cast %129 : vector<1x16xf32> to vector<1x1x16xf32>
    tpu.vector_store %arg6[%c1_83, %c14_84, %c3_85], %132 {strides = array<i32>} : memref<2x22x22xf32, #tpu.memory_space<vmem>>, vector<1x1x16xf32>,
    %133 = vector.extract_strided_slice %30 {offsets = [0, 192], sizes = [1, 16], strides = [1, 1]} : vector<1x256xf32> to vector<1x16xf32>
    %c0_86 = arith.constant 0 : index
    %c15 = arith.constant 15 : index
    %c3_87 = arith.constant 3 : index
    %134 = vector.load %arg6[%c0_86, %c15, %c3_87] : memref<2x22x22xf32, #tpu.memory_space<vmem>>, vector<1x1x16xf32>
    %135 = vector.shape_cast %134 : vector<1x1x16xf32> to vector<1x16xf32>
    %136 = vector.shape_cast %133 : vector<1x16xf32> to vector<1x1x16xf32>
    tpu.vector_store %arg6[%c0_86, %c15, %c3_87], %136 {strides = array<i32>} : memref<2x22x22xf32, #tpu.memory_space<vmem>>, vector<1x1x16xf32>,
    %137 = vector.extract_strided_slice %34 {offsets = [0, 192], sizes = [1, 16], strides = [1, 1]} : vector<1x256xf32> to vector<1x16xf32>
    %c1_88 = arith.constant 1 : index
    %c15_89 = arith.constant 15 : index
    %c3_90 = arith.constant 3 : index
    %138 = vector.load %arg6[%c1_88, %c15_89, %c3_90] : memref<2x22x22xf32, #tpu.memory_space<vmem>>, vector<1x1x16xf32>
    %139 = vector.shape_cast %138 : vector<1x1x16xf32> to vector<1x16xf32>
    %140 = vector.shape_cast %137 : vector<1x16xf32> to vector<1x1x16xf32>
    tpu.vector_store %arg6[%c1_88, %c15_89, %c3_90], %140 {strides = array<i32>} : memref<2x22x22xf32, #tpu.memory_space<vmem>>, vector<1x1x16xf32>,
    %141 = vector.extract_strided_slice %30 {offsets = [0, 208], sizes = [1, 16], strides = [1, 1]} : vector<1x256xf32> to vector<1x16xf32>
    %c0_91 = arith.constant 0 : index
    %c16 = arith.constant 16 : index
    %c3_92 = arith.constant 3 : index
    %142 = vector.load %arg6[%c0_91, %c16, %c3_92] : memref<2x22x22xf32, #tpu.memory_space<vmem>>, vector<1x1x16xf32>
    %143 = vector.shape_cast %142 : vector<1x1x16xf32> to vector<1x16xf32>
    %144 = vector.shape_cast %141 : vector<1x16xf32> to vector<1x1x16xf32>
    tpu.vector_store %arg6[%c0_91, %c16, %c3_92], %144 {strides = array<i32>} : memref<2x22x22xf32, #tpu.memory_space<vmem>>, vector<1x1x16xf32>,
    %145 = vector.extract_strided_slice %34 {offsets = [0, 208], sizes = [1, 16], strides = [1, 1]} : vector<1x256xf32> to vector<1x16xf32>
    %c1_93 = arith.constant 1 : index
    %c16_94 = arith.constant 16 : index
    %c3_95 = arith.constant 3 : index
    %146 = vector.load %arg6[%c1_93, %c16_94, %c3_95] : memref<2x22x22xf32, #tpu.memory_space<vmem>>, vector<1x1x16xf32>
    %147 = vector.shape_cast %146 : vector<1x1x16xf32> to vector<1x16xf32>
    %148 = vector.shape_cast %145 : vector<1x16xf32> to vector<1x1x16xf32>
    tpu.vector_store %arg6[%c1_93, %c16_94, %c3_95], %148 {strides = array<i32>} : memref<2x22x22xf32, #tpu.memory_space<vmem>>, vector<1x1x16xf32>,
    %149 = vector.extract_strided_slice %30 {offsets = [0, 224], sizes = [1, 16], strides = [1, 1]} : vector<1x256xf32> to vector<1x16xf32>
    %c0_96 = arith.constant 0 : index
    %c17 = arith.constant 17 : index
    %c3_97 = arith.constant 3 : index
    %150 = vector.load %arg6[%c0_96, %c17, %c3_97] : memref<2x22x22xf32, #tpu.memory_space<vmem>>, vector<1x1x16xf32>
    %151 = vector.shape_cast %150 : vector<1x1x16xf32> to vector<1x16xf32>
    %152 = vector.shape_cast %149 : vector<1x16xf32> to vector<1x1x16xf32>
    tpu.vector_store %arg6[%c0_96, %c17, %c3_97], %152 {strides = array<i32>} : memref<2x22x22xf32, #tpu.memory_space<vmem>>, vector<1x1x16xf32>,
    %153 = vector.extract_strided_slice %34 {offsets = [0, 224], sizes = [1, 16], strides = [1, 1]} : vector<1x256xf32> to vector<1x16xf32>
    %c1_98 = arith.constant 1 : index
    %c17_99 = arith.constant 17 : index
    %c3_100 = arith.constant 3 : index
    %154 = vector.load %arg6[%c1_98, %c17_99, %c3_100] : memref<2x22x22xf32, #tpu.memory_space<vmem>>, vector<1x1x16xf32>
    %155 = vector.shape_cast %154 : vector<1x1x16xf32> to vector<1x16xf32>
    %156 = vector.shape_cast %153 : vector<1x16xf32> to vector<1x1x16xf32>
    tpu.vector_store %arg6[%c1_98, %c17_99, %c3_100], %156 {strides = array<i32>} : memref<2x22x22xf32, #tpu.memory_space<vmem>>, vector<1x1x16xf32>,
    %157 = vector.extract_strided_slice %30 {offsets = [0, 240], sizes = [1, 16], strides = [1, 1]} : vector<1x256xf32> to vector<1x16xf32>
    %c0_101 = arith.constant 0 : index
    %c18 = arith.constant 18 : index
    %c3_102 = arith.constant 3 : index
    %158 = vector.load %arg6[%c0_101, %c18, %c3_102] : memref<2x22x22xf32, #tpu.memory_space<vmem>>, vector<1x1x16xf32>
    %159 = vector.shape_cast %158 : vector<1x1x16xf32> to vector<1x16xf32>
    %160 = vector.shape_cast %157 : vector<1x16xf32> to vector<1x1x16xf32>
    tpu.vector_store %arg6[%c0_101, %c18, %c3_102], %160 {strides = array<i32>} : memref<2x22x22xf32, #tpu.memory_space<vmem>>, vector<1x1x16xf32>,
    %161 = vector.extract_strided_slice %34 {offsets = [0, 240], sizes = [1, 16], strides = [1, 1]} : vector<1x256xf32> to vector<1x16xf32>
    %c1_103 = arith.constant 1 : index
    %c18_104 = arith.constant 18 : index
    %c3_105 = arith.constant 3 : index
    %162 = vector.load %arg6[%c1_103, %c18_104, %c3_105] : memref<2x22x22xf32, #tpu.memory_space<vmem>>, vector<1x1x16xf32>
    %163 = vector.shape_cast %162 : vector<1x1x16xf32> to vector<1x16xf32>
    %164 = vector.shape_cast %161 : vector<1x16xf32> to vector<1x1x16xf32>
    tpu.vector_store %arg6[%c1_103, %c18_104, %c3_105], %164 {strides = array<i32>} : memref<2x22x22xf32, #tpu.memory_space<vmem>>, vector<1x1x16xf32>,
    %cst_106 = arith.constant 0.000000e+00 : f32
    %165 = vector.broadcast %cst_106 : f32 to vector<16x16xf32>
    %c0_107 = arith.constant 0 : index
    %c0_108 = arith.constant 0 : index
    %c0_109 = arith.constant 0 : index
    %166 = vector.load %arg6[%c0_107, %c0_108, %c0_109] : memref<2x22x22xf32, #tpu.memory_space<vmem>>, vector<1x22x16xf32>
    %167 = vector.shape_cast %166 : vector<1x22x16xf32> to vector<22x16xf32>
    %c1_110 = arith.constant 1 : index
    %c0_111 = arith.constant 0 : index
    %c0_112 = arith.constant 0 : index
    %168 = vector.load %arg6[%c1_110, %c0_111, %c0_112] : memref<2x22x22xf32, #tpu.memory_space<vmem>>, vector<1x22x16xf32>
    %169 = vector.shape_cast %168 : vector<1x22x16xf32> to vector<22x16xf32>
    %c0_113 = arith.constant 0 : index
    %170 = memref.load %arg1[%c0_113] : memref<98xf32, #tpu.memory_space<smem>>
    %171 = vector.extract_strided_slice %167 {offsets = [0, 0], sizes = [16, 16], strides = [1, 1]} : vector<22x16xf32> to vector<16x16xf32>
    %172 = vector.broadcast %170 : f32 to vector<16x16xf32>
    %173 = arith.mulf %172, %171 : vector<16x16xf32>
    %174 = arith.addf %165, %173 : vector<16x16xf32>
    %c49 = arith.constant 49 : index
    %175 = memref.load %arg1[%c49] : memref<98xf32, #tpu.memory_space<smem>>
    %176 = vector.extract_strided_slice %169 {offsets = [0, 0], sizes = [16, 16], strides = [1, 1]} : vector<22x16xf32> to vector<16x16xf32>
    %177 = vector.broadcast %175 : f32 to vector<16x16xf32>
    %178 = arith.mulf %177, %176 : vector<16x16xf32>
    %179 = arith.addf %174, %178 : vector<16x16xf32>
    %c7_114 = arith.constant 7 : index
    %180 = memref.load %arg1[%c7_114] : memref<98xf32, #tpu.memory_space<smem>>
    %181 = vector.extract_strided_slice %167 {offsets = [1, 0], sizes = [16, 16], strides = [1, 1]} : vector<22x16xf32> to vector<16x16xf32>
    %182 = vector.broadcast %180 : f32 to vector<16x16xf32>
    %183 = arith.mulf %182, %181 : vector<16x16xf32>
    %184 = arith.addf %179, %183 : vector<16x16xf32>
    %c56 = arith.constant 56 : index
    %185 = memref.load %arg1[%c56] : memref<98xf32, #tpu.memory_space<smem>>
    %186 = vector.extract_strided_slice %169 {offsets = [1, 0], sizes = [16, 16], strides = [1, 1]} : vector<22x16xf32> to vector<16x16xf32>
    %187 = vector.broadcast %185 : f32 to vector<16x16xf32>
    %188 = arith.mulf %187, %186 : vector<16x16xf32>
    %189 = arith.addf %184, %188 : vector<16x16xf32>
    %c14_115 = arith.constant 14 : index
    %190 = memref.load %arg1[%c14_115] : memref<98xf32, #tpu.memory_space<smem>>
    %191 = vector.extract_strided_slice %167 {offsets = [2, 0], sizes = [16, 16], strides = [1, 1]} : vector<22x16xf32> to vector<16x16xf32>
    %192 = vector.broadcast %190 : f32 to vector<16x16xf32>
    %193 = arith.mulf %192, %191 : vector<16x16xf32>
    %194 = arith.addf %189, %193 : vector<16x16xf32>
    %c63 = arith.constant 63 : index
    %195 = memref.load %arg1[%c63] : memref<98xf32, #tpu.memory_space<smem>>
    %196 = vector.extract_strided_slice %169 {offsets = [2, 0], sizes = [16, 16], strides = [1, 1]} : vector<22x16xf32> to vector<16x16xf32>
    %197 = vector.broadcast %195 : f32 to vector<16x16xf32>
    %198 = arith.mulf %197, %196 : vector<16x16xf32>
    %199 = arith.addf %194, %198 : vector<16x16xf32>
    %c21 = arith.constant 21 : index
    %200 = memref.load %arg1[%c21] : memref<98xf32, #tpu.memory_space<smem>>
    %201 = vector.extract_strided_slice %167 {offsets = [3, 0], sizes = [16, 16], strides = [1, 1]} : vector<22x16xf32> to vector<16x16xf32>
    %202 = vector.broadcast %200 : f32 to vector<16x16xf32>
    %203 = arith.mulf %202, %201 : vector<16x16xf32>
    %204 = arith.addf %199, %203 : vector<16x16xf32>
    %c70 = arith.constant 70 : index
    %205 = memref.load %arg1[%c70] : memref<98xf32, #tpu.memory_space<smem>>
    %206 = vector.extract_strided_slice %169 {offsets = [3, 0], sizes = [16, 16], strides = [1, 1]} : vector<22x16xf32> to vector<16x16xf32>
    %207 = vector.broadcast %205 : f32 to vector<16x16xf32>
    %208 = arith.mulf %207, %206 : vector<16x16xf32>
    %209 = arith.addf %204, %208 : vector<16x16xf32>
    %c28 = arith.constant 28 : index
    %210 = memref.load %arg1[%c28] : memref<98xf32, #tpu.memory_space<smem>>
    %211 = vector.extract_strided_slice %167 {offsets = [4, 0], sizes = [16, 16], strides = [1, 1]} : vector<22x16xf32> to vector<16x16xf32>
    %212 = vector.broadcast %210 : f32 to vector<16x16xf32>
    %213 = arith.mulf %212, %211 : vector<16x16xf32>
    %214 = arith.addf %209, %213 : vector<16x16xf32>
    %c77 = arith.constant 77 : index
    %215 = memref.load %arg1[%c77] : memref<98xf32, #tpu.memory_space<smem>>
    %216 = vector.extract_strided_slice %169 {offsets = [4, 0], sizes = [16, 16], strides = [1, 1]} : vector<22x16xf32> to vector<16x16xf32>
    %217 = vector.broadcast %215 : f32 to vector<16x16xf32>
    %218 = arith.mulf %217, %216 : vector<16x16xf32>
    %219 = arith.addf %214, %218 : vector<16x16xf32>
    %c35 = arith.constant 35 : index
    %220 = memref.load %arg1[%c35] : memref<98xf32, #tpu.memory_space<smem>>
    %221 = vector.extract_strided_slice %167 {offsets = [5, 0], sizes = [16, 16], strides = [1, 1]} : vector<22x16xf32> to vector<16x16xf32>
    %222 = vector.broadcast %220 : f32 to vector<16x16xf32>
    %223 = arith.mulf %222, %221 : vector<16x16xf32>
    %224 = arith.addf %219, %223 : vector<16x16xf32>
    %c84 = arith.constant 84 : index
    %225 = memref.load %arg1[%c84] : memref<98xf32, #tpu.memory_space<smem>>
    %226 = vector.extract_strided_slice %169 {offsets = [5, 0], sizes = [16, 16], strides = [1, 1]} : vector<22x16xf32> to vector<16x16xf32>
    %227 = vector.broadcast %225 : f32 to vector<16x16xf32>
    %228 = arith.mulf %227, %226 : vector<16x16xf32>
    %229 = arith.addf %224, %228 : vector<16x16xf32>
    %c42 = arith.constant 42 : index
    %230 = memref.load %arg1[%c42] : memref<98xf32, #tpu.memory_space<smem>>
    %231 = vector.extract_strided_slice %167 {offsets = [6, 0], sizes = [16, 16], strides = [1, 1]} : vector<22x16xf32> to vector<16x16xf32>
    %232 = vector.broadcast %230 : f32 to vector<16x16xf32>
    %233 = arith.mulf %232, %231 : vector<16x16xf32>
    %234 = arith.addf %229, %233 : vector<16x16xf32>
    %c91 = arith.constant 91 : index
    %235 = memref.load %arg1[%c91] : memref<98xf32, #tpu.memory_space<smem>>
    %236 = vector.extract_strided_slice %169 {offsets = [6, 0], sizes = [16, 16], strides = [1, 1]} : vector<22x16xf32> to vector<16x16xf32>
    %237 = vector.broadcast %235 : f32 to vector<16x16xf32>
    %238 = arith.mulf %237, %236 : vector<16x16xf32>
    %239 = arith.addf %234, %238 : vector<16x16xf32>
    %c0_116 = arith.constant 0 : index
    %c0_117 = arith.constant 0 : index
    %c1_118 = arith.constant 1 : index
    %240 = vector.load %arg6[%c0_116, %c0_117, %c1_118] : memref<2x22x22xf32, #tpu.memory_space<vmem>>, vector<1x22x16xf32>
    %241 = vector.shape_cast %240 : vector<1x22x16xf32> to vector<22x16xf32>
    %c1_119 = arith.constant 1 : index
    %c0_120 = arith.constant 0 : index
    %c1_121 = arith.constant 1 : index
    %242 = vector.load %arg6[%c1_119, %c0_120, %c1_121] : memref<2x22x22xf32, #tpu.memory_space<vmem>>, vector<1x22x16xf32>
    %243 = vector.shape_cast %242 : vector<1x22x16xf32> to vector<22x16xf32>
    %c1_122 = arith.constant 1 : index
    %244 = memref.load %arg1[%c1_122] : memref<98xf32, #tpu.memory_space<smem>>
    %245 = vector.extract_strided_slice %241 {offsets = [0, 0], sizes = [16, 16], strides = [1, 1]} : vector<22x16xf32> to vector<16x16xf32>
    %246 = vector.broadcast %244 : f32 to vector<16x16xf32>
    %247 = arith.mulf %246, %245 : vector<16x16xf32>
    %248 = arith.addf %239, %247 : vector<16x16xf32>
    %c50 = arith.constant 50 : index
    %249 = memref.load %arg1[%c50] : memref<98xf32, #tpu.memory_space<smem>>
    %250 = vector.extract_strided_slice %243 {offsets = [0, 0], sizes = [16, 16], strides = [1, 1]} : vector<22x16xf32> to vector<16x16xf32>
    %251 = vector.broadcast %249 : f32 to vector<16x16xf32>
    %252 = arith.mulf %251, %250 : vector<16x16xf32>
    %253 = arith.addf %248, %252 : vector<16x16xf32>
    %c8_123 = arith.constant 8 : index
    %254 = memref.load %arg1[%c8_123] : memref<98xf32, #tpu.memory_space<smem>>
    %255 = vector.extract_strided_slice %241 {offsets = [1, 0], sizes = [16, 16], strides = [1, 1]} : vector<22x16xf32> to vector<16x16xf32>
    %256 = vector.broadcast %254 : f32 to vector<16x16xf32>
    %257 = arith.mulf %256, %255 : vector<16x16xf32>
    %258 = arith.addf %253, %257 : vector<16x16xf32>
    %c57 = arith.constant 57 : index
    %259 = memref.load %arg1[%c57] : memref<98xf32, #tpu.memory_space<smem>>
    %260 = vector.extract_strided_slice %243 {offsets = [1, 0], sizes = [16, 16], strides = [1, 1]} : vector<22x16xf32> to vector<16x16xf32>
    %261 = vector.broadcast %259 : f32 to vector<16x16xf32>
    %262 = arith.mulf %261, %260 : vector<16x16xf32>
    %263 = arith.addf %258, %262 : vector<16x16xf32>
    %c15_124 = arith.constant 15 : index
    %264 = memref.load %arg1[%c15_124] : memref<98xf32, #tpu.memory_space<smem>>
    %265 = vector.extract_strided_slice %241 {offsets = [2, 0], sizes = [16, 16], strides = [1, 1]} : vector<22x16xf32> to vector<16x16xf32>
    %266 = vector.broadcast %264 : f32 to vector<16x16xf32>
    %267 = arith.mulf %266, %265 : vector<16x16xf32>
    %268 = arith.addf %263, %267 : vector<16x16xf32>
    %c64 = arith.constant 64 : index
    %269 = memref.load %arg1[%c64] : memref<98xf32, #tpu.memory_space<smem>>
    %270 = vector.extract_strided_slice %243 {offsets = [2, 0], sizes = [16, 16], strides = [1, 1]} : vector<22x16xf32> to vector<16x16xf32>
    %271 = vector.broadcast %269 : f32 to vector<16x16xf32>
    %272 = arith.mulf %271, %270 : vector<16x16xf32>
    %273 = arith.addf %268, %272 : vector<16x16xf32>
    %c22 = arith.constant 22 : index
    %274 = memref.load %arg1[%c22] : memref<98xf32, #tpu.memory_space<smem>>
    %275 = vector.extract_strided_slice %241 {offsets = [3, 0], sizes = [16, 16], strides = [1, 1]} : vector<22x16xf32> to vector<16x16xf32>
    %276 = vector.broadcast %274 : f32 to vector<16x16xf32>
    %277 = arith.mulf %276, %275 : vector<16x16xf32>
    %278 = arith.addf %273, %277 : vector<16x16xf32>
    %c71 = arith.constant 71 : index
    %279 = memref.load %arg1[%c71] : memref<98xf32, #tpu.memory_space<smem>>
    %280 = vector.extract_strided_slice %243 {offsets = [3, 0], sizes = [16, 16], strides = [1, 1]} : vector<22x16xf32> to vector<16x16xf32>
    %281 = vector.broadcast %279 : f32 to vector<16x16xf32>
    %282 = arith.mulf %281, %280 : vector<16x16xf32>
    %283 = arith.addf %278, %282 : vector<16x16xf32>
    %c29 = arith.constant 29 : index
    %284 = memref.load %arg1[%c29] : memref<98xf32, #tpu.memory_space<smem>>
    %285 = vector.extract_strided_slice %241 {offsets = [4, 0], sizes = [16, 16], strides = [1, 1]} : vector<22x16xf32> to vector<16x16xf32>
    %286 = vector.broadcast %284 : f32 to vector<16x16xf32>
    %287 = arith.mulf %286, %285 : vector<16x16xf32>
    %288 = arith.addf %283, %287 : vector<16x16xf32>
    %c78 = arith.constant 78 : index
    %289 = memref.load %arg1[%c78] : memref<98xf32, #tpu.memory_space<smem>>
    %290 = vector.extract_strided_slice %243 {offsets = [4, 0], sizes = [16, 16], strides = [1, 1]} : vector<22x16xf32> to vector<16x16xf32>
    %291 = vector.broadcast %289 : f32 to vector<16x16xf32>
    %292 = arith.mulf %291, %290 : vector<16x16xf32>
    %293 = arith.addf %288, %292 : vector<16x16xf32>
    %c36 = arith.constant 36 : index
    %294 = memref.load %arg1[%c36] : memref<98xf32, #tpu.memory_space<smem>>
    %295 = vector.extract_strided_slice %241 {offsets = [5, 0], sizes = [16, 16], strides = [1, 1]} : vector<22x16xf32> to vector<16x16xf32>
    %296 = vector.broadcast %294 : f32 to vector<16x16xf32>
    %297 = arith.mulf %296, %295 : vector<16x16xf32>
    %298 = arith.addf %293, %297 : vector<16x16xf32>
    %c85 = arith.constant 85 : index
    %299 = memref.load %arg1[%c85] : memref<98xf32, #tpu.memory_space<smem>>
    %300 = vector.extract_strided_slice %243 {offsets = [5, 0], sizes = [16, 16], strides = [1, 1]} : vector<22x16xf32> to vector<16x16xf32>
    %301 = vector.broadcast %299 : f32 to vector<16x16xf32>
    %302 = arith.mulf %301, %300 : vector<16x16xf32>
    %303 = arith.addf %298, %302 : vector<16x16xf32>
    %c43 = arith.constant 43 : index
    %304 = memref.load %arg1[%c43] : memref<98xf32, #tpu.memory_space<smem>>
    %305 = vector.extract_strided_slice %241 {offsets = [6, 0], sizes = [16, 16], strides = [1, 1]} : vector<22x16xf32> to vector<16x16xf32>
    %306 = vector.broadcast %304 : f32 to vector<16x16xf32>
    %307 = arith.mulf %306, %305 : vector<16x16xf32>
    %308 = arith.addf %303, %307 : vector<16x16xf32>
    %c92 = arith.constant 92 : index
    %309 = memref.load %arg1[%c92] : memref<98xf32, #tpu.memory_space<smem>>
    %310 = vector.extract_strided_slice %243 {offsets = [6, 0], sizes = [16, 16], strides = [1, 1]} : vector<22x16xf32> to vector<16x16xf32>
    %311 = vector.broadcast %309 : f32 to vector<16x16xf32>
    %312 = arith.mulf %311, %310 : vector<16x16xf32>
    %313 = arith.addf %308, %312 : vector<16x16xf32>
    %c0_125 = arith.constant 0 : index
    %c0_126 = arith.constant 0 : index
    %c2 = arith.constant 2 : index
    %314 = vector.load %arg6[%c0_125, %c0_126, %c2] : memref<2x22x22xf32, #tpu.memory_space<vmem>>, vector<1x22x16xf32>
    %315 = vector.shape_cast %314 : vector<1x22x16xf32> to vector<22x16xf32>
    %c1_127 = arith.constant 1 : index
    %c0_128 = arith.constant 0 : index
    %c2_129 = arith.constant 2 : index
    %316 = vector.load %arg6[%c1_127, %c0_128, %c2_129] : memref<2x22x22xf32, #tpu.memory_space<vmem>>, vector<1x22x16xf32>
    %317 = vector.shape_cast %316 : vector<1x22x16xf32> to vector<22x16xf32>
    %c2_130 = arith.constant 2 : index
    %318 = memref.load %arg1[%c2_130] : memref<98xf32, #tpu.memory_space<smem>>
    %319 = vector.extract_strided_slice %315 {offsets = [0, 0], sizes = [16, 16], strides = [1, 1]} : vector<22x16xf32> to vector<16x16xf32>
    %320 = vector.broadcast %318 : f32 to vector<16x16xf32>
    %321 = arith.mulf %320, %319 : vector<16x16xf32>
    %322 = arith.addf %313, %321 : vector<16x16xf32>
    %c51 = arith.constant 51 : index
    %323 = memref.load %arg1[%c51] : memref<98xf32, #tpu.memory_space<smem>>
    %324 = vector.extract_strided_slice %317 {offsets = [0, 0], sizes = [16, 16], strides = [1, 1]} : vector<22x16xf32> to vector<16x16xf32>
    %325 = vector.broadcast %323 : f32 to vector<16x16xf32>
    %326 = arith.mulf %325, %324 : vector<16x16xf32>
    %327 = arith.addf %322, %326 : vector<16x16xf32>
    %c9_131 = arith.constant 9 : index
    %328 = memref.load %arg1[%c9_131] : memref<98xf32, #tpu.memory_space<smem>>
    %329 = vector.extract_strided_slice %315 {offsets = [1, 0], sizes = [16, 16], strides = [1, 1]} : vector<22x16xf32> to vector<16x16xf32>
    %330 = vector.broadcast %328 : f32 to vector<16x16xf32>
    %331 = arith.mulf %330, %329 : vector<16x16xf32>
    %332 = arith.addf %327, %331 : vector<16x16xf32>
    %c58 = arith.constant 58 : index
    %333 = memref.load %arg1[%c58] : memref<98xf32, #tpu.memory_space<smem>>
    %334 = vector.extract_strided_slice %317 {offsets = [1, 0], sizes = [16, 16], strides = [1, 1]} : vector<22x16xf32> to vector<16x16xf32>
    %335 = vector.broadcast %333 : f32 to vector<16x16xf32>
    %336 = arith.mulf %335, %334 : vector<16x16xf32>
    %337 = arith.addf %332, %336 : vector<16x16xf32>
    %c16_132 = arith.constant 16 : index
    %338 = memref.load %arg1[%c16_132] : memref<98xf32, #tpu.memory_space<smem>>
    %339 = vector.extract_strided_slice %315 {offsets = [2, 0], sizes = [16, 16], strides = [1, 1]} : vector<22x16xf32> to vector<16x16xf32>
    %340 = vector.broadcast %338 : f32 to vector<16x16xf32>
    %341 = arith.mulf %340, %339 : vector<16x16xf32>
    %342 = arith.addf %337, %341 : vector<16x16xf32>
    %c65 = arith.constant 65 : index
    %343 = memref.load %arg1[%c65] : memref<98xf32, #tpu.memory_space<smem>>
    %344 = vector.extract_strided_slice %317 {offsets = [2, 0], sizes = [16, 16], strides = [1, 1]} : vector<22x16xf32> to vector<16x16xf32>
    %345 = vector.broadcast %343 : f32 to vector<16x16xf32>
    %346 = arith.mulf %345, %344 : vector<16x16xf32>
    %347 = arith.addf %342, %346 : vector<16x16xf32>
    %c23 = arith.constant 23 : index
    %348 = memref.load %arg1[%c23] : memref<98xf32, #tpu.memory_space<smem>>
    %349 = vector.extract_strided_slice %315 {offsets = [3, 0], sizes = [16, 16], strides = [1, 1]} : vector<22x16xf32> to vector<16x16xf32>
    %350 = vector.broadcast %348 : f32 to vector<16x16xf32>
    %351 = arith.mulf %350, %349 : vector<16x16xf32>
    %352 = arith.addf %347, %351 : vector<16x16xf32>
    %c72 = arith.constant 72 : index
    %353 = memref.load %arg1[%c72] : memref<98xf32, #tpu.memory_space<smem>>
    %354 = vector.extract_strided_slice %317 {offsets = [3, 0], sizes = [16, 16], strides = [1, 1]} : vector<22x16xf32> to vector<16x16xf32>
    %355 = vector.broadcast %353 : f32 to vector<16x16xf32>
    %356 = arith.mulf %355, %354 : vector<16x16xf32>
    %357 = arith.addf %352, %356 : vector<16x16xf32>
    %c30 = arith.constant 30 : index
    %358 = memref.load %arg1[%c30] : memref<98xf32, #tpu.memory_space<smem>>
    %359 = vector.extract_strided_slice %315 {offsets = [4, 0], sizes = [16, 16], strides = [1, 1]} : vector<22x16xf32> to vector<16x16xf32>
    %360 = vector.broadcast %358 : f32 to vector<16x16xf32>
    %361 = arith.mulf %360, %359 : vector<16x16xf32>
    %362 = arith.addf %357, %361 : vector<16x16xf32>
    %c79 = arith.constant 79 : index
    %363 = memref.load %arg1[%c79] : memref<98xf32, #tpu.memory_space<smem>>
    %364 = vector.extract_strided_slice %317 {offsets = [4, 0], sizes = [16, 16], strides = [1, 1]} : vector<22x16xf32> to vector<16x16xf32>
    %365 = vector.broadcast %363 : f32 to vector<16x16xf32>
    %366 = arith.mulf %365, %364 : vector<16x16xf32>
    %367 = arith.addf %362, %366 : vector<16x16xf32>
    %c37 = arith.constant 37 : index
    %368 = memref.load %arg1[%c37] : memref<98xf32, #tpu.memory_space<smem>>
    %369 = vector.extract_strided_slice %315 {offsets = [5, 0], sizes = [16, 16], strides = [1, 1]} : vector<22x16xf32> to vector<16x16xf32>
    %370 = vector.broadcast %368 : f32 to vector<16x16xf32>
    %371 = arith.mulf %370, %369 : vector<16x16xf32>
    %372 = arith.addf %367, %371 : vector<16x16xf32>
    %c86 = arith.constant 86 : index
    %373 = memref.load %arg1[%c86] : memref<98xf32, #tpu.memory_space<smem>>
    %374 = vector.extract_strided_slice %317 {offsets = [5, 0], sizes = [16, 16], strides = [1, 1]} : vector<22x16xf32> to vector<16x16xf32>
    %375 = vector.broadcast %373 : f32 to vector<16x16xf32>
    %376 = arith.mulf %375, %374 : vector<16x16xf32>
    %377 = arith.addf %372, %376 : vector<16x16xf32>
    %c44 = arith.constant 44 : index
    %378 = memref.load %arg1[%c44] : memref<98xf32, #tpu.memory_space<smem>>
    %379 = vector.extract_strided_slice %315 {offsets = [6, 0], sizes = [16, 16], strides = [1, 1]} : vector<22x16xf32> to vector<16x16xf32>
    %380 = vector.broadcast %378 : f32 to vector<16x16xf32>
    %381 = arith.mulf %380, %379 : vector<16x16xf32>
    %382 = arith.addf %377, %381 : vector<16x16xf32>
    %c93 = arith.constant 93 : index
    %383 = memref.load %arg1[%c93] : memref<98xf32, #tpu.memory_space<smem>>
    %384 = vector.extract_strided_slice %317 {offsets = [6, 0], sizes = [16, 16], strides = [1, 1]} : vector<22x16xf32> to vector<16x16xf32>
    %385 = vector.broadcast %383 : f32 to vector<16x16xf32>
    %386 = arith.mulf %385, %384 : vector<16x16xf32>
    %387 = arith.addf %382, %386 : vector<16x16xf32>
    %c0_133 = arith.constant 0 : index
    %c0_134 = arith.constant 0 : index
    %c3_135 = arith.constant 3 : index
    %388 = vector.load %arg6[%c0_133, %c0_134, %c3_135] : memref<2x22x22xf32, #tpu.memory_space<vmem>>, vector<1x22x16xf32>
    %389 = vector.shape_cast %388 : vector<1x22x16xf32> to vector<22x16xf32>
    %c1_136 = arith.constant 1 : index
    %c0_137 = arith.constant 0 : index
    %c3_138 = arith.constant 3 : index
    %390 = vector.load %arg6[%c1_136, %c0_137, %c3_138] : memref<2x22x22xf32, #tpu.memory_space<vmem>>, vector<1x22x16xf32>
    %391 = vector.shape_cast %390 : vector<1x22x16xf32> to vector<22x16xf32>
    %c3_139 = arith.constant 3 : index
    %392 = memref.load %arg1[%c3_139] : memref<98xf32, #tpu.memory_space<smem>>
    %393 = vector.extract_strided_slice %389 {offsets = [0, 0], sizes = [16, 16], strides = [1, 1]} : vector<22x16xf32> to vector<16x16xf32>
    %394 = vector.broadcast %392 : f32 to vector<16x16xf32>
    %395 = arith.mulf %394, %393 : vector<16x16xf32>
    %396 = arith.addf %387, %395 : vector<16x16xf32>
    %c52 = arith.constant 52 : index
    %397 = memref.load %arg1[%c52] : memref<98xf32, #tpu.memory_space<smem>>
    %398 = vector.extract_strided_slice %391 {offsets = [0, 0], sizes = [16, 16], strides = [1, 1]} : vector<22x16xf32> to vector<16x16xf32>
    %399 = vector.broadcast %397 : f32 to vector<16x16xf32>
    %400 = arith.mulf %399, %398 : vector<16x16xf32>
    %401 = arith.addf %396, %400 : vector<16x16xf32>
    %c10_140 = arith.constant 10 : index
    %402 = memref.load %arg1[%c10_140] : memref<98xf32, #tpu.memory_space<smem>>
    %403 = vector.extract_strided_slice %389 {offsets = [1, 0], sizes = [16, 16], strides = [1, 1]} : vector<22x16xf32> to vector<16x16xf32>
    %404 = vector.broadcast %402 : f32 to vector<16x16xf32>
    %405 = arith.mulf %404, %403 : vector<16x16xf32>
    %406 = arith.addf %401, %405 : vector<16x16xf32>
    %c59 = arith.constant 59 : index
    %407 = memref.load %arg1[%c59] : memref<98xf32, #tpu.memory_space<smem>>
    %408 = vector.extract_strided_slice %391 {offsets = [1, 0], sizes = [16, 16], strides = [1, 1]} : vector<22x16xf32> to vector<16x16xf32>
    %409 = vector.broadcast %407 : f32 to vector<16x16xf32>
    %410 = arith.mulf %409, %408 : vector<16x16xf32>
    %411 = arith.addf %406, %410 : vector<16x16xf32>
    %c17_141 = arith.constant 17 : index
    %412 = memref.load %arg1[%c17_141] : memref<98xf32, #tpu.memory_space<smem>>
    %413 = vector.extract_strided_slice %389 {offsets = [2, 0], sizes = [16, 16], strides = [1, 1]} : vector<22x16xf32> to vector<16x16xf32>
    %414 = vector.broadcast %412 : f32 to vector<16x16xf32>
    %415 = arith.mulf %414, %413 : vector<16x16xf32>
    %416 = arith.addf %411, %415 : vector<16x16xf32>
    %c66 = arith.constant 66 : index
    %417 = memref.load %arg1[%c66] : memref<98xf32, #tpu.memory_space<smem>>
    %418 = vector.extract_strided_slice %391 {offsets = [2, 0], sizes = [16, 16], strides = [1, 1]} : vector<22x16xf32> to vector<16x16xf32>
    %419 = vector.broadcast %417 : f32 to vector<16x16xf32>
    %420 = arith.mulf %419, %418 : vector<16x16xf32>
    %421 = arith.addf %416, %420 : vector<16x16xf32>
    %c24 = arith.constant 24 : index
    %422 = memref.load %arg1[%c24] : memref<98xf32, #tpu.memory_space<smem>>
    %423 = vector.extract_strided_slice %389 {offsets = [3, 0], sizes = [16, 16], strides = [1, 1]} : vector<22x16xf32> to vector<16x16xf32>
    %424 = vector.broadcast %422 : f32 to vector<16x16xf32>
    %425 = arith.mulf %424, %423 : vector<16x16xf32>
    %426 = arith.addf %421, %425 : vector<16x16xf32>
    %c73 = arith.constant 73 : index
    %427 = memref.load %arg1[%c73] : memref<98xf32, #tpu.memory_space<smem>>
    %428 = vector.extract_strided_slice %391 {offsets = [3, 0], sizes = [16, 16], strides = [1, 1]} : vector<22x16xf32> to vector<16x16xf32>
    %429 = vector.broadcast %427 : f32 to vector<16x16xf32>
    %430 = arith.mulf %429, %428 : vector<16x16xf32>
    %431 = arith.addf %426, %430 : vector<16x16xf32>
    %c31 = arith.constant 31 : index
    %432 = memref.load %arg1[%c31] : memref<98xf32, #tpu.memory_space<smem>>
    %433 = vector.extract_strided_slice %389 {offsets = [4, 0], sizes = [16, 16], strides = [1, 1]} : vector<22x16xf32> to vector<16x16xf32>
    %434 = vector.broadcast %432 : f32 to vector<16x16xf32>
    %435 = arith.mulf %434, %433 : vector<16x16xf32>
    %436 = arith.addf %431, %435 : vector<16x16xf32>
    %c80 = arith.constant 80 : index
    %437 = memref.load %arg1[%c80] : memref<98xf32, #tpu.memory_space<smem>>
    %438 = vector.extract_strided_slice %391 {offsets = [4, 0], sizes = [16, 16], strides = [1, 1]} : vector<22x16xf32> to vector<16x16xf32>
    %439 = vector.broadcast %437 : f32 to vector<16x16xf32>
    %440 = arith.mulf %439, %438 : vector<16x16xf32>
    %441 = arith.addf %436, %440 : vector<16x16xf32>
    %c38 = arith.constant 38 : index
    %442 = memref.load %arg1[%c38] : memref<98xf32, #tpu.memory_space<smem>>
    %443 = vector.extract_strided_slice %389 {offsets = [5, 0], sizes = [16, 16], strides = [1, 1]} : vector<22x16xf32> to vector<16x16xf32>
    %444 = vector.broadcast %442 : f32 to vector<16x16xf32>
    %445 = arith.mulf %444, %443 : vector<16x16xf32>
    %446 = arith.addf %441, %445 : vector<16x16xf32>
    %c87 = arith.constant 87 : index
    %447 = memref.load %arg1[%c87] : memref<98xf32, #tpu.memory_space<smem>>
    %448 = vector.extract_strided_slice %391 {offsets = [5, 0], sizes = [16, 16], strides = [1, 1]} : vector<22x16xf32> to vector<16x16xf32>
    %449 = vector.broadcast %447 : f32 to vector<16x16xf32>
    %450 = arith.mulf %449, %448 : vector<16x16xf32>
    %451 = arith.addf %446, %450 : vector<16x16xf32>
    %c45 = arith.constant 45 : index
    %452 = memref.load %arg1[%c45] : memref<98xf32, #tpu.memory_space<smem>>
    %453 = vector.extract_strided_slice %389 {offsets = [6, 0], sizes = [16, 16], strides = [1, 1]} : vector<22x16xf32> to vector<16x16xf32>
    %454 = vector.broadcast %452 : f32 to vector<16x16xf32>
    %455 = arith.mulf %454, %453 : vector<16x16xf32>
    %456 = arith.addf %451, %455 : vector<16x16xf32>
    %c94 = arith.constant 94 : index
    %457 = memref.load %arg1[%c94] : memref<98xf32, #tpu.memory_space<smem>>
    %458 = vector.extract_strided_slice %391 {offsets = [6, 0], sizes = [16, 16], strides = [1, 1]} : vector<22x16xf32> to vector<16x16xf32>
    %459 = vector.broadcast %457 : f32 to vector<16x16xf32>
    %460 = arith.mulf %459, %458 : vector<16x16xf32>
    %461 = arith.addf %456, %460 : vector<16x16xf32>
    %c0_142 = arith.constant 0 : index
    %c0_143 = arith.constant 0 : index
    %c4_144 = arith.constant 4 : index
    %462 = vector.load %arg6[%c0_142, %c0_143, %c4_144] : memref<2x22x22xf32, #tpu.memory_space<vmem>>, vector<1x22x16xf32>
    %463 = vector.shape_cast %462 : vector<1x22x16xf32> to vector<22x16xf32>
    %c1_145 = arith.constant 1 : index
    %c0_146 = arith.constant 0 : index
    %c4_147 = arith.constant 4 : index
    %464 = vector.load %arg6[%c1_145, %c0_146, %c4_147] : memref<2x22x22xf32, #tpu.memory_space<vmem>>, vector<1x22x16xf32>
    %465 = vector.shape_cast %464 : vector<1x22x16xf32> to vector<22x16xf32>
    %c4_148 = arith.constant 4 : index
    %466 = memref.load %arg1[%c4_148] : memref<98xf32, #tpu.memory_space<smem>>
    %467 = vector.extract_strided_slice %463 {offsets = [0, 0], sizes = [16, 16], strides = [1, 1]} : vector<22x16xf32> to vector<16x16xf32>
    %468 = vector.broadcast %466 : f32 to vector<16x16xf32>
    %469 = arith.mulf %468, %467 : vector<16x16xf32>
    %470 = arith.addf %461, %469 : vector<16x16xf32>
    %c53 = arith.constant 53 : index
    %471 = memref.load %arg1[%c53] : memref<98xf32, #tpu.memory_space<smem>>
    %472 = vector.extract_strided_slice %465 {offsets = [0, 0], sizes = [16, 16], strides = [1, 1]} : vector<22x16xf32> to vector<16x16xf32>
    %473 = vector.broadcast %471 : f32 to vector<16x16xf32>
    %474 = arith.mulf %473, %472 : vector<16x16xf32>
    %475 = arith.addf %470, %474 : vector<16x16xf32>
    %c11_149 = arith.constant 11 : index
    %476 = memref.load %arg1[%c11_149] : memref<98xf32, #tpu.memory_space<smem>>
    %477 = vector.extract_strided_slice %463 {offsets = [1, 0], sizes = [16, 16], strides = [1, 1]} : vector<22x16xf32> to vector<16x16xf32>
    %478 = vector.broadcast %476 : f32 to vector<16x16xf32>
    %479 = arith.mulf %478, %477 : vector<16x16xf32>
    %480 = arith.addf %475, %479 : vector<16x16xf32>
    %c60 = arith.constant 60 : index
    %481 = memref.load %arg1[%c60] : memref<98xf32, #tpu.memory_space<smem>>
    %482 = vector.extract_strided_slice %465 {offsets = [1, 0], sizes = [16, 16], strides = [1, 1]} : vector<22x16xf32> to vector<16x16xf32>
    %483 = vector.broadcast %481 : f32 to vector<16x16xf32>
    %484 = arith.mulf %483, %482 : vector<16x16xf32>
    %485 = arith.addf %480, %484 : vector<16x16xf32>
    %c18_150 = arith.constant 18 : index
    %486 = memref.load %arg1[%c18_150] : memref<98xf32, #tpu.memory_space<smem>>
    %487 = vector.extract_strided_slice %463 {offsets = [2, 0], sizes = [16, 16], strides = [1, 1]} : vector<22x16xf32> to vector<16x16xf32>
    %488 = vector.broadcast %486 : f32 to vector<16x16xf32>
    %489 = arith.mulf %488, %487 : vector<16x16xf32>
    %490 = arith.addf %485, %489 : vector<16x16xf32>
    %c67 = arith.constant 67 : index
    %491 = memref.load %arg1[%c67] : memref<98xf32, #tpu.memory_space<smem>>
    %492 = vector.extract_strided_slice %465 {offsets = [2, 0], sizes = [16, 16], strides = [1, 1]} : vector<22x16xf32> to vector<16x16xf32>
    %493 = vector.broadcast %491 : f32 to vector<16x16xf32>
    %494 = arith.mulf %493, %492 : vector<16x16xf32>
    %495 = arith.addf %490, %494 : vector<16x16xf32>
    %c25 = arith.constant 25 : index
    %496 = memref.load %arg1[%c25] : memref<98xf32, #tpu.memory_space<smem>>
    %497 = vector.extract_strided_slice %463 {offsets = [3, 0], sizes = [16, 16], strides = [1, 1]} : vector<22x16xf32> to vector<16x16xf32>
    %498 = vector.broadcast %496 : f32 to vector<16x16xf32>
    %499 = arith.mulf %498, %497 : vector<16x16xf32>
    %500 = arith.addf %495, %499 : vector<16x16xf32>
    %c74 = arith.constant 74 : index
    %501 = memref.load %arg1[%c74] : memref<98xf32, #tpu.memory_space<smem>>
    %502 = vector.extract_strided_slice %465 {offsets = [3, 0], sizes = [16, 16], strides = [1, 1]} : vector<22x16xf32> to vector<16x16xf32>
    %503 = vector.broadcast %501 : f32 to vector<16x16xf32>
    %504 = arith.mulf %503, %502 : vector<16x16xf32>
    %505 = arith.addf %500, %504 : vector<16x16xf32>
    %c32 = arith.constant 32 : index
    %506 = memref.load %arg1[%c32] : memref<98xf32, #tpu.memory_space<smem>>
    %507 = vector.extract_strided_slice %463 {offsets = [4, 0], sizes = [16, 16], strides = [1, 1]} : vector<22x16xf32> to vector<16x16xf32>
    %508 = vector.broadcast %506 : f32 to vector<16x16xf32>
    %509 = arith.mulf %508, %507 : vector<16x16xf32>
    %510 = arith.addf %505, %509 : vector<16x16xf32>
    %c81 = arith.constant 81 : index
    %511 = memref.load %arg1[%c81] : memref<98xf32, #tpu.memory_space<smem>>
    %512 = vector.extract_strided_slice %465 {offsets = [4, 0], sizes = [16, 16], strides = [1, 1]} : vector<22x16xf32> to vector<16x16xf32>
    %513 = vector.broadcast %511 : f32 to vector<16x16xf32>
    %514 = arith.mulf %513, %512 : vector<16x16xf32>
    %515 = arith.addf %510, %514 : vector<16x16xf32>
    %c39 = arith.constant 39 : index
    %516 = memref.load %arg1[%c39] : memref<98xf32, #tpu.memory_space<smem>>
    %517 = vector.extract_strided_slice %463 {offsets = [5, 0], sizes = [16, 16], strides = [1, 1]} : vector<22x16xf32> to vector<16x16xf32>
    %518 = vector.broadcast %516 : f32 to vector<16x16xf32>
    %519 = arith.mulf %518, %517 : vector<16x16xf32>
    %520 = arith.addf %515, %519 : vector<16x16xf32>
    %c88 = arith.constant 88 : index
    %521 = memref.load %arg1[%c88] : memref<98xf32, #tpu.memory_space<smem>>
    %522 = vector.extract_strided_slice %465 {offsets = [5, 0], sizes = [16, 16], strides = [1, 1]} : vector<22x16xf32> to vector<16x16xf32>
    %523 = vector.broadcast %521 : f32 to vector<16x16xf32>
    %524 = arith.mulf %523, %522 : vector<16x16xf32>
    %525 = arith.addf %520, %524 : vector<16x16xf32>
    %c46 = arith.constant 46 : index
    %526 = memref.load %arg1[%c46] : memref<98xf32, #tpu.memory_space<smem>>
    %527 = vector.extract_strided_slice %463 {offsets = [6, 0], sizes = [16, 16], strides = [1, 1]} : vector<22x16xf32> to vector<16x16xf32>
    %528 = vector.broadcast %526 : f32 to vector<16x16xf32>
    %529 = arith.mulf %528, %527 : vector<16x16xf32>
    %530 = arith.addf %525, %529 : vector<16x16xf32>
    %c95 = arith.constant 95 : index
    %531 = memref.load %arg1[%c95] : memref<98xf32, #tpu.memory_space<smem>>
    %532 = vector.extract_strided_slice %465 {offsets = [6, 0], sizes = [16, 16], strides = [1, 1]} : vector<22x16xf32> to vector<16x16xf32>
    %533 = vector.broadcast %531 : f32 to vector<16x16xf32>
    %534 = arith.mulf %533, %532 : vector<16x16xf32>
    %535 = arith.addf %530, %534 : vector<16x16xf32>
    %c0_151 = arith.constant 0 : index
    %c0_152 = arith.constant 0 : index
    %c5_153 = arith.constant 5 : index
    %536 = vector.load %arg6[%c0_151, %c0_152, %c5_153] : memref<2x22x22xf32, #tpu.memory_space<vmem>>, vector<1x22x16xf32>
    %537 = vector.shape_cast %536 : vector<1x22x16xf32> to vector<22x16xf32>
    %c1_154 = arith.constant 1 : index
    %c0_155 = arith.constant 0 : index
    %c5_156 = arith.constant 5 : index
    %538 = vector.load %arg6[%c1_154, %c0_155, %c5_156] : memref<2x22x22xf32, #tpu.memory_space<vmem>>, vector<1x22x16xf32>
    %539 = vector.shape_cast %538 : vector<1x22x16xf32> to vector<22x16xf32>
    %c5_157 = arith.constant 5 : index
    %540 = memref.load %arg1[%c5_157] : memref<98xf32, #tpu.memory_space<smem>>
    %541 = vector.extract_strided_slice %537 {offsets = [0, 0], sizes = [16, 16], strides = [1, 1]} : vector<22x16xf32> to vector<16x16xf32>
    %542 = vector.broadcast %540 : f32 to vector<16x16xf32>
    %543 = arith.mulf %542, %541 : vector<16x16xf32>
    %544 = arith.addf %535, %543 : vector<16x16xf32>
    %c54 = arith.constant 54 : index
    %545 = memref.load %arg1[%c54] : memref<98xf32, #tpu.memory_space<smem>>
    %546 = vector.extract_strided_slice %539 {offsets = [0, 0], sizes = [16, 16], strides = [1, 1]} : vector<22x16xf32> to vector<16x16xf32>
    %547 = vector.broadcast %545 : f32 to vector<16x16xf32>
    %548 = arith.mulf %547, %546 : vector<16x16xf32>
    %549 = arith.addf %544, %548 : vector<16x16xf32>
    %c12_158 = arith.constant 12 : index
    %550 = memref.load %arg1[%c12_158] : memref<98xf32, #tpu.memory_space<smem>>
    %551 = vector.extract_strided_slice %537 {offsets = [1, 0], sizes = [16, 16], strides = [1, 1]} : vector<22x16xf32> to vector<16x16xf32>
    %552 = vector.broadcast %550 : f32 to vector<16x16xf32>
    %553 = arith.mulf %552, %551 : vector<16x16xf32>
    %554 = arith.addf %549, %553 : vector<16x16xf32>
    %c61 = arith.constant 61 : index
    %555 = memref.load %arg1[%c61] : memref<98xf32, #tpu.memory_space<smem>>
    %556 = vector.extract_strided_slice %539 {offsets = [1, 0], sizes = [16, 16], strides = [1, 1]} : vector<22x16xf32> to vector<16x16xf32>
    %557 = vector.broadcast %555 : f32 to vector<16x16xf32>
    %558 = arith.mulf %557, %556 : vector<16x16xf32>
    %559 = arith.addf %554, %558 : vector<16x16xf32>
    %c19 = arith.constant 19 : index
    %560 = memref.load %arg1[%c19] : memref<98xf32, #tpu.memory_space<smem>>
    %561 = vector.extract_strided_slice %537 {offsets = [2, 0], sizes = [16, 16], strides = [1, 1]} : vector<22x16xf32> to vector<16x16xf32>
    %562 = vector.broadcast %560 : f32 to vector<16x16xf32>
    %563 = arith.mulf %562, %561 : vector<16x16xf32>
    %564 = arith.addf %559, %563 : vector<16x16xf32>
    %c68 = arith.constant 68 : index
    %565 = memref.load %arg1[%c68] : memref<98xf32, #tpu.memory_space<smem>>
    %566 = vector.extract_strided_slice %539 {offsets = [2, 0], sizes = [16, 16], strides = [1, 1]} : vector<22x16xf32> to vector<16x16xf32>
    %567 = vector.broadcast %565 : f32 to vector<16x16xf32>
    %568 = arith.mulf %567, %566 : vector<16x16xf32>
    %569 = arith.addf %564, %568 : vector<16x16xf32>
    %c26 = arith.constant 26 : index
    %570 = memref.load %arg1[%c26] : memref<98xf32, #tpu.memory_space<smem>>
    %571 = vector.extract_strided_slice %537 {offsets = [3, 0], sizes = [16, 16], strides = [1, 1]} : vector<22x16xf32> to vector<16x16xf32>
    %572 = vector.broadcast %570 : f32 to vector<16x16xf32>
    %573 = arith.mulf %572, %571 : vector<16x16xf32>
    %574 = arith.addf %569, %573 : vector<16x16xf32>
    %c75 = arith.constant 75 : index
    %575 = memref.load %arg1[%c75] : memref<98xf32, #tpu.memory_space<smem>>
    %576 = vector.extract_strided_slice %539 {offsets = [3, 0], sizes = [16, 16], strides = [1, 1]} : vector<22x16xf32> to vector<16x16xf32>
    %577 = vector.broadcast %575 : f32 to vector<16x16xf32>
    %578 = arith.mulf %577, %576 : vector<16x16xf32>
    %579 = arith.addf %574, %578 : vector<16x16xf32>
    %c33 = arith.constant 33 : index
    %580 = memref.load %arg1[%c33] : memref<98xf32, #tpu.memory_space<smem>>
    %581 = vector.extract_strided_slice %537 {offsets = [4, 0], sizes = [16, 16], strides = [1, 1]} : vector<22x16xf32> to vector<16x16xf32>
    %582 = vector.broadcast %580 : f32 to vector<16x16xf32>
    %583 = arith.mulf %582, %581 : vector<16x16xf32>
    %584 = arith.addf %579, %583 : vector<16x16xf32>
    %c82 = arith.constant 82 : index
    %585 = memref.load %arg1[%c82] : memref<98xf32, #tpu.memory_space<smem>>
    %586 = vector.extract_strided_slice %539 {offsets = [4, 0], sizes = [16, 16], strides = [1, 1]} : vector<22x16xf32> to vector<16x16xf32>
    %587 = vector.broadcast %585 : f32 to vector<16x16xf32>
    %588 = arith.mulf %587, %586 : vector<16x16xf32>
    %589 = arith.addf %584, %588 : vector<16x16xf32>
    %c40 = arith.constant 40 : index
    %590 = memref.load %arg1[%c40] : memref<98xf32, #tpu.memory_space<smem>>
    %591 = vector.extract_strided_slice %537 {offsets = [5, 0], sizes = [16, 16], strides = [1, 1]} : vector<22x16xf32> to vector<16x16xf32>
    %592 = vector.broadcast %590 : f32 to vector<16x16xf32>
    %593 = arith.mulf %592, %591 : vector<16x16xf32>
    %594 = arith.addf %589, %593 : vector<16x16xf32>
    %c89 = arith.constant 89 : index
    %595 = memref.load %arg1[%c89] : memref<98xf32, #tpu.memory_space<smem>>
    %596 = vector.extract_strided_slice %539 {offsets = [5, 0], sizes = [16, 16], strides = [1, 1]} : vector<22x16xf32> to vector<16x16xf32>
    %597 = vector.broadcast %595 : f32 to vector<16x16xf32>
    %598 = arith.mulf %597, %596 : vector<16x16xf32>
    %599 = arith.addf %594, %598 : vector<16x16xf32>
    %c47 = arith.constant 47 : index
    %600 = memref.load %arg1[%c47] : memref<98xf32, #tpu.memory_space<smem>>
    %601 = vector.extract_strided_slice %537 {offsets = [6, 0], sizes = [16, 16], strides = [1, 1]} : vector<22x16xf32> to vector<16x16xf32>
    %602 = vector.broadcast %600 : f32 to vector<16x16xf32>
    %603 = arith.mulf %602, %601 : vector<16x16xf32>
    %604 = arith.addf %599, %603 : vector<16x16xf32>
    %c96 = arith.constant 96 : index
    %605 = memref.load %arg1[%c96] : memref<98xf32, #tpu.memory_space<smem>>
    %606 = vector.extract_strided_slice %539 {offsets = [6, 0], sizes = [16, 16], strides = [1, 1]} : vector<22x16xf32> to vector<16x16xf32>
    %607 = vector.broadcast %605 : f32 to vector<16x16xf32>
    %608 = arith.mulf %607, %606 : vector<16x16xf32>
    %609 = arith.addf %604, %608 : vector<16x16xf32>
    %c0_159 = arith.constant 0 : index
    %c0_160 = arith.constant 0 : index
    %c6_161 = arith.constant 6 : index
    %610 = vector.load %arg6[%c0_159, %c0_160, %c6_161] : memref<2x22x22xf32, #tpu.memory_space<vmem>>, vector<1x22x16xf32>
    %611 = vector.shape_cast %610 : vector<1x22x16xf32> to vector<22x16xf32>
    %c1_162 = arith.constant 1 : index
    %c0_163 = arith.constant 0 : index
    %c6_164 = arith.constant 6 : index
    %612 = vector.load %arg6[%c1_162, %c0_163, %c6_164] : memref<2x22x22xf32, #tpu.memory_space<vmem>>, vector<1x22x16xf32>
    %613 = vector.shape_cast %612 : vector<1x22x16xf32> to vector<22x16xf32>
    %c6_165 = arith.constant 6 : index
    %614 = memref.load %arg1[%c6_165] : memref<98xf32, #tpu.memory_space<smem>>
    %615 = vector.extract_strided_slice %611 {offsets = [0, 0], sizes = [16, 16], strides = [1, 1]} : vector<22x16xf32> to vector<16x16xf32>
    %616 = vector.broadcast %614 : f32 to vector<16x16xf32>
    %617 = arith.mulf %616, %615 : vector<16x16xf32>
    %618 = arith.addf %609, %617 : vector<16x16xf32>
    %c55 = arith.constant 55 : index
    %619 = memref.load %arg1[%c55] : memref<98xf32, #tpu.memory_space<smem>>
    %620 = vector.extract_strided_slice %613 {offsets = [0, 0], sizes = [16, 16], strides = [1, 1]} : vector<22x16xf32> to vector<16x16xf32>
    %621 = vector.broadcast %619 : f32 to vector<16x16xf32>
    %622 = arith.mulf %621, %620 : vector<16x16xf32>
    %623 = arith.addf %618, %622 : vector<16x16xf32>
    %c13_166 = arith.constant 13 : index
    %624 = memref.load %arg1[%c13_166] : memref<98xf32, #tpu.memory_space<smem>>
    %625 = vector.extract_strided_slice %611 {offsets = [1, 0], sizes = [16, 16], strides = [1, 1]} : vector<22x16xf32> to vector<16x16xf32>
    %626 = vector.broadcast %624 : f32 to vector<16x16xf32>
    %627 = arith.mulf %626, %625 : vector<16x16xf32>
    %628 = arith.addf %623, %627 : vector<16x16xf32>
    %c62 = arith.constant 62 : index
    %629 = memref.load %arg1[%c62] : memref<98xf32, #tpu.memory_space<smem>>
    %630 = vector.extract_strided_slice %613 {offsets = [1, 0], sizes = [16, 16], strides = [1, 1]} : vector<22x16xf32> to vector<16x16xf32>
    %631 = vector.broadcast %629 : f32 to vector<16x16xf32>
    %632 = arith.mulf %631, %630 : vector<16x16xf32>
    %633 = arith.addf %628, %632 : vector<16x16xf32>
    %c20 = arith.constant 20 : index
    %634 = memref.load %arg1[%c20] : memref<98xf32, #tpu.memory_space<smem>>
    %635 = vector.extract_strided_slice %611 {offsets = [2, 0], sizes = [16, 16], strides = [1, 1]} : vector<22x16xf32> to vector<16x16xf32>
    %636 = vector.broadcast %634 : f32 to vector<16x16xf32>
    %637 = arith.mulf %636, %635 : vector<16x16xf32>
    %638 = arith.addf %633, %637 : vector<16x16xf32>
    %c69 = arith.constant 69 : index
    %639 = memref.load %arg1[%c69] : memref<98xf32, #tpu.memory_space<smem>>
    %640 = vector.extract_strided_slice %613 {offsets = [2, 0], sizes = [16, 16], strides = [1, 1]} : vector<22x16xf32> to vector<16x16xf32>
    %641 = vector.broadcast %639 : f32 to vector<16x16xf32>
    %642 = arith.mulf %641, %640 : vector<16x16xf32>
    %643 = arith.addf %638, %642 : vector<16x16xf32>
    %c27 = arith.constant 27 : index
    %644 = memref.load %arg1[%c27] : memref<98xf32, #tpu.memory_space<smem>>
    %645 = vector.extract_strided_slice %611 {offsets = [3, 0], sizes = [16, 16], strides = [1, 1]} : vector<22x16xf32> to vector<16x16xf32>
    %646 = vector.broadcast %644 : f32 to vector<16x16xf32>
    %647 = arith.mulf %646, %645 : vector<16x16xf32>
    %648 = arith.addf %643, %647 : vector<16x16xf32>
    %c76 = arith.constant 76 : index
    %649 = memref.load %arg1[%c76] : memref<98xf32, #tpu.memory_space<smem>>
    %650 = vector.extract_strided_slice %613 {offsets = [3, 0], sizes = [16, 16], strides = [1, 1]} : vector<22x16xf32> to vector<16x16xf32>
    %651 = vector.broadcast %649 : f32 to vector<16x16xf32>
    %652 = arith.mulf %651, %650 : vector<16x16xf32>
    %653 = arith.addf %648, %652 : vector<16x16xf32>
    %c34 = arith.constant 34 : index
    %654 = memref.load %arg1[%c34] : memref<98xf32, #tpu.memory_space<smem>>
    %655 = vector.extract_strided_slice %611 {offsets = [4, 0], sizes = [16, 16], strides = [1, 1]} : vector<22x16xf32> to vector<16x16xf32>
    %656 = vector.broadcast %654 : f32 to vector<16x16xf32>
    %657 = arith.mulf %656, %655 : vector<16x16xf32>
    %658 = arith.addf %653, %657 : vector<16x16xf32>
    %c83 = arith.constant 83 : index
    %659 = memref.load %arg1[%c83] : memref<98xf32, #tpu.memory_space<smem>>
    %660 = vector.extract_strided_slice %613 {offsets = [4, 0], sizes = [16, 16], strides = [1, 1]} : vector<22x16xf32> to vector<16x16xf32>
    %661 = vector.broadcast %659 : f32 to vector<16x16xf32>
    %662 = arith.mulf %661, %660 : vector<16x16xf32>
    %663 = arith.addf %658, %662 : vector<16x16xf32>
    %c41 = arith.constant 41 : index
    %664 = memref.load %arg1[%c41] : memref<98xf32, #tpu.memory_space<smem>>
    %665 = vector.extract_strided_slice %611 {offsets = [5, 0], sizes = [16, 16], strides = [1, 1]} : vector<22x16xf32> to vector<16x16xf32>
    %666 = vector.broadcast %664 : f32 to vector<16x16xf32>
    %667 = arith.mulf %666, %665 : vector<16x16xf32>
    %668 = arith.addf %663, %667 : vector<16x16xf32>
    %c90 = arith.constant 90 : index
    %669 = memref.load %arg1[%c90] : memref<98xf32, #tpu.memory_space<smem>>
    %670 = vector.extract_strided_slice %613 {offsets = [5, 0], sizes = [16, 16], strides = [1, 1]} : vector<22x16xf32> to vector<16x16xf32>
    %671 = vector.broadcast %669 : f32 to vector<16x16xf32>
    %672 = arith.mulf %671, %670 : vector<16x16xf32>
    %673 = arith.addf %668, %672 : vector<16x16xf32>
    %c48 = arith.constant 48 : index
    %674 = memref.load %arg1[%c48] : memref<98xf32, #tpu.memory_space<smem>>
    %675 = vector.extract_strided_slice %611 {offsets = [6, 0], sizes = [16, 16], strides = [1, 1]} : vector<22x16xf32> to vector<16x16xf32>
    %676 = vector.broadcast %674 : f32 to vector<16x16xf32>
    %677 = arith.mulf %676, %675 : vector<16x16xf32>
    %678 = arith.addf %673, %677 : vector<16x16xf32>
    %c97 = arith.constant 97 : index
    %679 = memref.load %arg1[%c97] : memref<98xf32, #tpu.memory_space<smem>>
    %680 = vector.extract_strided_slice %613 {offsets = [6, 0], sizes = [16, 16], strides = [1, 1]} : vector<22x16xf32> to vector<16x16xf32>
    %681 = vector.broadcast %679 : f32 to vector<16x16xf32>
    %682 = arith.mulf %681, %680 : vector<16x16xf32>
    %683 = arith.addf %678, %682 : vector<16x16xf32>
    %684 = vector.extract_strided_slice %683 {offsets = [0, 0], sizes = [1, 16], strides = [1, 1]} : vector<16x16xf32> to vector<1x16xf32>
    %c0_167 = arith.constant 0 : index
    %c0_168 = arith.constant 0 : index
    %685 = vector.load %arg7[%c0_167, %c0_168] : memref<1x256xf32, #tpu.memory_space<vmem>>, vector<1x16xf32>
    tpu.vector_store %arg7[%c0_167, %c0_168], %684 {strides = array<i32>} : memref<1x256xf32, #tpu.memory_space<vmem>>, vector<1x16xf32>,
    %686 = vector.extract_strided_slice %683 {offsets = [1, 0], sizes = [1, 16], strides = [1, 1]} : vector<16x16xf32> to vector<1x16xf32>
    %c0_169 = arith.constant 0 : index
    %c16_170 = arith.constant 16 : index
    %687 = vector.load %arg7[%c0_169, %c16_170] : memref<1x256xf32, #tpu.memory_space<vmem>>, vector<1x16xf32>
    tpu.vector_store %arg7[%c0_169, %c16_170], %686 {strides = array<i32>} : memref<1x256xf32, #tpu.memory_space<vmem>>, vector<1x16xf32>,
    %688 = vector.extract_strided_slice %683 {offsets = [2, 0], sizes = [1, 16], strides = [1, 1]} : vector<16x16xf32> to vector<1x16xf32>
    %c0_171 = arith.constant 0 : index
    %c32_172 = arith.constant 32 : index
    %689 = vector.load %arg7[%c0_171, %c32_172] : memref<1x256xf32, #tpu.memory_space<vmem>>, vector<1x16xf32>
    tpu.vector_store %arg7[%c0_171, %c32_172], %688 {strides = array<i32>} : memref<1x256xf32, #tpu.memory_space<vmem>>, vector<1x16xf32>,
    %690 = vector.extract_strided_slice %683 {offsets = [3, 0], sizes = [1, 16], strides = [1, 1]} : vector<16x16xf32> to vector<1x16xf32>
    %c0_173 = arith.constant 0 : index
    %c48_174 = arith.constant 48 : index
    %691 = vector.load %arg7[%c0_173, %c48_174] : memref<1x256xf32, #tpu.memory_space<vmem>>, vector<1x16xf32>
    tpu.vector_store %arg7[%c0_173, %c48_174], %690 {strides = array<i32>} : memref<1x256xf32, #tpu.memory_space<vmem>>, vector<1x16xf32>,
    %692 = vector.extract_strided_slice %683 {offsets = [4, 0], sizes = [1, 16], strides = [1, 1]} : vector<16x16xf32> to vector<1x16xf32>
    %c0_175 = arith.constant 0 : index
    %c64_176 = arith.constant 64 : index
    %693 = vector.load %arg7[%c0_175, %c64_176] : memref<1x256xf32, #tpu.memory_space<vmem>>, vector<1x16xf32>
    tpu.vector_store %arg7[%c0_175, %c64_176], %692 {strides = array<i32>} : memref<1x256xf32, #tpu.memory_space<vmem>>, vector<1x16xf32>,
    %694 = vector.extract_strided_slice %683 {offsets = [5, 0], sizes = [1, 16], strides = [1, 1]} : vector<16x16xf32> to vector<1x16xf32>
    %c0_177 = arith.constant 0 : index
    %c80_178 = arith.constant 80 : index
    %695 = vector.load %arg7[%c0_177, %c80_178] : memref<1x256xf32, #tpu.memory_space<vmem>>, vector<1x16xf32>
    tpu.vector_store %arg7[%c0_177, %c80_178], %694 {strides = array<i32>} : memref<1x256xf32, #tpu.memory_space<vmem>>, vector<1x16xf32>,
    %696 = vector.extract_strided_slice %683 {offsets = [6, 0], sizes = [1, 16], strides = [1, 1]} : vector<16x16xf32> to vector<1x16xf32>
    %c0_179 = arith.constant 0 : index
    %c96_180 = arith.constant 96 : index
    %697 = vector.load %arg7[%c0_179, %c96_180] : memref<1x256xf32, #tpu.memory_space<vmem>>, vector<1x16xf32>
    tpu.vector_store %arg7[%c0_179, %c96_180], %696 {strides = array<i32>} : memref<1x256xf32, #tpu.memory_space<vmem>>, vector<1x16xf32>,
    %698 = vector.extract_strided_slice %683 {offsets = [7, 0], sizes = [1, 16], strides = [1, 1]} : vector<16x16xf32> to vector<1x16xf32>
    %c0_181 = arith.constant 0 : index
    %c112 = arith.constant 112 : index
    %699 = vector.load %arg7[%c0_181, %c112] : memref<1x256xf32, #tpu.memory_space<vmem>>, vector<1x16xf32>
    tpu.vector_store %arg7[%c0_181, %c112], %698 {strides = array<i32>} : memref<1x256xf32, #tpu.memory_space<vmem>>, vector<1x16xf32>,
    %700 = vector.extract_strided_slice %683 {offsets = [8, 0], sizes = [1, 16], strides = [1, 1]} : vector<16x16xf32> to vector<1x16xf32>
    %c0_182 = arith.constant 0 : index
    %c128 = arith.constant 128 : index
    %701 = vector.load %arg7[%c0_182, %c128] : memref<1x256xf32, #tpu.memory_space<vmem>>, vector<1x16xf32>
    tpu.vector_store %arg7[%c0_182, %c128], %700 {strides = array<i32>} : memref<1x256xf32, #tpu.memory_space<vmem>>, vector<1x16xf32>,
    %702 = vector.extract_strided_slice %683 {offsets = [9, 0], sizes = [1, 16], strides = [1, 1]} : vector<16x16xf32> to vector<1x16xf32>
    %c0_183 = arith.constant 0 : index
    %c144 = arith.constant 144 : index
    %703 = vector.load %arg7[%c0_183, %c144] : memref<1x256xf32, #tpu.memory_space<vmem>>, vector<1x16xf32>
    tpu.vector_store %arg7[%c0_183, %c144], %702 {strides = array<i32>} : memref<1x256xf32, #tpu.memory_space<vmem>>, vector<1x16xf32>,
    %704 = vector.extract_strided_slice %683 {offsets = [10, 0], sizes = [1, 16], strides = [1, 1]} : vector<16x16xf32> to vector<1x16xf32>
    %c0_184 = arith.constant 0 : index
    %c160 = arith.constant 160 : index
    %705 = vector.load %arg7[%c0_184, %c160] : memref<1x256xf32, #tpu.memory_space<vmem>>, vector<1x16xf32>
    tpu.vector_store %arg7[%c0_184, %c160], %704 {strides = array<i32>} : memref<1x256xf32, #tpu.memory_space<vmem>>, vector<1x16xf32>,
    %706 = vector.extract_strided_slice %683 {offsets = [11, 0], sizes = [1, 16], strides = [1, 1]} : vector<16x16xf32> to vector<1x16xf32>
    %c0_185 = arith.constant 0 : index
    %c176 = arith.constant 176 : index
    %707 = vector.load %arg7[%c0_185, %c176] : memref<1x256xf32, #tpu.memory_space<vmem>>, vector<1x16xf32>
    tpu.vector_store %arg7[%c0_185, %c176], %706 {strides = array<i32>} : memref<1x256xf32, #tpu.memory_space<vmem>>, vector<1x16xf32>,
    %708 = vector.extract_strided_slice %683 {offsets = [12, 0], sizes = [1, 16], strides = [1, 1]} : vector<16x16xf32> to vector<1x16xf32>
    %c0_186 = arith.constant 0 : index
    %c192 = arith.constant 192 : index
    %709 = vector.load %arg7[%c0_186, %c192] : memref<1x256xf32, #tpu.memory_space<vmem>>, vector<1x16xf32>
    tpu.vector_store %arg7[%c0_186, %c192], %708 {strides = array<i32>} : memref<1x256xf32, #tpu.memory_space<vmem>>, vector<1x16xf32>,
    %710 = vector.extract_strided_slice %683 {offsets = [13, 0], sizes = [1, 16], strides = [1, 1]} : vector<16x16xf32> to vector<1x16xf32>
    %c0_187 = arith.constant 0 : index
    %c208 = arith.constant 208 : index
    %711 = vector.load %arg7[%c0_187, %c208] : memref<1x256xf32, #tpu.memory_space<vmem>>, vector<1x16xf32>
    tpu.vector_store %arg7[%c0_187, %c208], %710 {strides = array<i32>} : memref<1x256xf32, #tpu.memory_space<vmem>>, vector<1x16xf32>,
    %712 = vector.extract_strided_slice %683 {offsets = [14, 0], sizes = [1, 16], strides = [1, 1]} : vector<16x16xf32> to vector<1x16xf32>
    %c0_188 = arith.constant 0 : index
    %c224 = arith.constant 224 : index
    %713 = vector.load %arg7[%c0_188, %c224] : memref<1x256xf32, #tpu.memory_space<vmem>>, vector<1x16xf32>
    tpu.vector_store %arg7[%c0_188, %c224], %712 {strides = array<i32>} : memref<1x256xf32, #tpu.memory_space<vmem>>, vector<1x16xf32>,
    %714 = vector.extract_strided_slice %683 {offsets = [15, 0], sizes = [1, 16], strides = [1, 1]} : vector<16x16xf32> to vector<1x16xf32>
    %c0_189 = arith.constant 0 : index
    %c240 = arith.constant 240 : index
    %715 = vector.load %arg7[%c0_189, %c240] : memref<1x256xf32, #tpu.memory_space<vmem>>, vector<1x16xf32>
    tpu.vector_store %arg7[%c0_189, %c240], %714 {strides = array<i32>} : memref<1x256xf32, #tpu.memory_space<vmem>>, vector<1x16xf32>,
    %c0_190 = arith.constant 0 : index
    %c0_191 = arith.constant 0 : index
    %716 = vector.load %arg7[%c0_190, %c0_191] : memref<1x256xf32, #tpu.memory_space<vmem>>, vector<1x256xf32>
    %cst_192 = arith.constant 0.000000e+00 : f32
    %717 = vector.broadcast %cst_192 : f32 to vector<1x256xf32>
    %718 = arith.subf %717, %716 : vector<1x256xf32>
    %719 = math.exp %718 : vector<1x256xf32>
    %cst_193 = arith.constant 1.000000e+00 : f32
    %720 = vector.broadcast %cst_193 : f32 to vector<1x256xf32>
    %721 = arith.addf %720, %719 : vector<1x256xf32>
    %cst_194 = arith.constant 1.000000e+00 : f32
    %722 = vector.broadcast %cst_194 : f32 to vector<1x256xf32>
    %723 = arith.divf %722, %721 : vector<1x256xf32>
    %724 = vector.broadcast %723 : vector<1x256xf32> to vector<256x256xf32>
    %725 = arith.mulf %28, %724 : vector<256x256xf32>
    %c0_195 = arith.constant 0 : index
    %c0_196 = arith.constant 0 : index
    %c0_197 = arith.constant 0 : index
    %726 = vector.load %arg5[%c0_195, %c0_196, %c0_197] : memref<1x256x256xf32, #tpu.memory_space<vmem>>, vector<1x256x256xf32>
    %727 = vector.shape_cast %726 : vector<1x256x256xf32> to vector<256x256xf32>
    %728 = vector.shape_cast %725 : vector<256x256xf32> to vector<1x256x256xf32>
    tpu.vector_store %arg5[%c0_195, %c0_196, %c0_197], %728 {strides = array<i32>} : memref<1x256x256xf32, #tpu.memory_space<vmem>>, vector<1x256x256xf32>,
    return
  }
  func.func @transform_0(%arg0: i32) -> i32 {
    %c0_i32 = arith.constant 0 : i32
    %c0_i32_0 = arith.constant 0 : i32
    return %c0_i32 : i32
  }
  func.func @transform_1(%arg0: i32) -> (i32, i32, i32) {
    %c0_i32 = arith.constant 0 : i32
    %c0_i32_0 = arith.constant 0 : i32
    %c0_i32_1 = arith.constant 0 : i32
    return %arg0, %c0_i32, %c0_i32_0 : i32, i32, i32
  }
  func.func @transform_2(%arg0: i32) -> (i32, i32) {
    %c0_i32 = arith.constant 0 : i32
    %c0_i32_0 = arith.constant 0 : i32
    %c0_i32_1 = arith.constant 0 : i32
    return %c0_i32, %c0_i32_0 : i32, i32
  }
  func.func @transform_3(%arg0: i32) -> (i32, i32) {
    %c0_i32 = arith.constant 0 : i32
    %c0_i32_0 = arith.constant 0 : i32
    %c0_i32_1 = arith.constant 0 : i32
    return %c0_i32, %c0_i32_0 : i32, i32
  }
  func.func @transform_4(%arg0: i32) -> (i32, i32, i32) {
    %c0_i32 = arith.constant 0 : i32
    %c0_i32_0 = arith.constant 0 : i32
    %c0_i32_1 = arith.constant 0 : i32
    return %arg0, %c0_i32, %c0_i32_0 : i32, i32, i32
  }
}

</mosaic_0001>

<llo_original>
// kernel: cbam2d_forward.1
$region0: #{cbam2d_forward.1}
  #allocation0 [shape = 'u32[]', space=smem, size = 0x4, offset = 0x4, fixed_abs, tag = 'smem constant byte address 0x4 - core index']
  #allocation1 [shape = 'u32[144,128]{1,0:T(1,128)}', space=vmem, size = 0x12000, scoped, tag = 'internal scratch']
  #allocation2 [shape = 'f32[2,22,22]{2,1,0:T(8,128)}', space=vmem, size = 0x6000, scoped, tag = 'scratch operand']
  #allocation3 [shape = 'f32[1,256]{1,0:T(1,128)}', space=vmem, size = 0x400, scoped, tag = 'scratch operand']
  #allocation4 [shape = 'f32[256,2]{1,0:T(8,128)}', space=vmem, size = 0x20000, scoped, tag = 'scratch operand']
  %s0 = inlined_call_operand.vmem [shape: f32[98], index: 0, kind: input, shape index: {}]
  %s1 = inlined_call_operand.vmem [shape: f32[2,256,256], index: 1, kind: input, shape index: {}]
  %s2 = inlined_call_operand.vmem [shape: f32[16,256], index: 2, kind: input, shape index: {}]
  %s3 = inlined_call_operand.vmem [shape: f32[256,16], index: 3, kind: input, shape index: {}]
  %s4 = inlined_call_operand.vmem [shape: f32[2,256,256], index: 4, kind: output, shape index: {}]
  %s5 = sld [smem:[#allocation0]]
  $region53: #{cbam2d_forward.1} parent=0
    _
  %s7 = ssub.s32 1, %s5
  %s8 = scalar_select 0, %s7, %s5
  $region1: #{cbam2d_forward.1} parent=0
    #allocation5 [shape = 'u8[512]{0}', space=smem, size = 0x200, scoped, tag = 'input window, operand 0, single buffered']
    #allocation6 [shape = 's32[2]{0}', space=sflag, size = 0x8, scoped, tag = 'scoped memory for cbam2d_forward.1']
    %9 = vsyncpa [#allocation6], 0
    loop: start=0, step=1, limit=4
    $region2: #{cbam2d_forward.1} parent=1 // loop_pre_header
      _
    $region3: #{cbam2d_forward.1} parent=1 // loop_header
      %s11 = sphi 0, %s15
      %p12 = scmp.ge.s32.totalorder %s11, 4
      %s19 = sphi 0, %s19
      %s21 = sphi 0, %s19
      %s22 = sphi 0, %s21
      %s36 = sphi 0, %s22
      %s42 = sphi 0, %s44
      %s45 = sphi 0, %s42
      %s46 = sphi 0, %s45
      %s62 = sphi 0, %s46
      %s66 = sphi 0, %s66
      %s68 = sphi 0, %s66
      %s69 = sphi 0, %s68
      %s83 = sphi 0, %s69
      %s87 = sphi 0, %s87
      %s89 = sphi 0, %s87
      %s90 = sphi 0, %s89
      %s104 = sphi 0, %s90
      %s110 = sphi 0, %s112
      %s113 = sphi 0, %s110
      %s114 = sphi 0, %s113
      %s130 = sphi 0, %s114
    $region4: #{cbam2d_forward.1} parent=1 // loop_header_branch
      %14 = sbr.rel (%p12) target = $region8
    $region5: #{cbam2d_forward.1} parent=1 // loop_body
      %s16 = ssub.s32 %s11, 1
      %s17 = ssub.s32 %s11, 2
      %s18 = sadd.s32 %s11, 1
      %s20 = sadd.s32 %s19, 1
      %p23 = scmp.eq.s32.totalorder %s11, 1
      %p24 = scmp.ne.s32.totalorder %s19, %s21
      %p25 = scmp.eq.s32.totalorder %s11, 0
      %p26 = por %p24, %p25
      %p27 = scmp.ne.s32.totalorder %s19, %s21
      %p28 = scmp.eq.s32.totalorder %s16, 1
      %p29 = por %p27, %p28
      %p30 = scmp.ne.s32.totalorder %s21, %s22
      %p31 = scmp.eq.s32.totalorder %s16, 0
      %p32 = por %p30, %p31
      %p33 = scmp.ne.s32.totalorder %s21, %s22
      %p34 = scmp.eq.s32.totalorder %s17, 1
      %p35 = por %p33, %p34
      %p37 = scmp.ne.s32.totalorder %s22, %s36
      %p38 = scmp.eq.s32.totalorder %s17, 0
      %p39 = por %p37, %p38
      %s40 = ssub.s32 %s11, %s18
      %p41 = scmp.eq.s32.totalorder %s40, 0
      %s43 = sadd.s32 %s42, 1
      %s44 = scalar_select %p41, %s42, %s43
      %p47 = pneg %p41
      %p48 = scmp.eq.s32.totalorder %s11, 1
      %p49 = por %p47, %p48
      %p50 = scmp.ne.s32.totalorder %s42, %s45
      %p51 = scmp.eq.s32.totalorder %s11, 0
      %p52 = por %p50, %p51
      %p53 = scmp.ne.s32.totalorder %s42, %s45
      %p54 = scmp.eq.s32.totalorder %s16, 1
      %p55 = por %p53, %p54
      %p56 = scmp.ne.s32.totalorder %s45, %s46
      %p57 = scmp.eq.s32.totalorder %s16, 0
      %p58 = por %p56, %p57
      %p59 = scmp.ne.s32.totalorder %s45, %s46
      %p60 = scmp.eq.s32.totalorder %s17, 1
      %p61 = por %p59, %p60
      %p63 = scmp.ne.s32.totalorder %s46, %s62
      %p64 = scmp.eq.s32.totalorder %s17, 0
      %p65 = por %p63, %p64
      %s67 = sadd.s32 %s66, 1
      %p70 = scmp.eq.s32.totalorder %s11, 1
      %p71 = scmp.ne.s32.totalorder %s66, %s68
      %p72 = scmp.eq.s32.totalorder %s11, 0
      %p73 = por %p71, %p72
      %p74 = scmp.ne.s32.totalorder %s66, %s68
      %p75 = scmp.eq.s32.totalorder %s16, 1
      %p76 = por %p74, %p75
      %p77 = scmp.ne.s32.totalorder %s68, %s69
      %p78 = scmp.eq.s32.totalorder %s16, 0
      %p79 = por %p77, %p78
      %p80 = scmp.ne.s32.totalorder %s68, %s69
      %p81 = scmp.eq.s32.totalorder %s17, 1
      %p82 = por %p80, %p81
      %p84 = scmp.ne.s32.totalorder %s69, %s83
      %p85 = scmp.eq.s32.totalorder %s17, 0
      %p86 = por %p84, %p85
      %s88 = sadd.s32 %s87, 1
      %p91 = scmp.eq.s32.totalorder %s11, 1
      %p92 = scmp.ne.s32.totalorder %s87, %s89
      %p93 = scmp.eq.s32.totalorder %s11, 0
      %p94 = por %p92, %p93
      %p95 = scmp.ne.s32.totalorder %s87, %s89
      %p96 = scmp.eq.s32.totalorder %s16, 1
      %p97 = por %p95, %p96
      %p98 = scmp.ne.s32.totalorder %s89, %s90
      %p99 = scmp.eq.s32.totalorder %s16, 0
      %p100 = por %p98, %p99
      %p101 = scmp.ne.s32.totalorder %s89, %s90
      %p102 = scmp.eq.s32.totalorder %s17, 1
      %p103 = por %p101, %p102
      %p105 = scmp.ne.s32.totalorder %s90, %s104
      %p106 = scmp.eq.s32.totalorder %s17, 0
      %p107 = por %p105, %p106
      %s108 = ssub.s32 %s11, %s18
      %p109 = scmp.eq.s32.totalorder %s108, 0
      %s111 = sadd.s32 %s110, 1
      %s112 = scalar_select %p109, %s110, %s111
      %p115 = pneg %p109
      %p116 = scmp.eq.s32.totalorder %s11, 1
      %p117 = por %p115, %p116
      %p118 = scmp.ne.s32.totalorder %s110, %s113
      %p119 = scmp.eq.s32.totalorder %s11, 0
      %p120 = por %p118, %p119
      %p121 = scmp.ne.s32.totalorder %s110, %s113
      %p122 = scmp.eq.s32.totalorder %s16, 1
      %p123 = por %p121, %p122
      %p124 = scmp.ne.s32.totalorder %s113, %s114
      %p125 = scmp.eq.s32.totalorder %s16, 0
      %p126 = por %p124, %p125
      %p127 = scmp.ne.s32.totalorder %s113, %s114
      %p128 = scmp.eq.s32.totalorder %s17, 1
      %p129 = por %p127, %p128
      %p131 = scmp.ne.s32.totalorder %s114, %s130
      %p132 = scmp.eq.s32.totalorder %s17, 0
      %p133 = por %p131, %p132
      %p134 = scmp.le.s32.totalorder 1, %s11
      %p135 = scmp.lt.s32.totalorder %s11, 3
      %p136 = pnand %p134, %p135
      %p137 = pneg %p136
      // Predicated region
      $region9: #{cbam2d_forward.1} parent=5 // pred_check
        _
      $region10: #{cbam2d_forward.1} parent=5 // pred_check_branch
        %139 = sbr.rel (%p136) target = $region12
      $region11: #{cbam2d_forward.1} parent=5 // pred_region
        %s140 = ssub.s32 %s11, 1
        // Predicated region
        $region13: #{cbam2d_forward.1} parent=11 // pred_check
          %p141 = pneg %p32
        $region14: #{cbam2d_forward.1} parent=11 // pred_check_branch
          %143 = sbr.rel (%p141) target = $region16
        $region15: #{cbam2d_forward.1} parent=11 // pred_region
          %s145 = ssub.s32 16, 16
          %146 = vsyncadd [#allocation6], %s145
          %s148 = sshll.u32 %s0, 4
          %s149 = int_to_ptr.vmem [resolvable:$true] %s148
          %151 = dma.vmem_to_smem %s149, 16, [#allocation5], [#allocation6]
        $region16: #{cbam2d_forward.1} parent=11 // pred_fallthru
          _
        // Predicated region
        $region17: #{cbam2d_forward.1} parent=11 // pred_check
          %p152 = pneg %p79
        $region18: #{cbam2d_forward.1} parent=11 // pred_check_branch
          %154 = sbr.rel (%p152) target = $region20
        $region19: #{cbam2d_forward.1} parent=11 // pred_region
          _
        $region20: #{cbam2d_forward.1} parent=11 // pred_fallthru
          _
        // Predicated region
        $region21: #{cbam2d_forward.1} parent=11 // pred_check
          %p155 = pneg %p100
        $region22: #{cbam2d_forward.1} parent=11 // pred_check_branch
          %157 = sbr.rel (%p155) target = $region24
        $region23: #{cbam2d_forward.1} parent=11 // pred_region
          _
        $region24: #{cbam2d_forward.1} parent=11 // pred_fallthru
          _
      $region12: #{cbam2d_forward.1} parent=5 // pred_fallthru
        _
      %p158 = scmp.lt.s32.totalorder %s11, 2
      // Predicated region
      $region25: #{cbam2d_forward.1} parent=5 // pred_check
        %p159 = pneg %p158
      $region26: #{cbam2d_forward.1} parent=5 // pred_check_branch
        %161 = sbr.rel (%p159) target = $region28
      $region27: #{cbam2d_forward.1} parent=5 // pred_region
        // Predicated region
        $region29: #{cbam2d_forward.1} parent=27 // pred_check
          %p162 = pneg %p52
        $region30: #{cbam2d_forward.1} parent=27 // pred_check_branch
          %164 = sbr.rel (%p162) target = $region32
        $region31: #{cbam2d_forward.1} parent=27 // pred_region
          %p165 = scmp.lt.s32.totalorder %s11, 1
          %s166 = scalar_select %p165, %s11, 1
          %s167 = smul.addr %s166, 64
          %s168 = smul.addr %s167, 8
          %s169 = scalar_lea.vmem %s1, %s168
        $region32: #{cbam2d_forward.1} parent=27 // pred_fallthru
          _
      $region28: #{cbam2d_forward.1} parent=5 // pred_fallthru
        _
      %p170 = scmp.le.s32.totalorder 1, %s11
      %p171 = scmp.lt.s32.totalorder %s11, 3
      %p172 = pnand %p170, %p171
      %p173 = pneg %p172
      // Predicated region
      $region33: #{cbam2d_forward.1} parent=5 // pred_check
        _
      $region34: #{cbam2d_forward.1} parent=5 // pred_check_branch
        %175 = sbr.rel (%p172) target = $region36
      $region35: #{cbam2d_forward.1} parent=5 // pred_region
        %s176 = ssub.s32 %s11, 1
        // Predicated region
        $region37: #{cbam2d_forward.1} parent=35 // pred_check
          %p177 = pneg %p32
        $region38: #{cbam2d_forward.1} parent=35 // pred_check_branch
          %179 = sbr.rel (%p177) target = $region40
        $region39: #{cbam2d_forward.1} parent=35 // pred_region
          %180 = dma.done [#allocation6], 16
        $region40: #{cbam2d_forward.1} parent=35 // pred_fallthru
          _
        %181 = sfence
        %p182 = pneg %p32
        %p183 = pneg %p29
        %p184 = scmp.lt.s32.totalorder %s16, 1
        %s185 = scalar_select %p184, %s16, 1
        %s186 = smul.addr %s185, 64
        %s187 = smul.addr %s186, 8
        %s188 = scalar_lea.vmem %s1, %s187
        %p189 = pneg %p58
        %p190 = pneg %p55
        %p191 = pneg %p79
        %p192 = pneg %p76
        %p193 = pneg %p100
        %p194 = pneg %p97
        %p195 = pneg %p126
        %p196 = pneg %p123
        %p197 = scmp.lt.s32.totalorder %s16, 1
        %s198 = scalar_select %p197, %s16, 1
        %s199 = smul.addr %s198, 64
        %s200 = smul.addr %s199, 8
        %s201 = scalar_lea.vmem %s4, %s200
        %p202 = scmp.lt.s32.totalorder %s16, 1
        %s203 = scalar_select %p202, %s16, 1
        %s204 = smul.addr %s203, 64
        %s205 = smul.addr %s204, 8
        %s206 = scalar_lea.vmem %s1, %s205
        %p207 = scmp.lt.s32.totalorder %s16, 1
        %s208 = scalar_select %p207, %s16, 1
        %s209 = smul.addr %s208, 64
        %s210 = smul.addr %s209, 8
        %s211 = scalar_lea.vmem %s4, %s210
        %v212 = vld [vmem:[%s206] sm:$0xff]
        %v213 = vld [vmem:[%s206 + $0x8] sm:$0xff]
        %v214 = vld [vmem:[%s206 + $0x10] sm:$0xff]
        %v215 = vld [vmem:[%s206 + $0x18] sm:$0xff]
        %v216 = vld [vmem:[%s206 + $0x20] sm:$0xff]
        %v217 = vld [vmem:[%s206 + $0x28] sm:$0xff]
        %v218 = vld [vmem:[%s206 + $0x30] sm:$0xff]
        %v219 = vld [vmem:[%s206 + $0x38] sm:$0xff]
        %v220 = vld [vmem:[%s206 + $0x40] sm:$0xff]
        %v221 = vld [vmem:[%s206 + $0x48] sm:$0xff]
        %v222 = vld [vmem:[%s206 + $0x50] sm:$0xff]
        %v223 = vld [vmem:[%s206 + $0x58] sm:$0xff]
        %v224 = vld [vmem:[%s206 + $0x60] sm:$0xff]
        %v225 = vld [vmem:[%s206 + $0x68] sm:$0xff]
        %v226 = vld [vmem:[%s206 + $0x70] sm:$0xff]
        %v227 = vld [vmem:[%s206 + $0x78] sm:$0xff]
        %v228 = vld [vmem:[%s206 + $0x80] sm:$0xff]
        %v229 = vld [vmem:[%s206 + $0x88] sm:$0xff]
        %v230 = vld [vmem:[%s206 + $0x90] sm:$0xff]
        %v231 = vld [vmem:[%s206 + $0x98] sm:$0xff]
        %v232 = vld [vmem:[%s206 + $0xa0] sm:$0xff]
        %v233 = vld [vmem:[%s206 + $0xa8] sm:$0xff]
        %v234 = vld [vmem:[%s206 + $0xb0] sm:$0xff]
        %v235 = vld [vmem:[%s206 + $0xb8] sm:$0xff]
        %v236 = vld [vmem:[%s206 + $0xc0] sm:$0xff]
        %v237 = vld [vmem:[%s206 + $0xc8] sm:$0xff]
        %v238 = vld [vmem:[%s206 + $0xd0] sm:$0xff]
        %v239 = vld [vmem:[%s206 + $0xd8] sm:$0xff]
        %v240 = vld [vmem:[%s206 + $0xe0] sm:$0xff]
        %v241 = vld [vmem:[%s206 + $0xe8] sm:$0xff]
        %v242 = vld [vmem:[%s206 + $0xf0] sm:$0xff]
        %v243 = vld [vmem:[%s206 + $0xf8] sm:$0xff]
        %v244 = vld [vmem:[%s206 + $0x100] sm:$0xff]
        %v245 = vld [vmem:[%s206 + $0x108] sm:$0xff]
        %v246 = vld [vmem:[%s206 + $0x110] sm:$0xff]
        %v247 = vld [vmem:[%s206 + $0x118] sm:$0xff]
        %v248 = vld [vmem:[%s206 + $0x120] sm:$0xff]
        %v249 = vld [vmem:[%s206 + $0x128] sm:$0xff]
        %v250 = vld [vmem:[%s206 + $0x130] sm:$0xff]
        %v251 = vld [vmem:[%s206 + $0x138] sm:$0xff]
        %v252 = vld [vmem:[%s206 + $0x140] sm:$0xff]
        %v253 = vld [vmem:[%s206 + $0x148] sm:$0xff]
        %v254 = vld [vmem:[%s206 + $0x150] sm:$0xff]
        %v255 = vld [vmem:[%s206 + $0x158] sm:$0xff]
        %v256 = vld [vmem:[%s206 + $0x160] sm:$0xff]
        %v257 = vld [vmem:[%s206 + $0x168] sm:$0xff]
        %v258 = vld [vmem:[%s206 + $0x170] sm:$0xff]
        %v259 = vld [vmem:[%s206 + $0x178] sm:$0xff]
        %v260 = vld [vmem:[%s206 + $0x180] sm:$0xff]
        %v261 = vld [vmem:[%s206 + $0x188] sm:$0xff]
        %v262 = vld [vmem:[%s206 + $0x190] sm:$0xff]
        %v263 = vld [vmem:[%s206 + $0x198] sm:$0xff]
        %v264 = vld [vmem:[%s206 + $0x1a0] sm:$0xff]
        %v265 = vld [vmem:[%s206 + $0x1a8] sm:$0xff]
        %v266 = vld [vmem:[%s206 + $0x1b0] sm:$0xff]
        %v267 = vld [vmem:[%s206 + $0x1b8] sm:$0xff]
        %v268 = vld [vmem:[%s206 + $0x1c0] sm:$0xff]
        %v269 = vld [vmem:[%s206 + $0x1c8] sm:$0xff]
        %v270 = vld [vmem:[%s206 + $0x1d0] sm:$0xff]
        %v271 = vld [vmem:[%s206 + $0x1d8] sm:$0xff]
        %v272 = vld [vmem:[%s206 + $0x1e0] sm:$0xff]
        %v273 = vld [vmem:[%s206 + $0x1e8] sm:$0xff]
        %v274 = vld [vmem:[%s206 + $0x1f0] sm:$0xff]
        %v275 = vld [vmem:[%s206 + $0x1f8] sm:$0xff]
        %v276 = vmax.f32 %v212, %v213
        %277 = vmax.xlane.f32.xlu0 %v276
        %v278 = vpop.xlane.xlu0 %277
        %v279 = vmax.f32 %v214, %v215
        %280 = vmax.xlane.f32.xlu0 %v279
        %v281 = vpop.xlane.xlu0 %280
        %v282 = vmax.f32 %v216, %v217
        %283 = vmax.xlane.f32.xlu0 %v282
        %v284 = vpop.xlane.xlu0 %283
        %v285 = vmax.f32 %v218, %v219
        %286 = vmax.xlane.f32.xlu0 %v285
        %v287 = vpop.xlane.xlu0 %286
        %v288 = vmax.f32 %v220, %v221
        %289 = vmax.xlane.f32.xlu0 %v288
        %v290 = vpop.xlane.xlu0 %289
        %v291 = vmax.f32 %v222, %v223
        %292 = vmax.xlane.f32.xlu0 %v291
        %v293 = vpop.xlane.xlu0 %292
        %v294 = vmax.f32 %v224, %v225
        %295 = vmax.xlane.f32.xlu0 %v294
        %v296 = vpop.xlane.xlu0 %295
        %v297 = vmax.f32 %v226, %v227
        %298 = vmax.xlane.f32.xlu0 %v297
        %v299 = vpop.xlane.xlu0 %298
        %v300 = vmax.f32 %v228, %v229
        %301 = vmax.xlane.f32.xlu0 %v300
        %v302 = vpop.xlane.xlu0 %301
        %v303 = vmax.f32 %v230, %v231
        %304 = vmax.xlane.f32.xlu0 %v303
        %v305 = vpop.xlane.xlu0 %304
        %v306 = vmax.f32 %v232, %v233
        %307 = vmax.xlane.f32.xlu0 %v306
        %v308 = vpop.xlane.xlu0 %307
        %v309 = vmax.f32 %v234, %v235
        %310 = vmax.xlane.f32.xlu0 %v309
        %v311 = vpop.xlane.xlu0 %310
        %v312 = vmax.f32 %v236, %v237
        %313 = vmax.xlane.f32.xlu0 %v312
        %v314 = vpop.xlane.xlu0 %313
        %v315 = vmax.f32 %v238, %v239
        %316 = vmax.xlane.f32.xlu0 %v315
        %v317 = vpop.xlane.xlu0 %316
        %v318 = vmax.f32 %v240, %v241
        %319 = vmax.xlane.f32.xlu0 %v318
        %v320 = vpop.xlane.xlu0 %319
        %v321 = vmax.f32 %v242, %v243
        %322 = vmax.xlane.f32.xlu0 %v321
        %v323 = vpop.xlane.xlu0 %322
        %v324 = vmax.f32 %v244, %v245
        %325 = vmax.xlane.f32.xlu0 %v324
        %v326 = vpop.xlane.xlu0 %325
        %v327 = vmax.f32 %v246, %v247
        %328 = vmax.xlane.f32.xlu0 %v327
        %v329 = vpop.xlane.xlu0 %328
        %v330 = vmax.f32 %v248, %v249
        %331 = vmax.xlane.f32.xlu0 %v330
        %v332 = vpop.xlane.xlu0 %331
        %v333 = vmax.f32 %v250, %v251
        %334 = vmax.xlane.f32.xlu0 %v333
        %v335 = vpop.xlane.xlu0 %334
        %v336 = vmax.f32 %v252, %v253
        %337 = vmax.xlane.f32.xlu0 %v336
        %v338 = vpop.xlane.xlu0 %337
        %v339 = vmax.f32 %v254, %v255
        %340 = vmax.xlane.f32.xlu0 %v339
        %v341 = vpop.xlane.xlu0 %340
        %v342 = vmax.f32 %v256, %v257
        %343 = vmax.xlane.f32.xlu0 %v342
        %v344 = vpop.xlane.xlu0 %343
        %v345 = vmax.f32 %v258, %v259
        %346 = vmax.xlane.f32.xlu0 %v345
        %v347 = vpop.xlane.xlu0 %346
        %v348 = vmax.f32 %v260, %v261
        %349 = vmax.xlane.f32.xlu0 %v348
        %v350 = vpop.xlane.xlu0 %349
        %v351 = vmax.f32 %v262, %v263
        %352 = vmax.xlane.f32.xlu0 %v351
        %v353 = vpop.xlane.xlu0 %352
        %v354 = vmax.f32 %v264, %v265
        %355 = vmax.xlane.f32.xlu0 %v354
        %v356 = vpop.xlane.xlu0 %355
        %v357 = vmax.f32 %v266, %v267
        %358 = vmax.xlane.f32.xlu0 %v357
        %v359 = vpop.xlane.xlu0 %358
        %v360 = vmax.f32 %v268, %v269
        %361 = vmax.xlane.f32.xlu0 %v360
        %v362 = vpop.xlane.xlu0 %361
        %v363 = vmax.f32 %v270, %v271
        %364 = vmax.xlane.f32.xlu0 %v363
        %v365 = vpop.xlane.xlu0 %364
        %v366 = vmax.f32 %v272, %v273
        %367 = vmax.xlane.f32.xlu0 %v366
        %v368 = vpop.xlane.xlu0 %367
        %v369 = vmax.f32 %v274, %v275
        %370 = vmax.xlane.f32.xlu0 %v369
        %v371 = vpop.xlane.xlu0 %370
        %v372 = vadd.f32 %v212, %v213
        %373 = vadd.xlane.f32.xlu0 %v372
        %v374 = vpop.xlane.xlu0 %373
        %v375 = vadd.f32 %v214, %v215
        %376 = vadd.xlane.f32.xlu0 %v375
        %v377 = vpop.xlane.xlu0 %376
        %v378 = vadd.f32 %v216, %v217
        %379 = vadd.xlane.f32.xlu0 %v378
        %v380 = vpop.xlane.xlu0 %379
        %v381 = vadd.f32 %v218, %v219
        %382 = vadd.xlane.f32.xlu0 %v381
        %v383 = vpop.xlane.xlu0 %382
        %v384 = vadd.f32 %v220, %v221
        %385 = vadd.xlane.f32.xlu0 %v384
        %v386 = vpop.xlane.xlu0 %385
        %v387 = vadd.f32 %v222, %v223
        %388 = vadd.xlane.f32.xlu0 %v387
        %v389 = vpop.xlane.xlu0 %388
        %v390 = vadd.f32 %v224, %v225
        %391 = vadd.xlane.f32.xlu0 %v390
        %v392 = vpop.xlane.xlu0 %391
        %v393 = vadd.f32 %v226, %v227
        %394 = vadd.xlane.f32.xlu0 %v393
        %v395 = vpop.xlane.xlu0 %394
        %v396 = vadd.f32 %v228, %v229
        %397 = vadd.xlane.f32.xlu0 %v396
        %v398 = vpop.xlane.xlu0 %397
        %v399 = vadd.f32 %v230, %v231
        %400 = vadd.xlane.f32.xlu0 %v399
        %v401 = vpop.xlane.xlu0 %400
        %v402 = vadd.f32 %v232, %v233
        %403 = vadd.xlane.f32.xlu0 %v402
        %v404 = vpop.xlane.xlu0 %403
        %v405 = vadd.f32 %v234, %v235
        %406 = vadd.xlane.f32.xlu0 %v405
        %v407 = vpop.xlane.xlu0 %406
        %v408 = vadd.f32 %v236, %v237
        %409 = vadd.xlane.f32.xlu0 %v408
        %v410 = vpop.xlane.xlu0 %409
        %v411 = vadd.f32 %v238, %v239
        %412 = vadd.xlane.f32.xlu0 %v411
        %v413 = vpop.xlane.xlu0 %412
        %v414 = vadd.f32 %v240, %v241
        %415 = vadd.xlane.f32.xlu0 %v414
        %v416 = vpop.xlane.xlu0 %415
        %v417 = vadd.f32 %v242, %v243
        %418 = vadd.xlane.f32.xlu0 %v417
        %v419 = vpop.xlane.xlu0 %418
        %v420 = vadd.f32 %v244, %v245
        %421 = vadd.xlane.f32.xlu0 %v420
        %v422 = vpop.xlane.xlu0 %421
        %v423 = vadd.f32 %v246, %v247
        %424 = vadd.xlane.f32.xlu0 %v423
        %v425 = vpop.xlane.xlu0 %424
        %v426 = vadd.f32 %v248, %v249
        %427 = vadd.xlane.f32.xlu0 %v426
        %v428 = vpop.xlane.xlu0 %427
        %v429 = vadd.f32 %v250, %v251
        %430 = vadd.xlane.f32.xlu0 %v429
        %v431 = vpop.xlane.xlu0 %430
        %v432 = vadd.f32 %v252, %v253
        %433 = vadd.xlane.f32.xlu0 %v432
        %v434 = vpop.xlane.xlu0 %433
        %v435 = vadd.f32 %v254, %v255
        %436 = vadd.xlane.f32.xlu0 %v435
        %v437 = vpop.xlane.xlu0 %436
        %v438 = vadd.f32 %v256, %v257
        %439 = vadd.xlane.f32.xlu0 %v438
        %v440 = vpop.xlane.xlu0 %439
        %v441 = vadd.f32 %v258, %v259
        %442 = vadd.xlane.f32.xlu0 %v441
        %v443 = vpop.xlane.xlu0 %442
        %v444 = vadd.f32 %v260, %v261
        %445 = vadd.xlane.f32.xlu0 %v444
        %v446 = vpop.xlane.xlu0 %445
        %v447 = vadd.f32 %v262, %v263
        %448 = vadd.xlane.f32.xlu0 %v447
        %v449 = vpop.xlane.xlu0 %448
        %v450 = vadd.f32 %v264, %v265
        %451 = vadd.xlane.f32.xlu0 %v450
        %v452 = vpop.xlane.xlu0 %451
        %v453 = vadd.f32 %v266, %v267
        %454 = vadd.xlane.f32.xlu0 %v453
        %v455 = vpop.xlane.xlu0 %454
        %v456 = vadd.f32 %v268, %v269
        %457 = vadd.xlane.f32.xlu0 %v456
        %v458 = vpop.xlane.xlu0 %457
        %v459 = vadd.f32 %v270, %v271
        %460 = vadd.xlane.f32.xlu0 %v459
        %v461 = vpop.xlane.xlu0 %460
        %v462 = vadd.f32 %v272, %v273
        %463 = vadd.xlane.f32.xlu0 %v462
        %v464 = vpop.xlane.xlu0 %463
        %v465 = vadd.f32 %v274, %v275
        %466 = vadd.xlane.f32.xlu0 %v465
        %v467 = vpop.xlane.xlu0 %466
        %v468 = vmul.f32 %v374, 0.00390625
        %v469 = vmul.f32 %v377, 0.00390625
        %v470 = vmul.f32 %v380, 0.00390625
        %v471 = vmul.f32 %v383, 0.00390625
        %v472 = vmul.f32 %v386, 0.00390625
        %v473 = vmul.f32 %v389, 0.00390625
        %v474 = vmul.f32 %v392, 0.00390625
        %v475 = vmul.f32 %v395, 0.00390625
        %v476 = vmul.f32 %v398, 0.00390625
        %v477 = vmul.f32 %v401, 0.00390625
        %v478 = vmul.f32 %v404, 0.00390625
        %v479 = vmul.f32 %v407, 0.00390625
        %v480 = vmul.f32 %v410, 0.00390625
        %v481 = vmul.f32 %v413, 0.00390625
        %v482 = vmul.f32 %v416, 0.00390625
        %v483 = vmul.f32 %v419, 0.00390625
        %v484 = vmul.f32 %v422, 0.00390625
        %v485 = vmul.f32 %v425, 0.00390625
        %v486 = vmul.f32 %v428, 0.00390625
        %v487 = vmul.f32 %v431, 0.00390625
        %v488 = vmul.f32 %v434, 0.00390625
        %v489 = vmul.f32 %v437, 0.00390625
        %v490 = vmul.f32 %v440, 0.00390625
        %v491 = vmul.f32 %v443, 0.00390625
        %v492 = vmul.f32 %v446, 0.00390625
        %v493 = vmul.f32 %v449, 0.00390625
        %v494 = vmul.f32 %v452, 0.00390625
        %v495 = vmul.f32 %v455, 0.00390625
        %v496 = vmul.f32 %v458, 0.00390625
        %v497 = vmul.f32 %v461, 0.00390625
        %v498 = vmul.f32 %v464, 0.00390625
        %v499 = vmul.f32 %v467, 0.00390625
        %vm500 = vcmask 7168
        %501 = vst.msk [vmem:[#allocation4] sm:$0xff] %vm500, %v278
        %502 = vst.msk [vmem:[#allocation4 + $0x8] sm:$0xff] %vm500, %v281
        %503 = vst.msk [vmem:[#allocation4 + $0x10] sm:$0xff] %vm500, %v284
        %504 = vst.msk [vmem:[#allocation4 + $0x18] sm:$0xff] %vm500, %v287
        %505 = vst.msk [vmem:[#allocation4 + $0x20] sm:$0xff] %vm500, %v290
        %506 = vst.msk [vmem:[#allocation4 + $0x28] sm:$0xff] %vm500, %v293
        %507 = vst.msk [vmem:[#allocation4 + $0x30] sm:$0xff] %vm500, %v296
        %508 = vst.msk [vmem:[#allocation4 + $0x38] sm:$0xff] %vm500, %v299
        %509 = vst.msk [vmem:[#allocation4 + $0x40] sm:$0xff] %vm500, %v302
        %510 = vst.msk [vmem:[#allocation4 + $0x48] sm:$0xff] %vm500, %v305
        %511 = vst.msk [vmem:[#allocation4 + $0x50] sm:$0xff] %vm500, %v308
        %512 = vst.msk [vmem:[#allocation4 + $0x58] sm:$0xff] %vm500, %v311
        %513 = vst.msk [vmem:[#allocation4 + $0x60] sm:$0xff] %vm500, %v314
        %514 = vst.msk [vmem:[#allocation4 + $0x68] sm:$0xff] %vm500, %v317
        %515 = vst.msk [vmem:[#allocation4 + $0x70] sm:$0xff] %vm500, %v320
        %516 = vst.msk [vmem:[#allocation4 + $0x78] sm:$0xff] %vm500, %v323
        %517 = vst.msk [vmem:[#allocation4 + $0x80] sm:$0xff] %vm500, %v326
        %518 = vst.msk [vmem:[#allocation4 + $0x88] sm:$0xff] %vm500, %v329
        %519 = vst.msk [vmem:[#allocation4 + $0x90] sm:$0xff] %vm500, %v332
        %520 = vst.msk [vmem:[#allocation4 + $0x98] sm:$0xff] %vm500, %v335
        %521 = vst.msk [vmem:[#allocation4 + $0xa0] sm:$0xff] %vm500, %v338
        %522 = vst.msk [vmem:[#allocation4 + $0xa8] sm:$0xff] %vm500, %v341
        %523 = vst.msk [vmem:[#allocation4 + $0xb0] sm:$0xff] %vm500, %v344
        %524 = vst.msk [vmem:[#allocation4 + $0xb8] sm:$0xff] %vm500, %v347
        %525 = vst.msk [vmem:[#allocation4 + $0xc0] sm:$0xff] %vm500, %v350
        %526 = vst.msk [vmem:[#allocation4 + $0xc8] sm:$0xff] %vm500, %v353
        %527 = vst.msk [vmem:[#allocation4 + $0xd0] sm:$0xff] %vm500, %v356
        %528 = vst.msk [vmem:[#allocation4 + $0xd8] sm:$0xff] %vm500, %v359
        %529 = vst.msk [vmem:[#allocation4 + $0xe0] sm:$0xff] %vm500, %v362
        %530 = vst.msk [vmem:[#allocation4 + $0xe8] sm:$0xff] %vm500, %v365
        %531 = vst.msk [vmem:[#allocation4 + $0xf0] sm:$0xff] %vm500, %v368
        %532 = vst.msk [vmem:[#allocation4 + $0xf8] sm:$0xff] %vm500, %v371
        %vm533 = vcmask 15368
        %534 = vst.msk [vmem:[#allocation4] sm:$0xff] %vm533, %v468
        %535 = vst.msk [vmem:[#allocation4 + $0x8] sm:$0xff] %vm533, %v469
        %536 = vst.msk [vmem:[#allocation4 + $0x10] sm:$0xff] %vm533, %v470
        %537 = vst.msk [vmem:[#allocation4 + $0x18] sm:$0xff] %vm533, %v471
        %538 = vst.msk [vmem:[#allocation4 + $0x20] sm:$0xff] %vm533, %v472
        %539 = vst.msk [vmem:[#allocation4 + $0x28] sm:$0xff] %vm533, %v473
        %540 = vst.msk [vmem:[#allocation4 + $0x30] sm:$0xff] %vm533, %v474
        %541 = vst.msk [vmem:[#allocation4 + $0x38] sm:$0xff] %vm533, %v475
        %542 = vst.msk [vmem:[#allocation4 + $0x40] sm:$0xff] %vm533, %v476
        %543 = vst.msk [vmem:[#allocation4 + $0x48] sm:$0xff] %vm533, %v477
        %544 = vst.msk [vmem:[#allocation4 + $0x50] sm:$0xff] %vm533, %v478
        %545 = vst.msk [vmem:[#allocation4 + $0x58] sm:$0xff] %vm533, %v479
        %546 = vst.msk [vmem:[#allocation4 + $0x60] sm:$0xff] %vm533, %v480
        %547 = vst.msk [vmem:[#allocation4 + $0x68] sm:$0xff] %vm533, %v481
        %548 = vst.msk [vmem:[#allocation4 + $0x70] sm:$0xff] %vm533, %v482
        %549 = vst.msk [vmem:[#allocation4 + $0x78] sm:$0xff] %vm533, %v483
        %550 = vst.msk [vmem:[#allocation4 + $0x80] sm:$0xff] %vm533, %v484
        %551 = vst.msk [vmem:[#allocation4 + $0x88] sm:$0xff] %vm533, %v485
        %552 = vst.msk [vmem:[#allocation4 + $0x90] sm:$0xff] %vm533, %v486
        %553 = vst.msk [vmem:[#allocation4 + $0x98] sm:$0xff] %vm533, %v487
        %554 = vst.msk [vmem:[#allocation4 + $0xa0] sm:$0xff] %vm533, %v488
        %555 = vst.msk [vmem:[#allocation4 + $0xa8] sm:$0xff] %vm533, %v489
        %556 = vst.msk [vmem:[#allocation4 + $0xb0] sm:$0xff] %vm533, %v490
        %557 = vst.msk [vmem:[#allocation4 + $0xb8] sm:$0xff] %vm533, %v491
        %558 = vst.msk [vmem:[#allocation4 + $0xc0] sm:$0xff] %vm533, %v492
        %559 = vst.msk [vmem:[#allocation4 + $0xc8] sm:$0xff] %vm533, %v493
        %560 = vst.msk [vmem:[#allocation4 + $0xd0] sm:$0xff] %vm533, %v494
        %561 = vst.msk [vmem:[#allocation4 + $0xd8] sm:$0xff] %vm533, %v495
        %562 = vst.msk [vmem:[#allocation4 + $0xe0] sm:$0xff] %vm533, %v496
        %563 = vst.msk [vmem:[#allocation4 + $0xe8] sm:$0xff] %vm533, %v497
        %564 = vst.msk [vmem:[#allocation4 + $0xf0] sm:$0xff] %vm533, %v498
        %565 = vst.msk [vmem:[#allocation4 + $0xf8] sm:$0xff] %vm533, %v499
        %v566 = vld [vmem:[#allocation4] sm:$0xff]
        %v567 = vld [vmem:[#allocation4 + $0x8] sm:$0xff]
        %v568 = vld [vmem:[#allocation4 + $0x10] sm:$0xff]
        %v569 = vld [vmem:[#allocation4 + $0x18] sm:$0xff]
        %v570 = vld [vmem:[#allocation4 + $0x20] sm:$0xff]
        %v571 = vld [vmem:[#allocation4 + $0x28] sm:$0xff]
        %v572 = vld [vmem:[#allocation4 + $0x30] sm:$0xff]
        %v573 = vld [vmem:[#allocation4 + $0x38] sm:$0xff]
        %v574 = vld [vmem:[#allocation4 + $0x40] sm:$0xff]
        %v575 = vld [vmem:[#allocation4 + $0x48] sm:$0xff]
        %v576 = vld [vmem:[#allocation4 + $0x50] sm:$0xff]
        %v577 = vld [vmem:[#allocation4 + $0x58] sm:$0xff]
        %v578 = vld [vmem:[#allocation4 + $0x60] sm:$0xff]
        %v579 = vld [vmem:[#allocation4 + $0x68] sm:$0xff]
        %v580 = vld [vmem:[#allocation4 + $0x70] sm:$0xff]
        %v581 = vld [vmem:[#allocation4 + $0x78] sm:$0xff]
        %v582 = vld [vmem:[#allocation4 + $0x80] sm:$0xff]
        %v583 = vld [vmem:[#allocation4 + $0x88] sm:$0xff]
        %v584 = vld [vmem:[#allocation4 + $0x90] sm:$0xff]
        %v585 = vld [vmem:[#allocation4 + $0x98] sm:$0xff]
        %v586 = vld [vmem:[#allocation4 + $0xa0] sm:$0xff]
        %v587 = vld [vmem:[#allocation4 + $0xa8] sm:$0xff]
        %v588 = vld [vmem:[#allocation4 + $0xb0] sm:$0xff]
        %v589 = vld [vmem:[#allocation4 + $0xb8] sm:$0xff]
        %v590 = vld [vmem:[#allocation4 + $0xc0] sm:$0xff]
        %v591 = vld [vmem:[#allocation4 + $0xc8] sm:$0xff]
        %v592 = vld [vmem:[#allocation4 + $0xd0] sm:$0xff]
        %v593 = vld [vmem:[#allocation4 + $0xd8] sm:$0xff]
        %v594 = vld [vmem:[#allocation4 + $0xe0] sm:$0xff]
        %v595 = vld [vmem:[#allocation4 + $0xe8] sm:$0xff]
        %v596 = vld [vmem:[#allocation4 + $0xf0] sm:$0xff]
        %v597 = vld [vmem:[#allocation4 + $0xf8] sm:$0xff]
        %v598 = vld [vmem:[%s2] sm:$0xff]
        %v599 = vld [vmem:[%s2 + $0x8] sm:$0xff]
        %v600 = vld [vmem:[%s2 + $0x10] sm:$0xff]
        %v601 = vld [vmem:[%s2 + $0x18] sm:$0xff]
        %602 = vmatprep.subr.mxu0 0.0
        %603 = vmatpush1.msra.mxu0 %v566
        %604 = vmatprep.subr.mxu0 0.0
        %605 = vmatpush1.msra.mxu0 %v567
        %606 = vmatprep.subr.mxu0 0.0
        %607 = vmatpush1.msra.mxu0 %v568
        %608 = vmatprep.subr.mxu0 0.0
        %609 = vmatpush1.msra.mxu0 %v569
        %610 = vmatprep.subr.mxu0 0.0
        %611 = vmatpush1.msra.mxu0 %v570
        %612 = vmatprep.subr.mxu0 0.0
        %613 = vmatpush1.msra.mxu0 %v571
        %614 = vmatprep.subr.mxu0 0.0
        %615 = vmatpush1.msra.mxu0 %v572
        %616 = vmatprep.subr.mxu0 0.0
        %617 = vmatpush1.msra.mxu0 %v573
        %618 = vmatprep.subr.mxu0 0.0
        %619 = vmatpush1.msra.mxu0 %v574
        %620 = vmatprep.subr.mxu0 0.0
        %621 = vmatpush1.msra.mxu0 %v575
        %622 = vmatprep.subr.mxu0 0.0
        %623 = vmatpush1.msra.mxu0 %v576
        %624 = vmatprep.subr.mxu0 0.0
        %625 = vmatpush1.msra.mxu0 %v577
        %626 = vmatprep.subr.mxu0 0.0
        %627 = vmatpush1.msra.mxu0 %v578
        %628 = vmatprep.subr.mxu0 0.0
        %629 = vmatpush1.msra.mxu0 %v579
        %630 = vmatprep.subr.mxu0 0.0
        %631 = vmatpush1.msra.mxu0 %v580
        %632 = vmatprep.subr.mxu0 0.0
        %633 = vmatpush1.msra.mxu0 %v581
        %634 = vmatprep.subr.mxu0 0.0
        %635 = vmatpush1.msra.mxu0 %v582
        %636 = vmatprep.subr.mxu0 0.0
        %637 = vmatpush1.msra.mxu0 %v583
        %638 = vmatprep.subr.mxu0 0.0
        %639 = vmatpush1.msra.mxu0 %v584
        %640 = vmatprep.subr.mxu0 0.0
        %641 = vmatpush1.msra.mxu0 %v585
        %642 = vmatprep.subr.mxu0 0.0
        %643 = vmatpush1.msra.mxu0 %v586
        %644 = vmatprep.subr.mxu0 0.0
        %645 = vmatpush1.msra.mxu0 %v587
        %646 = vmatprep.subr.mxu0 0.0
        %647 = vmatpush1.msra.mxu0 %v588
        %648 = vmatprep.subr.mxu0 0.0
        %649 = vmatpush1.msra.mxu0 %v589
        %650 = vmatprep.subr.mxu0 0.0
        %651 = vmatpush1.msra.mxu0 %v590
        %652 = vmatprep.subr.mxu0 0.0
        %653 = vmatpush1.msra.mxu0 %v591
        %654 = vmatprep.subr.mxu0 0.0
        %655 = vmatpush1.msra.mxu0 %v592
        %656 = vmatprep.subr.mxu0 0.0
        %657 = vmatpush1.msra.mxu0 %v593
        %658 = vmatprep.subr.mxu0 0.0
        %659 = vmatpush1.msra.mxu0 %v594
        %660 = vmatprep.subr.mxu0 0.0
        %661 = vmatpush1.msra.mxu0 %v595
        %662 = vmatprep.subr.mxu0 0.0
        %663 = vmatpush1.msra.mxu0 %v596
        %664 = vmatprep.subr.mxu0 0.0
        %665 = vmatpush1.msra.mxu0 %v597
        %666 = vmatprep.mubr.f32.mxu0 %v599
        %667 = vmatmul.mubr.f32.gmra.mrb[0].mxu0 %v598
        %v668 = vpop.f32.mrb[0].mxu0
        %v669 = vadd.f32 0.0, %v668
        %v670 = vpop.f32.mrb[0].mxu0
        %671 = vmatprep.mubr.f32.mxu0 %v601
        %672 = vmatmul.mubr.f32.gmra.mrb[0].mxu0 %v600
        %v673 = vpop.f32.mrb[0].mxu0
        %v674 = vadd.f32 0.0, %v673
        %v675 = vpop.f32.mrb[0].mxu0
        %676 = vdwg.mxu0
        %v677 = vmax.f32 %v669, 0.0
        %v678 = vmax.f32 %v674, 0.0
        %v679 = vld [vmem:[%s3] sm:$0xff]
        %v680 = vld [vmem:[%s3 + $0x8] sm:$0xff]
        %v681 = vld [vmem:[%s3 + $0x10] sm:$0xff]
        %v682 = vld [vmem:[%s3 + $0x18] sm:$0xff]
        %v683 = vld [vmem:[%s3 + $0x20] sm:$0xff]
        %v684 = vld [vmem:[%s3 + $0x28] sm:$0xff]
        %v685 = vld [vmem:[%s3 + $0x30] sm:$0xff]
        %v686 = vld [vmem:[%s3 + $0x38] sm:$0xff]
        %v687 = vld [vmem:[%s3 + $0x40] sm:$0xff]
        %v688 = vld [vmem:[%s3 + $0x48] sm:$0xff]
        %v689 = vld [vmem:[%s3 + $0x50] sm:$0xff]
        %v690 = vld [vmem:[%s3 + $0x58] sm:$0xff]
        %v691 = vld [vmem:[%s3 + $0x60] sm:$0xff]
        %v692 = vld [vmem:[%s3 + $0x68] sm:$0xff]
        %v693 = vld [vmem:[%s3 + $0x70] sm:$0xff]
        %v694 = vld [vmem:[%s3 + $0x78] sm:$0xff]
        %v695 = vld [vmem:[%s3 + $0x80] sm:$0xff]
        %v696 = vld [vmem:[%s3 + $0x88] sm:$0xff]
        %v697 = vld [vmem:[%s3 + $0x90] sm:$0xff]
        %v698 = vld [vmem:[%s3 + $0x98] sm:$0xff]
        %v699 = vld [vmem:[%s3 + $0xa0] sm:$0xff]
        %v700 = vld [vmem:[%s3 + $0xa8] sm:$0xff]
        %v701 = vld [vmem:[%s3 + $0xb0] sm:$0xff]
        %v702 = vld [vmem:[%s3 + $0xb8] sm:$0xff]
        %v703 = vld [vmem:[%s3 + $0xc0] sm:$0xff]
        %v704 = vld [vmem:[%s3 + $0xc8] sm:$0xff]
        %v705 = vld [vmem:[%s3 + $0xd0] sm:$0xff]
        %v706 = vld [vmem:[%s3 + $0xd8] sm:$0xff]
        %v707 = vld [vmem:[%s3 + $0xe0] sm:$0xff]
        %v708 = vld [vmem:[%s3 + $0xe8] sm:$0xff]
        %v709 = vld [vmem:[%s3 + $0xf0] sm:$0xff]
        %v710 = vld [vmem:[%s3 + $0xf8] sm:$0xff]
        %vm711 = vcmask 130048
        %v713 = vsel %vm711, %v679, 0
        %v716 = vsel %vm711, %v680, 0
        %v719 = vsel %vm711, %v681, 0
        %v722 = vsel %vm711, %v682, 0
        %v725 = vsel %vm711, %v683, 0
        %v728 = vsel %vm711, %v684, 0
        %v731 = vsel %vm711, %v685, 0
        %v734 = vsel %vm711, %v686, 0
        %v737 = vsel %vm711, %v687, 0
        %v740 = vsel %vm711, %v688, 0
        %v743 = vsel %vm711, %v689, 0
        %v746 = vsel %vm711, %v690, 0
        %v749 = vsel %vm711, %v691, 0
        %v752 = vsel %vm711, %v692, 0
        %v755 = vsel %vm711, %v693, 0
        %v758 = vsel %vm711, %v694, 0
        %v761 = vsel %vm711, %v695, 0
        %v764 = vsel %vm711, %v696, 0
        %v767 = vsel %vm711, %v697, 0
        %v770 = vsel %vm711, %v698, 0
        %v773 = vsel %vm711, %v699, 0
        %v776 = vsel %vm711, %v700, 0
        %v779 = vsel %vm711, %v701, 0
        %v782 = vsel %vm711, %v702, 0
        %v785 = vsel %vm711, %v703, 0
        %v788 = vsel %vm711, %v704, 0
        %v791 = vsel %vm711, %v705, 0
        %v794 = vsel %vm711, %v706, 0
        %v797 = vsel %vm711, %v707, 0
        %v800 = vsel %vm711, %v708, 0
        %v803 = vsel %vm711, %v709, 0
        %v806 = vsel %vm711, %v710, 0
        %808 = vmatprep.subr.mxu0 0.0
        %809 = vmatpush1.msra.mxu0 %v677
        %810 = vmatprep.subr.mxu0 0.0
        %811 = vmatpush1.msra.mxu0 %v678
        %812 = vmatprep.subr.mxu0 0.0
        %813 = vmatpush1.msra.mxu0 0.0
        %814 = vmatprep.subr.mxu0 0.0
        %815 = vmatpush1.msra.mxu0 0.0
        %816 = vmatprep.subr.mxu0 0.0
        %817 = vmatpush1.msra.mxu0 0.0
        %818 = vmatprep.subr.mxu0 0.0
        %819 = vmatpush1.msra.mxu0 0.0
        %820 = vmatprep.subr.mxu0 0.0
        %821 = vmatpush1.msra.mxu0 0.0
        %822 = vmatprep.subr.mxu0 0.0
        %823 = vmatpush1.msra.mxu0 0.0
        %824 = vmatprep.subr.mxu0 0.0
        %825 = vmatpush1.msra.mxu0 0.0
        %826 = vmatprep.subr.mxu0 0.0
        %827 = vmatpush1.msra.mxu0 0.0
        %828 = vmatprep.subr.mxu0 0.0
        %829 = vmatpush1.msra.mxu0 0.0
        %830 = vmatprep.subr.mxu0 0.0
        %831 = vmatpush1.msra.mxu0 0.0
        %832 = vmatprep.subr.mxu0 0.0
        %833 = vmatpush1.msra.mxu0 0.0
        %834 = vmatprep.subr.mxu0 0.0
        %835 = vmatpush1.msra.mxu0 0.0
        %836 = vmatprep.subr.mxu0 0.0
        %837 = vmatpush1.msra.mxu0 0.0
        %838 = vmatprep.subr.mxu0 0.0
        %839 = vmatpush1.msra.mxu0 0.0
        %840 = vmatprep.subr.mxu0 0.0
        %841 = vmatpush1.msra.mxu0 0.0
        %842 = vmatprep.subr.mxu0 0.0
        %843 = vmatpush1.msra.mxu0 0.0
        %844 = vmatprep.subr.mxu0 0.0
        %845 = vmatpush1.msra.mxu0 0.0
        %846 = vmatprep.subr.mxu0 0.0
        %847 = vmatpush1.msra.mxu0 0.0
        %848 = vmatprep.subr.mxu0 0.0
        %849 = vmatpush1.msra.mxu0 0.0
        %850 = vmatprep.subr.mxu0 0.0
        %851 = vmatpush1.msra.mxu0 0.0
        %852 = vmatprep.subr.mxu0 0.0
        %853 = vmatpush1.msra.mxu0 0.0
        %854 = vmatprep.subr.mxu0 0.0
        %855 = vmatpush1.msra.mxu0 0.0
        %856 = vmatprep.subr.mxu0 0.0
        %857 = vmatpush1.msra.mxu0 0.0
        %858 = vmatprep.subr.mxu0 0.0
        %859 = vmatpush1.msra.mxu0 0.0
        %860 = vmatprep.subr.mxu0 0.0
        %861 = vmatpush1.msra.mxu0 0.0
        %862 = vmatprep.subr.mxu0 0.0
        %863 = vmatpush1.msra.mxu0 0.0
        %864 = vmatprep.subr.mxu0 0.0
        %865 = vmatpush1.msra.mxu0 0.0
        %866 = vmatprep.subr.mxu0 0.0
        %867 = vmatpush1.msra.mxu0 0.0
        %868 = vmatprep.subr.mxu0 0.0
        %869 = vmatpush1.msra.mxu0 0.0
        %870 = vmatprep.subr.mxu0 0.0
        %871 = vmatpush1.msra.mxu0 0.0
        %872 = vmatprep.mubr.f32.mxu0 0.0
        %873 = vmatmul.mubr.f32.gmra.mrb[0].mxu0 %v713
        %v874 = vpop.f32.mrb[0].mxu0
        %v875 = vadd.f32 0.0, %v874
        %v876 = vpop.f32.mrb[0].mxu0
        %877 = vmatprep.mubr.f32.mxu0 0.0
        %878 = vmatmul.mubr.f32.gmra.mrb[0].mxu0 %v716
        %v879 = vpop.f32.mrb[0].mxu0
        %v880 = vadd.f32 0.0, %v879
        %v881 = vpop.f32.mrb[0].mxu0
        %882 = vmatprep.mubr.f32.mxu0 0.0
        %883 = vmatmul.mubr.f32.gmra.mrb[0].mxu0 %v719
        %v884 = vpop.f32.mrb[0].mxu0
        %v885 = vadd.f32 0.0, %v884
        %v886 = vpop.f32.mrb[0].mxu0
        %887 = vmatprep.mubr.f32.mxu0 0.0
        %888 = vmatmul.mubr.f32.gmra.mrb[0].mxu0 %v722
        %v889 = vpop.f32.mrb[0].mxu0
        %v890 = vadd.f32 0.0, %v889
        %v891 = vpop.f32.mrb[0].mxu0
        %892 = vmatprep.mubr.f32.mxu0 0.0
        %893 = vmatmul.mubr.f32.gmra.mrb[0].mxu0 %v725
        %v894 = vpop.f32.mrb[0].mxu0
        %v895 = vadd.f32 0.0, %v894
        %v896 = vpop.f32.mrb[0].mxu0
        %897 = vmatprep.mubr.f32.mxu0 0.0
        %898 = vmatmul.mubr.f32.gmra.mrb[0].mxu0 %v728
        %v899 = vpop.f32.mrb[0].mxu0
        %v900 = vadd.f32 0.0, %v899
        %v901 = vpop.f32.mrb[0].mxu0
        %902 = vmatprep.mubr.f32.mxu0 0.0
        %903 = vmatmul.mubr.f32.gmra.mrb[0].mxu0 %v731
        %v904 = vpop.f32.mrb[0].mxu0
        %v905 = vadd.f32 0.0, %v904
        %v906 = vpop.f32.mrb[0].mxu0
        %907 = vmatprep.mubr.f32.mxu0 0.0
        %908 = vmatmul.mubr.f32.gmra.mrb[0].mxu0 %v734
        %v909 = vpop.f32.mrb[0].mxu0
        %v910 = vadd.f32 0.0, %v909
        %v911 = vpop.f32.mrb[0].mxu0
        %912 = vmatprep.mubr.f32.mxu0 0.0
        %913 = vmatmul.mubr.f32.gmra.mrb[0].mxu0 %v737
        %v914 = vpop.f32.mrb[0].mxu0
        %v915 = vadd.f32 0.0, %v914
        %v916 = vpop.f32.mrb[0].mxu0
        %917 = vmatprep.mubr.f32.mxu0 0.0
        %918 = vmatmul.mubr.f32.gmra.mrb[0].mxu0 %v740
        %v919 = vpop.f32.mrb[0].mxu0
        %v920 = vadd.f32 0.0, %v919
        %v921 = vpop.f32.mrb[0].mxu0
        %922 = vmatprep.mubr.f32.mxu0 0.0
        %923 = vmatmul.mubr.f32.gmra.mrb[0].mxu0 %v743
        %v924 = vpop.f32.mrb[0].mxu0
        %v925 = vadd.f32 0.0, %v924
        %v926 = vpop.f32.mrb[0].mxu0
        %927 = vmatprep.mubr.f32.mxu0 0.0
        %928 = vmatmul.mubr.f32.gmra.mrb[0].mxu0 %v746
        %v929 = vpop.f32.mrb[0].mxu0
        %v930 = vadd.f32 0.0, %v929
        %v931 = vpop.f32.mrb[0].mxu0
        %932 = vmatprep.mubr.f32.mxu0 0.0
        %933 = vmatmul.mubr.f32.gmra.mrb[0].mxu0 %v749
        %v934 = vpop.f32.mrb[0].mxu0
        %v935 = vadd.f32 0.0, %v934
        %v936 = vpop.f32.mrb[0].mxu0
        %937 = vmatprep.mubr.f32.mxu0 0.0
        %938 = vmatmul.mubr.f32.gmra.mrb[0].mxu0 %v752
        %v939 = vpop.f32.mrb[0].mxu0
        %v940 = vadd.f32 0.0, %v939
        %v941 = vpop.f32.mrb[0].mxu0
        %942 = vmatprep.mubr.f32.mxu0 0.0
        %943 = vmatmul.mubr.f32.gmra.mrb[0].mxu0 %v755
        %v944 = vpop.f32.mrb[0].mxu0
        %v945 = vadd.f32 0.0, %v944
        %v946 = vpop.f32.mrb[0].mxu0
        %947 = vmatprep.mubr.f32.mxu0 0.0
        %948 = vmatmul.mubr.f32.gmra.mrb[0].mxu0 %v758
        %v949 = vpop.f32.mrb[0].mxu0
        %v950 = vadd.f32 0.0, %v949
        %v951 = vpop.f32.mrb[0].mxu0
        %952 = vmatprep.mubr.f32.mxu0 0.0
        %953 = vmatmul.mubr.f32.gmra.mrb[0].mxu0 %v761
        %v954 = vpop.f32.mrb[0].mxu0
        %v955 = vadd.f32 0.0, %v954
        %v956 = vpop.f32.mrb[0].mxu0
        %957 = vmatprep.mubr.f32.mxu0 0.0
        %958 = vmatmul.mubr.f32.gmra.mrb[0].mxu0 %v764
        %v959 = vpop.f32.mrb[0].mxu0
        %v960 = vadd.f32 0.0, %v959
        %v961 = vpop.f32.mrb[0].mxu0
        %962 = vmatprep.mubr.f32.mxu0 0.0
        %963 = vmatmul.mubr.f32.gmra.mrb[0].mxu0 %v767
        %v964 = vpop.f32.mrb[0].mxu0
        %v965 = vadd.f32 0.0, %v964
        %v966 = vpop.f32.mrb[0].mxu0
        %967 = vmatprep.mubr.f32.mxu0 0.0
        %968 = vmatmul.mubr.f32.gmra.mrb[0].mxu0 %v770
        %v969 = vpop.f32.mrb[0].mxu0
        %v970 = vadd.f32 0.0, %v969
        %v971 = vpop.f32.mrb[0].mxu0
        %972 = vmatprep.mubr.f32.mxu0 0.0
        %973 = vmatmul.mubr.f32.gmra.mrb[0].mxu0 %v773
        %v974 = vpop.f32.mrb[0].mxu0
        %v975 = vadd.f32 0.0, %v974
        %v976 = vpop.f32.mrb[0].mxu0
        %977 = vmatprep.mubr.f32.mxu0 0.0
        %978 = vmatmul.mubr.f32.gmra.mrb[0].mxu0 %v776
        %v979 = vpop.f32.mrb[0].mxu0
        %v980 = vadd.f32 0.0, %v979
        %v981 = vpop.f32.mrb[0].mxu0
        %982 = vmatprep.mubr.f32.mxu0 0.0
        %983 = vmatmul.mubr.f32.gmra.mrb[0].mxu0 %v779
        %v984 = vpop.f32.mrb[0].mxu0
        %v985 = vadd.f32 0.0, %v984
        %v986 = vpop.f32.mrb[0].mxu0
        %987 = vmatprep.mubr.f32.mxu0 0.0
        %988 = vmatmul.mubr.f32.gmra.mrb[0].mxu0 %v782
        %v989 = vpop.f32.mrb[0].mxu0
        %v990 = vadd.f32 0.0, %v989
        %v991 = vpop.f32.mrb[0].mxu0
        %992 = vmatprep.mubr.f32.mxu0 0.0
        %993 = vmatmul.mubr.f32.gmra.mrb[0].mxu0 %v785
        %v994 = vpop.f32.mrb[0].mxu0
        %v995 = vadd.f32 0.0, %v994
        %v996 = vpop.f32.mrb[0].mxu0
        %997 = vmatprep.mubr.f32.mxu0 0.0
        %998 = vmatmul.mubr.f32.gmra.mrb[0].mxu0 %v788
        %v999 = vpop.f32.mrb[0].mxu0
        %v1000 = vadd.f32 0.0, %v999
        %v1001 = vpop.f32.mrb[0].mxu0
        %1002 = vmatprep.mubr.f32.mxu0 0.0
        %1003 = vmatmul.mubr.f32.gmra.mrb[0].mxu0 %v791
        %v1004 = vpop.f32.mrb[0].mxu0
        %v1005 = vadd.f32 0.0, %v1004
        %v1006 = vpop.f32.mrb[0].mxu0
        %1007 = vmatprep.mubr.f32.mxu0 0.0
        %1008 = vmatmul.mubr.f32.gmra.mrb[0].mxu0 %v794
        %v1009 = vpop.f32.mrb[0].mxu0
        %v1010 = vadd.f32 0.0, %v1009
        %v1011 = vpop.f32.mrb[0].mxu0
        %1012 = vmatprep.mubr.f32.mxu0 0.0
        %1013 = vmatmul.mubr.f32.gmra.mrb[0].mxu0 %v797
        %v1014 = vpop.f32.mrb[0].mxu0
        %v1015 = vadd.f32 0.0, %v1014
        %v1016 = vpop.f32.mrb[0].mxu0
        %1017 = vmatprep.mubr.f32.mxu0 0.0
        %1018 = vmatmul.mubr.f32.gmra.mrb[0].mxu0 %v800
        %v1019 = vpop.f32.mrb[0].mxu0
        %v1020 = vadd.f32 0.0, %v1019
        %v1021 = vpop.f32.mrb[0].mxu0
        %1022 = vmatprep.mubr.f32.mxu0 0.0
        %1023 = vmatmul.mubr.f32.gmra.mrb[0].mxu0 %v803
        %v1024 = vpop.f32.mrb[0].mxu0
        %v1025 = vadd.f32 0.0, %v1024
        %v1026 = vpop.f32.mrb[0].mxu0
        %1027 = vmatprep.mubr.f32.mxu0 0.0
        %1028 = vmatmul.mubr.f32.gmra.mrb[0].mxu0 %v806
        %v1029 = vpop.f32.mrb[0].mxu0
        %v1030 = vadd.f32 0.0, %v1029
        %v1031 = vpop.f32.mrb[0].mxu0
        %1032 = vdwg.mxu0
        %1065 = vrot.lane.b32.xlu0 %v875, 127
        %v1066 = vpop.permute.xlu0 %1065
        %1067 = vrot.lane.b32.xlu0 %v880, 127
        %v1068 = vpop.permute.xlu0 %1067
        %1069 = vrot.lane.b32.xlu0 %v885, 127
        %v1070 = vpop.permute.xlu0 %1069
        %1071 = vrot.lane.b32.xlu0 %v890, 127
        %v1072 = vpop.permute.xlu0 %1071
        %1073 = vrot.lane.b32.xlu0 %v895, 127
        %v1074 = vpop.permute.xlu0 %1073
        %1075 = vrot.lane.b32.xlu0 %v900, 127
        %v1076 = vpop.permute.xlu0 %1075
        %1077 = vrot.lane.b32.xlu0 %v905, 127
        %v1078 = vpop.permute.xlu0 %1077
        %1079 = vrot.lane.b32.xlu0 %v910, 127
        %v1080 = vpop.permute.xlu0 %1079
        %1081 = vrot.lane.b32.xlu0 %v915, 127
        %v1082 = vpop.permute.xlu0 %1081
        %1083 = vrot.lane.b32.xlu0 %v920, 127
        %v1084 = vpop.permute.xlu0 %1083
        %1085 = vrot.lane.b32.xlu0 %v925, 127
        %v1086 = vpop.permute.xlu0 %1085
        %1087 = vrot.lane.b32.xlu0 %v930, 127
        %v1088 = vpop.permute.xlu0 %1087
        %1089 = vrot.lane.b32.xlu0 %v935, 127
        %v1090 = vpop.permute.xlu0 %1089
        %1091 = vrot.lane.b32.xlu0 %v940, 127
        %v1092 = vpop.permute.xlu0 %1091
        %1093 = vrot.lane.b32.xlu0 %v945, 127
        %v1094 = vpop.permute.xlu0 %1093
        %1095 = vrot.lane.b32.xlu0 %v950, 127
        %v1096 = vpop.permute.xlu0 %1095
        %1097 = vrot.lane.b32.xlu0 %v955, 127
        %v1098 = vpop.permute.xlu0 %1097
        %1099 = vrot.lane.b32.xlu0 %v960, 127
        %v1100 = vpop.permute.xlu0 %1099
        %1101 = vrot.lane.b32.xlu0 %v965, 127
        %v1102 = vpop.permute.xlu0 %1101
        %1103 = vrot.lane.b32.xlu0 %v970, 127
        %v1104 = vpop.permute.xlu0 %1103
        %1105 = vrot.lane.b32.xlu0 %v975, 127
        %v1106 = vpop.permute.xlu0 %1105
        %1107 = vrot.lane.b32.xlu0 %v980, 127
        %v1108 = vpop.permute.xlu0 %1107
        %1109 = vrot.lane.b32.xlu0 %v985, 127
        %v1110 = vpop.permute.xlu0 %1109
        %1111 = vrot.lane.b32.xlu0 %v990, 127
        %v1112 = vpop.permute.xlu0 %1111
        %1113 = vrot.lane.b32.xlu0 %v995, 127
        %v1114 = vpop.permute.xlu0 %1113
        %1115 = vrot.lane.b32.xlu0 %v1000, 127
        %v1116 = vpop.permute.xlu0 %1115
        %1117 = vrot.lane.b32.xlu0 %v1005, 127
        %v1118 = vpop.permute.xlu0 %1117
        %1119 = vrot.lane.b32.xlu0 %v1010, 127
        %v1120 = vpop.permute.xlu0 %1119
        %1121 = vrot.lane.b32.xlu0 %v1015, 127
        %v1122 = vpop.permute.xlu0 %1121
        %1123 = vrot.lane.b32.xlu0 %v1020, 127
        %v1124 = vpop.permute.xlu0 %1123
        %1125 = vrot.lane.b32.xlu0 %v1025, 127
        %v1126 = vpop.permute.xlu0 %1125
        %1127 = vrot.lane.b32.xlu0 %v1030, 127
        %v1128 = vpop.permute.xlu0 %1127
        %v1161 = vadd.f32 %v875, %v1066
        %v1162 = vadd.f32 %v880, %v1068
        %v1163 = vadd.f32 %v885, %v1070
        %v1164 = vadd.f32 %v890, %v1072
        %v1165 = vadd.f32 %v895, %v1074
        %v1166 = vadd.f32 %v900, %v1076
        %v1167 = vadd.f32 %v905, %v1078
        %v1168 = vadd.f32 %v910, %v1080
        %v1169 = vadd.f32 %v915, %v1082
        %v1170 = vadd.f32 %v920, %v1084
        %v1171 = vadd.f32 %v925, %v1086
        %v1172 = vadd.f32 %v930, %v1088
        %v1173 = vadd.f32 %v935, %v1090
        %v1174 = vadd.f32 %v940, %v1092
        %v1175 = vadd.f32 %v945, %v1094
        %v1176 = vadd.f32 %v950, %v1096
        %v1177 = vadd.f32 %v955, %v1098
        %v1178 = vadd.f32 %v960, %v1100
        %v1179 = vadd.f32 %v965, %v1102
        %v1180 = vadd.f32 %v970, %v1104
        %v1181 = vadd.f32 %v975, %v1106
        %v1182 = vadd.f32 %v980, %v1108
        %v1183 = vadd.f32 %v985, %v1110
        %v1184 = vadd.f32 %v990, %v1112
        %v1185 = vadd.f32 %v995, %v1114
        %v1186 = vadd.f32 %v1000, %v1116
        %v1187 = vadd.f32 %v1005, %v1118
        %v1188 = vadd.f32 %v1010, %v1120
        %v1189 = vadd.f32 %v1015, %v1122
        %v1190 = vadd.f32 %v1020, %v1124
        %v1191 = vadd.f32 %v1025, %v1126
        %v1192 = vadd.f32 %v1030, %v1128
        %v1193 = vsub.f32 0.0, %v1161
        %v1194 = vsub.f32 0.0, %v1162
        %v1195 = vsub.f32 0.0, %v1163
        %v1196 = vsub.f32 0.0, %v1164
        %v1197 = vsub.f32 0.0, %v1165
        %v1198 = vsub.f32 0.0, %v1166
        %v1199 = vsub.f32 0.0, %v1167
        %v1200 = vsub.f32 0.0, %v1168
        %v1201 = vsub.f32 0.0, %v1169
        %v1202 = vsub.f32 0.0, %v1170
        %v1203 = vsub.f32 0.0, %v1171
        %v1204 = vsub.f32 0.0, %v1172
        %v1205 = vsub.f32 0.0, %v1173
        %v1206 = vsub.f32 0.0, %v1174
        %v1207 = vsub.f32 0.0, %v1175
        %v1208 = vsub.f32 0.0, %v1176
        %v1209 = vsub.f32 0.0, %v1177
        %v1210 = vsub.f32 0.0, %v1178
        %v1211 = vsub.f32 0.0, %v1179
        %v1212 = vsub.f32 0.0, %v1180
        %v1213 = vsub.f32 0.0, %v1181
        %v1214 = vsub.f32 0.0, %v1182
        %v1215 = vsub.f32 0.0, %v1183
        %v1216 = vsub.f32 0.0, %v1184
        %v1217 = vsub.f32 0.0, %v1185
        %v1218 = vsub.f32 0.0, %v1186
        %v1219 = vsub.f32 0.0, %v1187
        %v1220 = vsub.f32 0.0, %v1188
        %v1221 = vsub.f32 0.0, %v1189
        %v1222 = vsub.f32 0.0, %v1190
        %v1223 = vsub.f32 0.0, %v1191
        %v1224 = vsub.f32 0.0, %v1192
        %v1225 = vmul.f32 %v1193, 1.442695
        %v1226 = vpow.pop %v1225
        %v1227 = vmul.f32 %v1194, 1.442695
        %v1228 = vpow.pop %v1227
        %v1229 = vmul.f32 %v1195, 1.442695
        %v1230 = vpow.pop %v1229
        %v1231 = vmul.f32 %v1196, 1.442695
        %v1232 = vpow.pop %v1231
        %v1233 = vmul.f32 %v1197, 1.442695
        %v1234 = vpow.pop %v1233
        %v1235 = vmul.f32 %v1198, 1.442695
        %v1236 = vpow.pop %v1235
        %v1237 = vmul.f32 %v1199, 1.442695
        %v1238 = vpow.pop %v1237
        %v1239 = vmul.f32 %v1200, 1.442695
        %v1240 = vpow.pop %v1239
        %v1241 = vmul.f32 %v1201, 1.442695
        %v1242 = vpow.pop %v1241
        %v1243 = vmul.f32 %v1202, 1.442695
        %v1244 = vpow.pop %v1243
        %v1245 = vmul.f32 %v1203, 1.442695
        %v1246 = vpow.pop %v1245
        %v1247 = vmul.f32 %v1204, 1.442695
        %v1248 = vpow.pop %v1247
        %v1249 = vmul.f32 %v1205, 1.442695
        %v1250 = vpow.pop %v1249
        %v1251 = vmul.f32 %v1206, 1.442695
        %v1252 = vpow.pop %v1251
        %v1253 = vmul.f32 %v1207, 1.442695
        %v1254 = vpow.pop %v1253
        %v1255 = vmul.f32 %v1208, 1.442695
        %v1256 = vpow.pop %v1255
        %v1257 = vmul.f32 %v1209, 1.442695
        %v1258 = vpow.pop %v1257
        %v1259 = vmul.f32 %v1210, 1.442695
        %v1260 = vpow.pop %v1259
        %v1261 = vmul.f32 %v1211, 1.442695
        %v1262 = vpow.pop %v1261
        %v1263 = vmul.f32 %v1212, 1.442695
        %v1264 = vpow.pop %v1263
        %v1265 = vmul.f32 %v1213, 1.442695
        %v1266 = vpow.pop %v1265
        %v1267 = vmul.f32 %v1214, 1.442695
        %v1268 = vpow.pop %v1267
        %v1269 = vmul.f32 %v1215, 1.442695
        %v1270 = vpow.pop %v1269
        %v1271 = vmul.f32 %v1216, 1.442695
        %v1272 = vpow.pop %v1271
        %v1273 = vmul.f32 %v1217, 1.442695
        %v1274 = vpow.pop %v1273
        %v1275 = vmul.f32 %v1218, 1.442695
        %v1276 = vpow.pop %v1275
        %v1277 = vmul.f32 %v1219, 1.442695
        %v1278 = vpow.pop %v1277
        %v1279 = vmul.f32 %v1220, 1.442695
        %v1280 = vpow.pop %v1279
        %v1281 = vmul.f32 %v1221, 1.442695
        %v1282 = vpow.pop %v1281
        %v1283 = vmul.f32 %v1222, 1.442695
        %v1284 = vpow.pop %v1283
        %v1285 = vmul.f32 %v1223, 1.442695
        %v1286 = vpow.pop %v1285
        %v1287 = vmul.f32 %v1224, 1.442695
        %v1288 = vpow.pop %v1287
        %v1289 = vadd.f32 %v1226, 1.0
        %v1290 = vadd.f32 %v1228, 1.0
        %v1291 = vadd.f32 %v1230, 1.0
        %v1292 = vadd.f32 %v1232, 1.0
        %v1293 = vadd.f32 %v1234, 1.0
        %v1294 = vadd.f32 %v1236, 1.0
        %v1295 = vadd.f32 %v1238, 1.0
        %v1296 = vadd.f32 %v1240, 1.0
        %v1297 = vadd.f32 %v1242, 1.0
        %v1298 = vadd.f32 %v1244, 1.0
        %v1299 = vadd.f32 %v1246, 1.0
        %v1300 = vadd.f32 %v1248, 1.0
        %v1301 = vadd.f32 %v1250, 1.0
        %v1302 = vadd.f32 %v1252, 1.0
        %v1303 = vadd.f32 %v1254, 1.0
        %v1304 = vadd.f32 %v1256, 1.0
        %v1305 = vadd.f32 %v1258, 1.0
        %v1306 = vadd.f32 %v1260, 1.0
        %v1307 = vadd.f32 %v1262, 1.0
        %v1308 = vadd.f32 %v1264, 1.0
        %v1309 = vadd.f32 %v1266, 1.0
        %v1310 = vadd.f32 %v1268, 1.0
        %v1311 = vadd.f32 %v1270, 1.0
        %v1312 = vadd.f32 %v1272, 1.0
        %v1313 = vadd.f32 %v1274, 1.0
        %v1314 = vadd.f32 %v1276, 1.0
        %v1315 = vadd.f32 %v1278, 1.0
        %v1316 = vadd.f32 %v1280, 1.0
        %v1317 = vadd.f32 %v1282, 1.0
        %v1318 = vadd.f32 %v1284, 1.0
        %v1319 = vadd.f32 %v1286, 1.0
        %v1320 = vadd.f32 %v1288, 1.0
        %v1321 = vrcp.pop %v1289
        %v1322 = vmul.f32 1.0, %v1321
        %v1323 = vrcp.pop %v1290
        %v1324 = vmul.f32 1.0, %v1323
        %v1325 = vrcp.pop %v1291
        %v1326 = vmul.f32 1.0, %v1325
        %v1327 = vrcp.pop %v1292
        %v1328 = vmul.f32 1.0, %v1327
        %v1329 = vrcp.pop %v1293
        %v1330 = vmul.f32 1.0, %v1329
        %v1331 = vrcp.pop %v1294
        %v1332 = vmul.f32 1.0, %v1331
        %v1333 = vrcp.pop %v1295
        %v1334 = vmul.f32 1.0, %v1333
        %v1335 = vrcp.pop %v1296
        %v1336 = vmul.f32 1.0, %v1335
        %v1337 = vrcp.pop %v1297
        %v1338 = vmul.f32 1.0, %v1337
        %v1339 = vrcp.pop %v1298
        %v1340 = vmul.f32 1.0, %v1339
        %v1341 = vrcp.pop %v1299
        %v1342 = vmul.f32 1.0, %v1341
        %v1343 = vrcp.pop %v1300
        %v1344 = vmul.f32 1.0, %v1343
        %v1345 = vrcp.pop %v1301
        %v1346 = vmul.f32 1.0, %v1345
        %v1347 = vrcp.pop %v1302
        %v1348 = vmul.f32 1.0, %v1347
        %v1349 = vrcp.pop %v1303
        %v1350 = vmul.f32 1.0, %v1349
        %v1351 = vrcp.pop %v1304
        %v1352 = vmul.f32 1.0, %v1351
        %v1353 = vrcp.pop %v1305
        %v1354 = vmul.f32 1.0, %v1353
        %v1355 = vrcp.pop %v1306
        %v1356 = vmul.f32 1.0, %v1355
        %v1357 = vrcp.pop %v1307
        %v1358 = vmul.f32 1.0, %v1357
        %v1359 = vrcp.pop %v1308
        %v1360 = vmul.f32 1.0, %v1359
        %v1361 = vrcp.pop %v1309
        %v1362 = vmul.f32 1.0, %v1361
        %v1363 = vrcp.pop %v1310
        %v1364 = vmul.f32 1.0, %v1363
        %v1365 = vrcp.pop %v1311
        %v1366 = vmul.f32 1.0, %v1365
        %v1367 = vrcp.pop %v1312
        %v1368 = vmul.f32 1.0, %v1367
        %v1369 = vrcp.pop %v1313
        %v1370 = vmul.f32 1.0, %v1369
        %v1371 = vrcp.pop %v1314
        %v1372 = vmul.f32 1.0, %v1371
        %v1373 = vrcp.pop %v1315
        %v1374 = vmul.f32 1.0, %v1373
        %v1375 = vrcp.pop %v1316
        %v1376 = vmul.f32 1.0, %v1375
        %v1377 = vrcp.pop %v1317
        %v1378 = vmul.f32 1.0, %v1377
        %v1379 = vrcp.pop %v1318
        %v1380 = vmul.f32 1.0, %v1379
        %v1381 = vrcp.pop %v1319
        %v1382 = vmul.f32 1.0, %v1381
        %v1383 = vrcp.pop %v1320
        %v1384 = vmul.f32 1.0, %v1383
        %1386 = vset.pattern.permute.xlu0 0
        %1387 = vperm.xlu0 %1386, %v1322
        %v1388 = vpop.permute.xlu0 %1387
        %1391 = vset.pattern.permute.xlu0 0
        %1392 = vperm.xlu0 %1391, %v1324
        %v1393 = vpop.permute.xlu0 %1392
        %1396 = vset.pattern.permute.xlu0 0
        %1397 = vperm.xlu0 %1396, %v1326
        %v1398 = vpop.permute.xlu0 %1397
        %1401 = vset.pattern.permute.xlu0 0
        %1402 = vperm.xlu0 %1401, %v1328
        %v1403 = vpop.permute.xlu0 %1402
        %1406 = vset.pattern.permute.xlu0 0
        %1407 = vperm.xlu0 %1406, %v1330
        %v1408 = vpop.permute.xlu0 %1407
        %1411 = vset.pattern.permute.xlu0 0
        %1412 = vperm.xlu0 %1411, %v1332
        %v1413 = vpop.permute.xlu0 %1412
        %1416 = vset.pattern.permute.xlu0 0
        %1417 = vperm.xlu0 %1416, %v1334
        %v1418 = vpop.permute.xlu0 %1417
        %1421 = vset.pattern.permute.xlu0 0
        %1422 = vperm.xlu0 %1421, %v1336
        %v1423 = vpop.permute.xlu0 %1422
        %1426 = vset.pattern.permute.xlu0 0
        %1427 = vperm.xlu0 %1426, %v1338
        %v1428 = vpop.permute.xlu0 %1427
        %1431 = vset.pattern.permute.xlu0 0
        %1432 = vperm.xlu0 %1431, %v1340
        %v1433 = vpop.permute.xlu0 %1432
        %1436 = vset.pattern.permute.xlu0 0
        %1437 = vperm.xlu0 %1436, %v1342
        %v1438 = vpop.permute.xlu0 %1437
        %1441 = vset.pattern.permute.xlu0 0
        %1442 = vperm.xlu0 %1441, %v1344
        %v1443 = vpop.permute.xlu0 %1442
        %1446 = vset.pattern.permute.xlu0 0
        %1447 = vperm.xlu0 %1446, %v1346
        %v1448 = vpop.permute.xlu0 %1447
        %1451 = vset.pattern.permute.xlu0 0
        %1452 = vperm.xlu0 %1451, %v1348
        %v1453 = vpop.permute.xlu0 %1452
        %1456 = vset.pattern.permute.xlu0 0
        %1457 = vperm.xlu0 %1456, %v1350
        %v1458 = vpop.permute.xlu0 %1457
        %1461 = vset.pattern.permute.xlu0 0
        %1462 = vperm.xlu0 %1461, %v1352
        %v1463 = vpop.permute.xlu0 %1462
        %1466 = vset.pattern.permute.xlu0 0
        %1467 = vperm.xlu0 %1466, %v1354
        %v1468 = vpop.permute.xlu0 %1467
        %1471 = vset.pattern.permute.xlu0 0
        %1472 = vperm.xlu0 %1471, %v1356
        %v1473 = vpop.permute.xlu0 %1472
        %1476 = vset.pattern.permute.xlu0 0
        %1477 = vperm.xlu0 %1476, %v1358
        %v1478 = vpop.permute.xlu0 %1477
        %1481 = vset.pattern.permute.xlu0 0
        %1482 = vperm.xlu0 %1481, %v1360
        %v1483 = vpop.permute.xlu0 %1482
        %1486 = vset.pattern.permute.xlu0 0
        %1487 = vperm.xlu0 %1486, %v1362
        %v1488 = vpop.permute.xlu0 %1487
        %1491 = vset.pattern.permute.xlu0 0
        %1492 = vperm.xlu0 %1491, %v1364
        %v1493 = vpop.permute.xlu0 %1492
        %1496 = vset.pattern.permute.xlu0 0
        %1497 = vperm.xlu0 %1496, %v1366
        %v1498 = vpop.permute.xlu0 %1497
        %1501 = vset.pattern.permute.xlu0 0
        %1502 = vperm.xlu0 %1501, %v1368
        %v1503 = vpop.permute.xlu0 %1502
        %1506 = vset.pattern.permute.xlu0 0
        %1507 = vperm.xlu0 %1506, %v1370
        %v1508 = vpop.permute.xlu0 %1507
        %1511 = vset.pattern.permute.xlu0 0
        %1512 = vperm.xlu0 %1511, %v1372
        %v1513 = vpop.permute.xlu0 %1512
        %1516 = vset.pattern.permute.xlu0 0
        %1517 = vperm.xlu0 %1516, %v1374
        %v1518 = vpop.permute.xlu0 %1517
        %1521 = vset.pattern.permute.xlu0 0
        %1522 = vperm.xlu0 %1521, %v1376
        %v1523 = vpop.permute.xlu0 %1522
        %1526 = vset.pattern.permute.xlu0 0
        %1527 = vperm.xlu0 %1526, %v1378
        %v1528 = vpop.permute.xlu0 %1527
        %1531 = vset.pattern.permute.xlu0 0
        %1532 = vperm.xlu0 %1531, %v1380
        %v1533 = vpop.permute.xlu0 %1532
        %1536 = vset.pattern.permute.xlu0 0
        %1537 = vperm.xlu0 %1536, %v1382
        %v1538 = vpop.permute.xlu0 %1537
        %1541 = vset.pattern.permute.xlu0 0
        %1542 = vperm.xlu0 %1541, %v1384
        %v1543 = vpop.permute.xlu0 %1542
        %v1545 = vmul.f32 %v212, %v1388
        %v1546 = vmul.f32 %v213, %v1388
        %v1547 = vmul.f32 %v214, %v1393
        %v1548 = vmul.f32 %v215, %v1393
        %v1549 = vmul.f32 %v216, %v1398
        %v1550 = vmul.f32 %v217, %v1398
        %v1551 = vmul.f32 %v218, %v1403
        %v1552 = vmul.f32 %v219, %v1403
        %v1553 = vmul.f32 %v220, %v1408
        %v1554 = vmul.f32 %v221, %v1408
        %v1555 = vmul.f32 %v222, %v1413
        %v1556 = vmul.f32 %v223, %v1413
        %v1557 = vmul.f32 %v224, %v1418
        %v1558 = vmul.f32 %v225, %v1418
        %v1559 = vmul.f32 %v226, %v1423
        %v1560 = vmul.f32 %v227, %v1423
        %v1561 = vmul.f32 %v228, %v1428
        %v1562 = vmul.f32 %v229, %v1428
        %v1563 = vmul.f32 %v230, %v1433
        %v1564 = vmul.f32 %v231, %v1433
        %v1565 = vmul.f32 %v232, %v1438
        %v1566 = vmul.f32 %v233, %v1438
        %v1567 = vmul.f32 %v234, %v1443
        %v1568 = vmul.f32 %v235, %v1443
        %v1569 = vmul.f32 %v236, %v1448
        %v1570 = vmul.f32 %v237, %v1448
        %v1571 = vmul.f32 %v238, %v1453
        %v1572 = vmul.f32 %v239, %v1453
        %v1573 = vmul.f32 %v240, %v1458
        %v1574 = vmul.f32 %v241, %v1458
        %v1575 = vmul.f32 %v242, %v1463
        %v1576 = vmul.f32 %v243, %v1463
        %v1577 = vmul.f32 %v244, %v1468
        %v1578 = vmul.f32 %v245, %v1468
        %v1579 = vmul.f32 %v246, %v1473
        %v1580 = vmul.f32 %v247, %v1473
        %v1581 = vmul.f32 %v248, %v1478
        %v1582 = vmul.f32 %v249, %v1478
        %v1583 = vmul.f32 %v250, %v1483
        %v1584 = vmul.f32 %v251, %v1483
        %v1585 = vmul.f32 %v252, %v1488
        %v1586 = vmul.f32 %v253, %v1488
        %v1587 = vmul.f32 %v254, %v1493
        %v1588 = vmul.f32 %v255, %v1493
        %v1589 = vmul.f32 %v256, %v1498
        %v1590 = vmul.f32 %v257, %v1498
        %v1591 = vmul.f32 %v258, %v1503
        %v1592 = vmul.f32 %v259, %v1503
        %v1593 = vmul.f32 %v260, %v1508
        %v1594 = vmul.f32 %v261, %v1508
        %v1595 = vmul.f32 %v262, %v1513
        %v1596 = vmul.f32 %v263, %v1513
        %v1597 = vmul.f32 %v264, %v1518
        %v1598 = vmul.f32 %v265, %v1518
        %v1599 = vmul.f32 %v266, %v1523
        %v1600 = vmul.f32 %v267, %v1523
        %v1601 = vmul.f32 %v268, %v1528
        %v1602 = vmul.f32 %v269, %v1528
        %v1603 = vmul.f32 %v270, %v1533
        %v1604 = vmul.f32 %v271, %v1533
        %v1605 = vmul.f32 %v272, %v1538
        %v1606 = vmul.f32 %v273, %v1538
        %v1607 = vmul.f32 %v274, %v1543
        %v1608 = vmul.f32 %v275, %v1543
        %v1609 = vmax.f32 %v1545, %v1549
        %v1610 = vmax.f32 %v1547, %v1551
        %v1611 = vmax.f32 %v1609, %v1553
        %v1612 = vmax.f32 %v1610, %v1555
        %v1613 = vmax.f32 %v1611, %v1557
        %v1614 = vmax.f32 %v1612, %v1559
        %v1615 = vmax.f32 %v1613, %v1561
        %v1616 = vmax.f32 %v1614, %v1563
        %v1617 = vmax.f32 %v1615, %v1565
        %v1618 = vmax.f32 %v1616, %v1567
        %v1619 = vmax.f32 %v1617, %v1569
        %v1620 = vmax.f32 %v1618, %v1571
        %v1621 = vmax.f32 %v1619, %v1573
        %v1622 = vmax.f32 %v1620, %v1575
        %v1623 = vmax.f32 %v1621, %v1577
        %v1624 = vmax.f32 %v1622, %v1579
        %v1625 = vmax.f32 %v1623, %v1581
        %v1626 = vmax.f32 %v1624, %v1583
        %v1627 = vmax.f32 %v1625, %v1585
        %v1628 = vmax.f32 %v1626, %v1587
        %v1629 = vmax.f32 %v1627, %v1589
        %v1630 = vmax.f32 %v1628, %v1591
        %v1631 = vmax.f32 %v1629, %v1593
        %v1632 = vmax.f32 %v1630, %v1595
        %v1633 = vmax.f32 %v1631, %v1597
        %v1634 = vmax.f32 %v1632, %v1599
        %v1635 = vmax.f32 %v1633, %v1601
        %v1636 = vmax.f32 %v1634, %v1603
        %v1637 = vmax.f32 %v1635, %v1605
        %v1638 = vmax.f32 %v1636, %v1607
        %v1639 = vmax.f32 %v1637, %v1638
        %v1640 = vrot.slane %v1639, 4
        %v1641 = vmax.f32 %v1639, %v1640
        %v1642 = vrot.slane %v1641, 2
        %v1643 = vmax.f32 %v1641, %v1642
        %v1644 = vrot.slane %v1643, 1
        %v1645 = vmax.f32 %v1643, %v1644
        %v1646 = vmax.f32 %v1546, %v1550
        %v1647 = vmax.f32 %v1548, %v1552
        %v1648 = vmax.f32 %v1646, %v1554
        %v1649 = vmax.f32 %v1647, %v1556
        %v1650 = vmax.f32 %v1648, %v1558
        %v1651 = vmax.f32 %v1649, %v1560
        %v1652 = vmax.f32 %v1650, %v1562
        %v1653 = vmax.f32 %v1651, %v1564
        %v1654 = vmax.f32 %v1652, %v1566
        %v1655 = vmax.f32 %v1653, %v1568
        %v1656 = vmax.f32 %v1654, %v1570
        %v1657 = vmax.f32 %v1655, %v1572
        %v1658 = vmax.f32 %v1656, %v1574
        %v1659 = vmax.f32 %v1657, %v1576
        %v1660 = vmax.f32 %v1658, %v1578
        %v1661 = vmax.f32 %v1659, %v1580
        %v1662 = vmax.f32 %v1660, %v1582
        %v1663 = vmax.f32 %v1661, %v1584
        %v1664 = vmax.f32 %v1662, %v1586
        %v1665 = vmax.f32 %v1663, %v1588
        %v1666 = vmax.f32 %v1664, %v1590
        %v1667 = vmax.f32 %v1665, %v1592
        %v1668 = vmax.f32 %v1666, %v1594
        %v1669 = vmax.f32 %v1667, %v1596
        %v1670 = vmax.f32 %v1668, %v1598
        %v1671 = vmax.f32 %v1669, %v1600
        %v1672 = vmax.f32 %v1670, %v1602
        %v1673 = vmax.f32 %v1671, %v1604
        %v1674 = vmax.f32 %v1672, %v1606
        %v1675 = vmax.f32 %v1673, %v1608
        %v1676 = vmax.f32 %v1674, %v1675
        %v1677 = vrot.slane %v1676, 4
        %v1678 = vmax.f32 %v1676, %v1677
        %v1679 = vrot.slane %v1678, 2
        %v1680 = vmax.f32 %v1678, %v1679
        %v1681 = vrot.slane %v1680, 1
        %v1682 = vmax.f32 %v1680, %v1681
        %v1683 = vadd.f32 %v1545, %v1547
        %v1684 = vadd.f32 %v1683, %v1549
        %v1685 = vadd.f32 %v1684, %v1551
        %v1686 = vadd.f32 %v1685, %v1553
        %v1687 = vadd.f32 %v1686, %v1555
        %v1688 = vadd.f32 %v1687, %v1557
        %v1689 = vadd.f32 %v1688, %v1559
        %v1690 = vadd.f32 %v1689, %v1561
        %v1691 = vadd.f32 %v1690, %v1563
        %v1692 = vadd.f32 %v1691, %v1565
        %v1693 = vadd.f32 %v1692, %v1567
        %v1694 = vadd.f32 %v1693, %v1569
        %v1695 = vadd.f32 %v1694, %v1571
        %v1696 = vadd.f32 %v1695, %v1573
        %v1697 = vadd.f32 %v1696, %v1575
        %v1698 = vadd.f32 %v1697, %v1577
        %v1699 = vadd.f32 %v1698, %v1579
        %v1700 = vadd.f32 %v1699, %v1581
        %v1701 = vadd.f32 %v1700, %v1583
        %v1702 = vadd.f32 %v1701, %v1585
        %v1703 = vadd.f32 %v1702, %v1587
        %v1704 = vadd.f32 %v1703, %v1589
        %v1705 = vadd.f32 %v1704, %v1591
        %v1706 = vadd.f32 %v1705, %v1593
        %v1707 = vadd.f32 %v1706, %v1595
        %v1708 = vadd.f32 %v1707, %v1597
        %v1709 = vadd.f32 %v1708, %v1599
        %v1710 = vadd.f32 %v1709, %v1601
        %v1711 = vadd.f32 %v1710, %v1603
        %v1712 = vadd.f32 %v1711, %v1605
        %v1713 = vadd.f32 %v1712, %v1607
        %v1714 = vrot.slane %v1713, 4
        %v1715 = vadd.f32 %v1713, %v1714
        %v1716 = vrot.slane %v1715, 2
        %v1717 = vadd.f32 %v1715, %v1716
        %v1718 = vrot.slane %v1717, 1
        %v1719 = vadd.f32 %v1717, %v1718
        %v1720 = vadd.f32 %v1546, %v1548
        %v1721 = vadd.f32 %v1720, %v1550
        %v1722 = vadd.f32 %v1721, %v1552
        %v1723 = vadd.f32 %v1722, %v1554
        %v1724 = vadd.f32 %v1723, %v1556
        %v1725 = vadd.f32 %v1724, %v1558
        %v1726 = vadd.f32 %v1725, %v1560
        %v1727 = vadd.f32 %v1726, %v1562
        %v1728 = vadd.f32 %v1727, %v1564
        %v1729 = vadd.f32 %v1728, %v1566
        %v1730 = vadd.f32 %v1729, %v1568
        %v1731 = vadd.f32 %v1730, %v1570
        %v1732 = vadd.f32 %v1731, %v1572
        %v1733 = vadd.f32 %v1732, %v1574
        %v1734 = vadd.f32 %v1733, %v1576
        %v1735 = vadd.f32 %v1734, %v1578
        %v1736 = vadd.f32 %v1735, %v1580
        %v1737 = vadd.f32 %v1736, %v1582
        %v1738 = vadd.f32 %v1737, %v1584
        %v1739 = vadd.f32 %v1738, %v1586
        %v1740 = vadd.f32 %v1739, %v1588
        %v1741 = vadd.f32 %v1740, %v1590
        %v1742 = vadd.f32 %v1741, %v1592
        %v1743 = vadd.f32 %v1742, %v1594
        %v1744 = vadd.f32 %v1743, %v1596
        %v1745 = vadd.f32 %v1744, %v1598
        %v1746 = vadd.f32 %v1745, %v1600
        %v1747 = vadd.f32 %v1746, %v1602
        %v1748 = vadd.f32 %v1747, %v1604
        %v1749 = vadd.f32 %v1748, %v1606
        %v1750 = vadd.f32 %v1749, %v1608
        %v1751 = vrot.slane %v1750, 4
        %v1752 = vadd.f32 %v1750, %v1751
        %v1753 = vrot.slane %v1752, 2
        %v1754 = vadd.f32 %v1752, %v1753
        %v1755 = vrot.slane %v1754, 1
        %v1756 = vadd.f32 %v1754, %v1755
        %v1757 = vmul.f32 %v1719, 0.00390625
        %v1758 = vmul.f32 %v1756, 0.00390625
        %vm1759 = vcmask 179200
        %1760 = vst.msk [vmem:[#allocation2] sm:$0xff] %vm1759, 0.0
        %1761 = vst.msk [vmem:[#allocation2 + $0x8] sm:$0xff] %vm1759, 0.0
        %vm1762 = vcmask 177152
        %1763 = vst.msk [vmem:[#allocation2 + $0x10] sm:$0x3f] %vm1762, 0.0
        %1764 = vst.msk [vmem:[#allocation2 + $0x18] sm:$0xff] %vm1759, 0.0
        %1765 = vst.msk [vmem:[#allocation2 + $0x20] sm:$0xff] %vm1759, 0.0
        %1766 = vst.msk [vmem:[#allocation2 + $0x28] sm:$0x3f] %vm1762, 0.0
        %1768 = vrot.lane.b32.xlu0 %v1645, 3
        %v1769 = vpop.permute.xlu0 %1768
        %vm1771 = vcmask 147480
        %1772 = vst.msk [vmem:[#allocation2 + $0x3] sm:$0x1] %vm1771, %v1769
        %1774 = vrot.lane.b32.xlu0 %v1757, 3
        %v1775 = vpop.permute.xlu0 %1774
        %s1777 = scalar_lea.vmem [#allocation2], 24
        %1778 = vst.msk [vmem:[%s1777 + $0x3] sm:$0x1] %vm1771, %v1775
        %1779 = vrot.lane.b32.xlu0 %v1645, 115
        %v1780 = vpop.permute.xlu0 %1779
        %1782 = vst.msk [vmem:[#allocation2 + $0x4] sm:$0x1] %vm1771, %v1780
        %1783 = vrot.lane.b32.xlu0 %v1757, 115
        %v1784 = vpop.permute.xlu0 %1783
        %1786 = vst.msk [vmem:[%s1777 + $0x4] sm:$0x1] %vm1771, %v1784
        %1787 = vrot.lane.b32.xlu0 %v1645, 99
        %v1788 = vpop.permute.xlu0 %1787
        %1790 = vst.msk [vmem:[#allocation2 + $0x5] sm:$0x1] %vm1771, %v1788
        %1791 = vrot.lane.b32.xlu0 %v1757, 99
        %v1792 = vpop.permute.xlu0 %1791
        %1794 = vst.msk [vmem:[%s1777 + $0x5] sm:$0x1] %vm1771, %v1792
        %1795 = vrot.lane.b32.xlu0 %v1645, 83
        %v1796 = vpop.permute.xlu0 %1795
        %1798 = vst.msk [vmem:[#allocation2 + $0x6] sm:$0x1] %vm1771, %v1796
        %1799 = vrot.lane.b32.xlu0 %v1757, 83
        %v1800 = vpop.permute.xlu0 %1799
        %1802 = vst.msk [vmem:[%s1777 + $0x6] sm:$0x1] %vm1771, %v1800
        %1803 = vrot.lane.b32.xlu0 %v1645, 67
        %v1804 = vpop.permute.xlu0 %1803
        %1806 = vst.msk [vmem:[#allocation2 + $0x7] sm:$0x1] %vm1771, %v1804
        %1807 = vrot.lane.b32.xlu0 %v1757, 67
        %v1808 = vpop.permute.xlu0 %1807
        %1810 = vst.msk [vmem:[%s1777 + $0x7] sm:$0x1] %vm1771, %v1808
        %1811 = vrot.lane.b32.xlu0 %v1645, 51
        %v1812 = vpop.permute.xlu0 %1811
        %1814 = vst.msk [vmem:[#allocation2 + $0x8] sm:$0x1] %vm1771, %v1812
        %1815 = vrot.lane.b32.xlu0 %v1757, 51
        %v1816 = vpop.permute.xlu0 %1815
        %1818 = vst.msk [vmem:[%s1777 + $0x8] sm:$0x1] %vm1771, %v1816
        %1819 = vrot.lane.b32.xlu0 %v1645, 35
        %v1820 = vpop.permute.xlu0 %1819
        %1822 = vst.msk [vmem:[#allocation2 + $0x9] sm:$0x1] %vm1771, %v1820
        %1823 = vrot.lane.b32.xlu0 %v1757, 35
        %v1824 = vpop.permute.xlu0 %1823
        %1826 = vst.msk [vmem:[%s1777 + $0x9] sm:$0x1] %vm1771, %v1824
        %1827 = vrot.lane.b32.xlu0 %v1645, 19
        %v1828 = vpop.permute.xlu0 %1827
        %1830 = vst.msk [vmem:[#allocation2 + $0xa] sm:$0x1] %vm1771, %v1828
        %1831 = vrot.lane.b32.xlu0 %v1757, 19
        %v1832 = vpop.permute.xlu0 %1831
        %1834 = vst.msk [vmem:[%s1777 + $0xa] sm:$0x1] %vm1771, %v1832
        %1836 = vrot.lane.b32.xlu0 %v1682, 3
        %v1837 = vpop.permute.xlu0 %1836
        %1839 = vst.msk [vmem:[#allocation2 + $0xb] sm:$0x1] %vm1771, %v1837
        %1841 = vrot.lane.b32.xlu0 %v1758, 3
        %v1842 = vpop.permute.xlu0 %1841
        %1844 = vst.msk [vmem:[%s1777 + $0xb] sm:$0x1] %vm1771, %v1842
        %1845 = vrot.lane.b32.xlu0 %v1682, 115
        %v1846 = vpop.permute.xlu0 %1845
        %1848 = vst.msk [vmem:[#allocation2 + $0xc] sm:$0x1] %vm1771, %v1846
        %1849 = vrot.lane.b32.xlu0 %v1758, 115
        %v1850 = vpop.permute.xlu0 %1849
        %1852 = vst.msk [vmem:[%s1777 + $0xc] sm:$0x1] %vm1771, %v1850
        %1853 = vrot.lane.b32.xlu0 %v1682, 99
        %v1854 = vpop.permute.xlu0 %1853
        %1856 = vst.msk [vmem:[#allocation2 + $0xd] sm:$0x1] %vm1771, %v1854
        %1857 = vrot.lane.b32.xlu0 %v1758, 99
        %v1858 = vpop.permute.xlu0 %1857
        %1860 = vst.msk [vmem:[%s1777 + $0xd] sm:$0x1] %vm1771, %v1858
        %1861 = vrot.lane.b32.xlu0 %v1682, 83
        %v1862 = vpop.permute.xlu0 %1861
        %1864 = vst.msk [vmem:[#allocation2 + $0xe] sm:$0x1] %vm1771, %v1862
        %1865 = vrot.lane.b32.xlu0 %v1758, 83
        %v1866 = vpop.permute.xlu0 %1865
        %1868 = vst.msk [vmem:[%s1777 + $0xe] sm:$0x1] %vm1771, %v1866
        %1869 = vrot.lane.b32.xlu0 %v1682, 67
        %v1870 = vpop.permute.xlu0 %1869
        %1872 = vst.msk [vmem:[#allocation2 + $0xf] sm:$0x1] %vm1771, %v1870
        %1873 = vrot.lane.b32.xlu0 %v1758, 67
        %v1874 = vpop.permute.xlu0 %1873
        %1876 = vst.msk [vmem:[%s1777 + $0xf] sm:$0x1] %vm1771, %v1874
        %1877 = vrot.lane.b32.xlu0 %v1682, 51
        %v1878 = vpop.permute.xlu0 %1877
        %1880 = vst.msk [vmem:[#allocation2 + $0x10] sm:$0x1] %vm1771, %v1878
        %1881 = vrot.lane.b32.xlu0 %v1758, 51
        %v1882 = vpop.permute.xlu0 %1881
        %1884 = vst.msk [vmem:[%s1777 + $0x10] sm:$0x1] %vm1771, %v1882
        %1885 = vrot.lane.b32.xlu0 %v1682, 35
        %v1886 = vpop.permute.xlu0 %1885
        %1888 = vst.msk [vmem:[#allocation2 + $0x11] sm:$0x1] %vm1771, %v1886
        %1889 = vrot.lane.b32.xlu0 %v1758, 35
        %v1890 = vpop.permute.xlu0 %1889
        %1892 = vst.msk [vmem:[%s1777 + $0x11] sm:$0x1] %vm1771, %v1890
        %1893 = vrot.lane.b32.xlu0 %v1682, 19
        %v1894 = vpop.permute.xlu0 %1893
        %1896 = vst.msk [vmem:[#allocation2 + $0x12] sm:$0x1] %vm1771, %v1894
        %1897 = vrot.lane.b32.xlu0 %v1758, 19
        %v1898 = vpop.permute.xlu0 %1897
        %1900 = vst.msk [vmem:[%s1777 + $0x12] sm:$0x1] %vm1771, %v1898
        %v1901 = vld [vmem:[#allocation2] sm:$0xff]
        %v1902 = vld [vmem:[#allocation2 + $0x8] sm:$0xff]
        %v1903 = vld [vmem:[#allocation2 + $0x10] sm:$0x3f]
        %v1904 = vld [vmem:[%s1777] sm:$0xff]
        %v1905 = vld [vmem:[%s1777 + $0x8] sm:$0xff]
        %v1906 = vld [vmem:[%s1777 + $0x10] sm:$0x3f]
        %s1907 = sld [smem:[#allocation5]]
        %v1908 = vstv %s1907
        %v1909 = vmul.f32 %v1908, %v1901
        %v1910 = vmul.f32 %v1908, %v1902
        %v1911 = vadd.f32 %v1909, 0.0
        %v1912 = vadd.f32 %v1910, 0.0
        %s1913 = sld [smem:[#allocation5 + $0x31]]
        %v1914 = vstv %s1913
        %v1915 = vmul.f32 %v1914, %v1904
        %v1916 = vmul.f32 %v1914, %v1905
        %v1917 = vadd.f32 %v1911, %v1915
        %v1918 = vadd.f32 %v1912, %v1916
        %s1919 = sld [smem:[#allocation5 + $0x7]]
        %v1920 = vstv %s1919
        %v1921 = vmul.f32 %v1920, %v1901
        %v1922 = vmul.f32 %v1920, %v1902
        %v1923 = vmul.f32 %v1920, %v1903
        %vm1927 = vcmask 1046528
        %v1928 = vrot.slane %v1921, 1
        %v1929 = vrot.slane %v1922, 1
        %v1930 = vsel %vm1927, %v1928, %v1929
        %v1931 = vrot.slane %v1923, 1
        %v1932 = vsel %vm1927, %v1929, %v1931
        %v1935 = vadd.f32 %v1917, %v1930
        %v1936 = vadd.f32 %v1918, %v1932
        %s1937 = sld [smem:[#allocation5 + $0x38]]
        %v1938 = vstv %s1937
        %v1939 = vmul.f32 %v1938, %v1904
        %v1940 = vmul.f32 %v1938, %v1905
        %v1941 = vmul.f32 %v1938, %v1906
        %v1945 = vrot.slane %v1939, 1
        %v1946 = vrot.slane %v1940, 1
        %v1947 = vsel %vm1927, %v1945, %v1946
        %v1948 = vrot.slane %v1941, 1
        %v1949 = vsel %vm1927, %v1946, %v1948
        %v1952 = vadd.f32 %v1935, %v1947
        %v1953 = vadd.f32 %v1936, %v1949
        %s1954 = sld [smem:[#allocation5 + $0xe]]
        %v1955 = vstv %s1954
        %v1956 = vmul.f32 %v1955, %v1901
        %v1957 = vmul.f32 %v1955, %v1902
        %v1958 = vmul.f32 %v1955, %v1903
        %vm1962 = vcmask 1045504
        %v1963 = vrot.slane %v1956, 2
        %v1964 = vrot.slane %v1957, 2
        %v1965 = vsel %vm1962, %v1963, %v1964
        %v1966 = vrot.slane %v1958, 2
        %v1967 = vsel %vm1962, %v1964, %v1966
        %v1970 = vadd.f32 %v1952, %v1965
        %v1971 = vadd.f32 %v1953, %v1967
        %s1972 = sld [smem:[#allocation5 + $0x3f]]
        %v1973 = vstv %s1972
        %v1974 = vmul.f32 %v1973, %v1904
        %v1975 = vmul.f32 %v1973, %v1905
        %v1976 = vmul.f32 %v1973, %v1906
        %v1980 = vrot.slane %v1974, 2
        %v1981 = vrot.slane %v1975, 2
        %v1982 = vsel %vm1962, %v1980, %v1981
        %v1983 = vrot.slane %v1976, 2
        %v1984 = vsel %vm1962, %v1981, %v1983
        %v1987 = vadd.f32 %v1970, %v1982
        %v1988 = vadd.f32 %v1971, %v1984
        %s1989 = sld [smem:[#allocation5 + $0x15]]
        %v1990 = vstv %s1989
        %v1991 = vmul.f32 %v1990, %v1901
        %v1992 = vmul.f32 %v1990, %v1902
        %v1993 = vmul.f32 %v1990, %v1903
        %vm1997 = vcmask 1044480
        %v1998 = vrot.slane %v1991, 3
        %v1999 = vrot.slane %v1992, 3
        %v2000 = vsel %vm1997, %v1998, %v1999
        %v2001 = vrot.slane %v1993, 3
        %v2002 = vsel %vm1997, %v1999, %v2001
        %v2005 = vadd.f32 %v1987, %v2000
        %v2006 = vadd.f32 %v1988, %v2002
        %s2007 = sld [smem:[#allocation5 + $0x46]]
        %v2008 = vstv %s2007
        %v2009 = vmul.f32 %v2008, %v1904
        %v2010 = vmul.f32 %v2008, %v1905
        %v2011 = vmul.f32 %v2008, %v1906
        %v2015 = vrot.slane %v2009, 3
        %v2016 = vrot.slane %v2010, 3
        %v2017 = vsel %vm1997, %v2015, %v2016
        %v2018 = vrot.slane %v2011, 3
        %v2019 = vsel %vm1997, %v2016, %v2018
        %v2022 = vadd.f32 %v2005, %v2017
        %v2023 = vadd.f32 %v2006, %v2019
        %s2024 = sld [smem:[#allocation5 + $0x1c]]
        %v2025 = vstv %s2024
        %v2026 = vmul.f32 %v2025, %v1901
        %v2027 = vmul.f32 %v2025, %v1902
        %v2028 = vmul.f32 %v2025, %v1903
        %vm2032 = vcmask 1043456
        %v2033 = vrot.slane %v2026, 4
        %v2034 = vrot.slane %v2027, 4
        %v2035 = vsel %vm2032, %v2033, %v2034
        %v2036 = vrot.slane %v2028, 4
        %v2037 = vsel %vm2032, %v2034, %v2036
        %v2040 = vadd.f32 %v2022, %v2035
        %v2041 = vadd.f32 %v2023, %v2037
        %s2042 = sld [smem:[#allocation5 + $0x4d]]
        %v2043 = vstv %s2042
        %v2044 = vmul.f32 %v2043, %v1904
        %v2045 = vmul.f32 %v2043, %v1905
        %v2046 = vmul.f32 %v2043, %v1906
        %v2050 = vrot.slane %v2044, 4
        %v2051 = vrot.slane %v2045, 4
        %v2052 = vsel %vm2032, %v2050, %v2051
        %v2053 = vrot.slane %v2046, 4
        %v2054 = vsel %vm2032, %v2051, %v2053
        %v2057 = vadd.f32 %v2040, %v2052
        %v2058 = vadd.f32 %v2041, %v2054
        %s2059 = sld [smem:[#allocation5 + $0x23]]
        %v2060 = vstv %s2059
        %v2061 = vmul.f32 %v2060, %v1901
        %v2062 = vmul.f32 %v2060, %v1902
        %v2063 = vmul.f32 %v2060, %v1903
        %vm2067 = vcmask 1042432
        %v2068 = vrot.slane %v2061, 5
        %v2069 = vrot.slane %v2062, 5
        %v2070 = vsel %vm2067, %v2068, %v2069
        %v2071 = vrot.slane %v2063, 5
        %v2072 = vsel %vm2067, %v2069, %v2071
        %v2075 = vadd.f32 %v2057, %v2070
        %v2076 = vadd.f32 %v2058, %v2072
        %s2077 = sld [smem:[#allocation5 + $0x54]]
        %v2078 = vstv %s2077
        %v2079 = vmul.f32 %v2078, %v1904
        %v2080 = vmul.f32 %v2078, %v1905
        %v2081 = vmul.f32 %v2078, %v1906
        %v2085 = vrot.slane %v2079, 5
        %v2086 = vrot.slane %v2080, 5
        %v2087 = vsel %vm2067, %v2085, %v2086
        %v2088 = vrot.slane %v2081, 5
        %v2089 = vsel %vm2067, %v2086, %v2088
        %v2092 = vadd.f32 %v2075, %v2087
        %v2093 = vadd.f32 %v2076, %v2089
        %s2094 = sld [smem:[#allocation5 + $0x2a]]
        %v2095 = vstv %s2094
        %v2096 = vmul.f32 %v2095, %v1901
        %v2097 = vmul.f32 %v2095, %v1902
        %v2098 = vmul.f32 %v2095, %v1903
        %vm2102 = vcmask 1041408
        %v2103 = vrot.slane %v2096, 6
        %v2104 = vrot.slane %v2097, 6
        %v2105 = vsel %vm2102, %v2103, %v2104
        %v2106 = vrot.slane %v2098, 6
        %v2107 = vsel %vm2102, %v2104, %v2106
        %v2110 = vadd.f32 %v2092, %v2105
        %v2111 = vadd.f32 %v2093, %v2107
        %s2112 = sld [smem:[#allocation5 + $0x5b]]
        %v2113 = vstv %s2112
        %v2114 = vmul.f32 %v2113, %v1904
        %v2115 = vmul.f32 %v2113, %v1905
        %v2116 = vmul.f32 %v2113, %v1906
        %v2120 = vrot.slane %v2114, 6
        %v2121 = vrot.slane %v2115, 6
        %v2122 = vsel %vm2102, %v2120, %v2121
        %v2123 = vrot.slane %v2116, 6
        %v2124 = vsel %vm2102, %v2121, %v2123
        %v2127 = vadd.f32 %v2110, %v2122
        %v2128 = vadd.f32 %v2111, %v2124
        %s2129 = sld [smem:[#allocation5 + $0x1]]
        %v2130 = vstv %s2129
        %v2131 = vmul.f32 %v2130, %v1901
        %v2132 = vmul.f32 %v2130, %v1902
        %2135 = vrot.lane.b32.xlu0 %v2131, 127
        %v2136 = vpop.permute.xlu0 %2135
        %2137 = vrot.lane.b32.xlu0 %v2132, 127
        %v2138 = vpop.permute.xlu0 %2137
        %v2141 = vadd.f32 %v2127, %v2136
        %v2142 = vadd.f32 %v2128, %v2138
        %s2143 = sld [smem:[#allocation5 + $0x32]]
        %v2144 = vstv %s2143
        %v2145 = vmul.f32 %v2144, %v1904
        %v2146 = vmul.f32 %v2144, %v1905
        %2149 = vrot.lane.b32.xlu0 %v2145, 127
        %v2150 = vpop.permute.xlu0 %2149
        %2151 = vrot.lane.b32.xlu0 %v2146, 127
        %v2152 = vpop.permute.xlu0 %2151
        %v2155 = vadd.f32 %v2141, %v2150
        %v2156 = vadd.f32 %v2142, %v2152
        %s2157 = sld [smem:[#allocation5 + $0x8]]
        %v2158 = vstv %s2157
        %v2159 = vmul.f32 %v2158, %v1901
        %v2160 = vmul.f32 %v2158, %v1902
        %v2161 = vmul.f32 %v2158, %v1903
        %v2165 = vrot.slane %v2159, 1
        %v2166 = vrot.slane %v2160, 1
        %v2167 = vsel %vm1927, %v2165, %v2166
        %v2168 = vrot.slane %v2161, 1
        %v2169 = vsel %vm1927, %v2166, %v2168
        %2170 = vrot.lane.b32.xlu0 %v2167, 127
        %v2171 = vpop.permute.xlu0 %2170
        %2172 = vrot.lane.b32.xlu0 %v2169, 127
        %v2173 = vpop.permute.xlu0 %2172
        %v2176 = vadd.f32 %v2155, %v2171
        %v2177 = vadd.f32 %v2156, %v2173
        %s2178 = sld [smem:[#allocation5 + $0x39]]
        %v2179 = vstv %s2178
        %v2180 = vmul.f32 %v2179, %v1904
        %v2181 = vmul.f32 %v2179, %v1905
        %v2182 = vmul.f32 %v2179, %v1906
        %v2186 = vrot.slane %v2180, 1
        %v2187 = vrot.slane %v2181, 1
        %v2188 = vsel %vm1927, %v2186, %v2187
        %v2189 = vrot.slane %v2182, 1
        %v2190 = vsel %vm1927, %v2187, %v2189
        %2191 = vrot.lane.b32.xlu0 %v2188, 127
        %v2192 = vpop.permute.xlu0 %2191
        %2193 = vrot.lane.b32.xlu0 %v2190, 127
        %v2194 = vpop.permute.xlu0 %2193
        %v2197 = vadd.f32 %v2176, %v2192
        %v2198 = vadd.f32 %v2177, %v2194
        %s2199 = sld [smem:[#allocation5 + $0xf]]
        %v2200 = vstv %s2199
        %v2201 = vmul.f32 %v2200, %v1901
        %v2202 = vmul.f32 %v2200, %v1902
        %v2203 = vmul.f32 %v2200, %v1903
        %v2207 = vrot.slane %v2201, 2
        %v2208 = vrot.slane %v2202, 2
        %v2209 = vsel %vm1962, %v2207, %v2208
        %v2210 = vrot.slane %v2203, 2
        %v2211 = vsel %vm1962, %v2208, %v2210
        %2212 = vrot.lane.b32.xlu0 %v2209, 127
        %v2213 = vpop.permute.xlu0 %2212
        %2214 = vrot.lane.b32.xlu0 %v2211, 127
        %v2215 = vpop.permute.xlu0 %2214
        %v2218 = vadd.f32 %v2197, %v2213
        %v2219 = vadd.f32 %v2198, %v2215
        %s2220 = sld [smem:[#allocation5 + $0x40]]
        %v2221 = vstv %s2220
        %v2222 = vmul.f32 %v2221, %v1904
        %v2223 = vmul.f32 %v2221, %v1905
        %v2224 = vmul.f32 %v2221, %v1906
        %v2228 = vrot.slane %v2222, 2
        %v2229 = vrot.slane %v2223, 2
        %v2230 = vsel %vm1962, %v2228, %v2229
        %v2231 = vrot.slane %v2224, 2
        %v2232 = vsel %vm1962, %v2229, %v2231
        %2233 = vrot.lane.b32.xlu0 %v2230, 127
        %v2234 = vpop.permute.xlu0 %2233
        %2235 = vrot.lane.b32.xlu0 %v2232, 127
        %v2236 = vpop.permute.xlu0 %2235
        %v2239 = vadd.f32 %v2218, %v2234
        %v2240 = vadd.f32 %v2219, %v2236
        %s2241 = sld [smem:[#allocation5 + $0x16]]
        %v2242 = vstv %s2241
        %v2243 = vmul.f32 %v2242, %v1901
        %v2244 = vmul.f32 %v2242, %v1902
        %v2245 = vmul.f32 %v2242, %v1903
        %v2249 = vrot.slane %v2243, 3
        %v2250 = vrot.slane %v2244, 3
        %v2251 = vsel %vm1997, %v2249, %v2250
        %v2252 = vrot.slane %v2245, 3
        %v2253 = vsel %vm1997, %v2250, %v2252
        %2254 = vrot.lane.b32.xlu0 %v2251, 127
        %v2255 = vpop.permute.xlu0 %2254
        %2256 = vrot.lane.b32.xlu0 %v2253, 127
        %v2257 = vpop.permute.xlu0 %2256
        %v2260 = vadd.f32 %v2239, %v2255
        %v2261 = vadd.f32 %v2240, %v2257
        %s2262 = sld [smem:[#allocation5 + $0x47]]
        %v2263 = vstv %s2262
        %v2264 = vmul.f32 %v2263, %v1904
        %v2265 = vmul.f32 %v2263, %v1905
        %v2266 = vmul.f32 %v2263, %v1906
        %v2270 = vrot.slane %v2264, 3
        %v2271 = vrot.slane %v2265, 3
        %v2272 = vsel %vm1997, %v2270, %v2271
        %v2273 = vrot.slane %v2266, 3
        %v2274 = vsel %vm1997, %v2271, %v2273
        %2275 = vrot.lane.b32.xlu0 %v2272, 127
        %v2276 = vpop.permute.xlu0 %2275
        %2277 = vrot.lane.b32.xlu0 %v2274, 127
        %v2278 = vpop.permute.xlu0 %2277
        %v2281 = vadd.f32 %v2260, %v2276
        %v2282 = vadd.f32 %v2261, %v2278
        %s2283 = sld [smem:[#allocation5 + $0x1d]]
        %v2284 = vstv %s2283
        %v2285 = vmul.f32 %v2284, %v1901
        %v2286 = vmul.f32 %v2284, %v1902
        %v2287 = vmul.f32 %v2284, %v1903
        %v2291 = vrot.slane %v2285, 4
        %v2292 = vrot.slane %v2286, 4
        %v2293 = vsel %vm2032, %v2291, %v2292
        %v2294 = vrot.slane %v2287, 4
        %v2295 = vsel %vm2032, %v2292, %v2294
        %2296 = vrot.lane.b32.xlu0 %v2293, 127
        %v2297 = vpop.permute.xlu0 %2296
        %2298 = vrot.lane.b32.xlu0 %v2295, 127
        %v2299 = vpop.permute.xlu0 %2298
        %v2302 = vadd.f32 %v2281, %v2297
        %v2303 = vadd.f32 %v2282, %v2299
        %s2304 = sld [smem:[#allocation5 + $0x4e]]
        %v2305 = vstv %s2304
        %v2306 = vmul.f32 %v2305, %v1904
        %v2307 = vmul.f32 %v2305, %v1905
        %v2308 = vmul.f32 %v2305, %v1906
        %v2312 = vrot.slane %v2306, 4
        %v2313 = vrot.slane %v2307, 4
        %v2314 = vsel %vm2032, %v2312, %v2313
        %v2315 = vrot.slane %v2308, 4
        %v2316 = vsel %vm2032, %v2313, %v2315
        %2317 = vrot.lane.b32.xlu0 %v2314, 127
        %v2318 = vpop.permute.xlu0 %2317
        %2319 = vrot.lane.b32.xlu0 %v2316, 127
        %v2320 = vpop.permute.xlu0 %2319
        %v2323 = vadd.f32 %v2302, %v2318
        %v2324 = vadd.f32 %v2303, %v2320
        %s2325 = sld [smem:[#allocation5 + $0x24]]
        %v2326 = vstv %s2325
        %v2327 = vmul.f32 %v2326, %v1901
        %v2328 = vmul.f32 %v2326, %v1902
        %v2329 = vmul.f32 %v2326, %v1903
        %v2333 = vrot.slane %v2327, 5
        %v2334 = vrot.slane %v2328, 5
        %v2335 = vsel %vm2067, %v2333, %v2334
        %v2336 = vrot.slane %v2329, 5
        %v2337 = vsel %vm2067, %v2334, %v2336
        %2338 = vrot.lane.b32.xlu0 %v2335, 127
        %v2339 = vpop.permute.xlu0 %2338
        %2340 = vrot.lane.b32.xlu0 %v2337, 127
        %v2341 = vpop.permute.xlu0 %2340
        %v2344 = vadd.f32 %v2323, %v2339
        %v2345 = vadd.f32 %v2324, %v2341
        %s2346 = sld [smem:[#allocation5 + $0x55]]
        %v2347 = vstv %s2346
        %v2348 = vmul.f32 %v2347, %v1904
        %v2349 = vmul.f32 %v2347, %v1905
        %v2350 = vmul.f32 %v2347, %v1906
        %v2354 = vrot.slane %v2348, 5
        %v2355 = vrot.slane %v2349, 5
        %v2356 = vsel %vm2067, %v2354, %v2355
        %v2357 = vrot.slane %v2350, 5
        %v2358 = vsel %vm2067, %v2355, %v2357
        %2359 = vrot.lane.b32.xlu0 %v2356, 127
        %v2360 = vpop.permute.xlu0 %2359
        %2361 = vrot.lane.b32.xlu0 %v2358, 127
        %v2362 = vpop.permute.xlu0 %2361
        %v2365 = vadd.f32 %v2344, %v2360
        %v2366 = vadd.f32 %v2345, %v2362
        %s2367 = sld [smem:[#allocation5 + $0x2b]]
        %v2368 = vstv %s2367
        %v2369 = vmul.f32 %v2368, %v1901
        %v2370 = vmul.f32 %v2368, %v1902
        %v2371 = vmul.f32 %v2368, %v1903
        %v2375 = vrot.slane %v2369, 6
        %v2376 = vrot.slane %v2370, 6
        %v2377 = vsel %vm2102, %v2375, %v2376
        %v2378 = vrot.slane %v2371, 6
        %v2379 = vsel %vm2102, %v2376, %v2378
        %2380 = vrot.lane.b32.xlu0 %v2377, 127
        %v2381 = vpop.permute.xlu0 %2380
        %2382 = vrot.lane.b32.xlu0 %v2379, 127
        %v2383 = vpop.permute.xlu0 %2382
        %v2386 = vadd.f32 %v2365, %v2381
        %v2387 = vadd.f32 %v2366, %v2383
        %s2388 = sld [smem:[#allocation5 + $0x5c]]
        %v2389 = vstv %s2388
        %v2390 = vmul.f32 %v2389, %v1904
        %v2391 = vmul.f32 %v2389, %v1905
        %v2392 = vmul.f32 %v2389, %v1906
        %v2396 = vrot.slane %v2390, 6
        %v2397 = vrot.slane %v2391, 6
        %v2398 = vsel %vm2102, %v2396, %v2397
        %v2399 = vrot.slane %v2392, 6
        %v2400 = vsel %vm2102, %v2397, %v2399
        %2401 = vrot.lane.b32.xlu0 %v2398, 127
        %v2402 = vpop.permute.xlu0 %2401
        %2403 = vrot.lane.b32.xlu0 %v2400, 127
        %v2404 = vpop.permute.xlu0 %2403
        %v2407 = vadd.f32 %v2386, %v2402
        %v2408 = vadd.f32 %v2387, %v2404
        %s2409 = sld [smem:[#allocation5 + $0x2]]
        %v2410 = vstv %s2409
        %v2411 = vmul.f32 %v2410, %v1901
        %v2412 = vmul.f32 %v2410, %v1902
        %2415 = vrot.lane.b32.xlu0 %v2411, 126
        %v2416 = vpop.permute.xlu0 %2415
        %2417 = vrot.lane.b32.xlu0 %v2412, 126
        %v2418 = vpop.permute.xlu0 %2417
        %v2421 = vadd.f32 %v2407, %v2416
        %v2422 = vadd.f32 %v2408, %v2418
        %s2423 = sld [smem:[#allocation5 + $0x33]]
        %v2424 = vstv %s2423
        %v2425 = vmul.f32 %v2424, %v1904
        %v2426 = vmul.f32 %v2424, %v1905
        %2429 = vrot.lane.b32.xlu0 %v2425, 126
        %v2430 = vpop.permute.xlu0 %2429
        %2431 = vrot.lane.b32.xlu0 %v2426, 126
        %v2432 = vpop.permute.xlu0 %2431
        %v2435 = vadd.f32 %v2421, %v2430
        %v2436 = vadd.f32 %v2422, %v2432
        %s2437 = sld [smem:[#allocation5 + $0x9]]
        %v2438 = vstv %s2437
        %v2439 = vmul.f32 %v2438, %v1901
        %v2440 = vmul.f32 %v2438, %v1902
        %v2441 = vmul.f32 %v2438, %v1903
        %v2445 = vrot.slane %v2439, 1
        %v2446 = vrot.slane %v2440, 1
        %v2447 = vsel %vm1927, %v2445, %v2446
        %v2448 = vrot.slane %v2441, 1
        %v2449 = vsel %vm1927, %v2446, %v2448
        %2450 = vrot.lane.b32.xlu0 %v2447, 126
        %v2451 = vpop.permute.xlu0 %2450
        %2452 = vrot.lane.b32.xlu0 %v2449, 126
        %v2453 = vpop.permute.xlu0 %2452
        %v2456 = vadd.f32 %v2435, %v2451
        %v2457 = vadd.f32 %v2436, %v2453
        %s2458 = sld [smem:[#allocation5 + $0x3a]]
        %v2459 = vstv %s2458
        %v2460 = vmul.f32 %v2459, %v1904
        %v2461 = vmul.f32 %v2459, %v1905
        %v2462 = vmul.f32 %v2459, %v1906
        %v2466 = vrot.slane %v2460, 1
        %v2467 = vrot.slane %v2461, 1
        %v2468 = vsel %vm1927, %v2466, %v2467
        %v2469 = vrot.slane %v2462, 1
        %v2470 = vsel %vm1927, %v2467, %v2469
        %2471 = vrot.lane.b32.xlu0 %v2468, 126
        %v2472 = vpop.permute.xlu0 %2471
        %2473 = vrot.lane.b32.xlu0 %v2470, 126
        %v2474 = vpop.permute.xlu0 %2473
        %v2477 = vadd.f32 %v2456, %v2472
        %v2478 = vadd.f32 %v2457, %v2474
        %s2479 = sld [smem:[#allocation5 + $0x10]]
        %v2480 = vstv %s2479
        %v2481 = vmul.f32 %v2480, %v1901
        %v2482 = vmul.f32 %v2480, %v1902
        %v2483 = vmul.f32 %v2480, %v1903
        %v2487 = vrot.slane %v2481, 2
        %v2488 = vrot.slane %v2482, 2
        %v2489 = vsel %vm1962, %v2487, %v2488
        %v2490 = vrot.slane %v2483, 2
        %v2491 = vsel %vm1962, %v2488, %v2490
        %2492 = vrot.lane.b32.xlu0 %v2489, 126
        %v2493 = vpop.permute.xlu0 %2492
        %2494 = vrot.lane.b32.xlu0 %v2491, 126
        %v2495 = vpop.permute.xlu0 %2494
        %v2498 = vadd.f32 %v2477, %v2493
        %v2499 = vadd.f32 %v2478, %v2495
        %s2500 = sld [smem:[#allocation5 + $0x41]]
        %v2501 = vstv %s2500
        %v2502 = vmul.f32 %v2501, %v1904
        %v2503 = vmul.f32 %v2501, %v1905
        %v2504 = vmul.f32 %v2501, %v1906
        %v2508 = vrot.slane %v2502, 2
        %v2509 = vrot.slane %v2503, 2
        %v2510 = vsel %vm1962, %v2508, %v2509
        %v2511 = vrot.slane %v2504, 2
        %v2512 = vsel %vm1962, %v2509, %v2511
        %2513 = vrot.lane.b32.xlu0 %v2510, 126
        %v2514 = vpop.permute.xlu0 %2513
        %2515 = vrot.lane.b32.xlu0 %v2512, 126
        %v2516 = vpop.permute.xlu0 %2515
        %v2519 = vadd.f32 %v2498, %v2514
        %v2520 = vadd.f32 %v2499, %v2516
        %s2521 = sld [smem:[#allocation5 + $0x17]]
        %v2522 = vstv %s2521
        %v2523 = vmul.f32 %v2522, %v1901
        %v2524 = vmul.f32 %v2522, %v1902
        %v2525 = vmul.f32 %v2522, %v1903
        %v2529 = vrot.slane %v2523, 3
        %v2530 = vrot.slane %v2524, 3
        %v2531 = vsel %vm1997, %v2529, %v2530
        %v2532 = vrot.slane %v2525, 3
        %v2533 = vsel %vm1997, %v2530, %v2532
        %2534 = vrot.lane.b32.xlu0 %v2531, 126
        %v2535 = vpop.permute.xlu0 %2534
        %2536 = vrot.lane.b32.xlu0 %v2533, 126
        %v2537 = vpop.permute.xlu0 %2536
        %v2540 = vadd.f32 %v2519, %v2535
        %v2541 = vadd.f32 %v2520, %v2537
        %s2542 = sld [smem:[#allocation5 + $0x48]]
        %v2543 = vstv %s2542
        %v2544 = vmul.f32 %v2543, %v1904
        %v2545 = vmul.f32 %v2543, %v1905
        %v2546 = vmul.f32 %v2543, %v1906
        %v2550 = vrot.slane %v2544, 3
        %v2551 = vrot.slane %v2545, 3
        %v2552 = vsel %vm1997, %v2550, %v2551
        %v2553 = vrot.slane %v2546, 3
        %v2554 = vsel %vm1997, %v2551, %v2553
        %2555 = vrot.lane.b32.xlu0 %v2552, 126
        %v2556 = vpop.permute.xlu0 %2555
        %2557 = vrot.lane.b32.xlu0 %v2554, 126
        %v2558 = vpop.permute.xlu0 %2557
        %v2561 = vadd.f32 %v2540, %v2556
        %v2562 = vadd.f32 %v2541, %v2558
        %s2563 = sld [smem:[#allocation5 + $0x1e]]
        %v2564 = vstv %s2563
        %v2565 = vmul.f32 %v2564, %v1901
        %v2566 = vmul.f32 %v2564, %v1902
        %v2567 = vmul.f32 %v2564, %v1903
        %v2571 = vrot.slane %v2565, 4
        %v2572 = vrot.slane %v2566, 4
        %v2573 = vsel %vm2032, %v2571, %v2572
        %v2574 = vrot.slane %v2567, 4
        %v2575 = vsel %vm2032, %v2572, %v2574
        %2576 = vrot.lane.b32.xlu0 %v2573, 126
        %v2577 = vpop.permute.xlu0 %2576
        %2578 = vrot.lane.b32.xlu0 %v2575, 126
        %v2579 = vpop.permute.xlu0 %2578
        %v2582 = vadd.f32 %v2561, %v2577
        %v2583 = vadd.f32 %v2562, %v2579
        %s2584 = sld [smem:[#allocation5 + $0x4f]]
        %v2585 = vstv %s2584
        %v2586 = vmul.f32 %v2585, %v1904
        %v2587 = vmul.f32 %v2585, %v1905
        %v2588 = vmul.f32 %v2585, %v1906
        %v2592 = vrot.slane %v2586, 4
        %v2593 = vrot.slane %v2587, 4
        %v2594 = vsel %vm2032, %v2592, %v2593
        %v2595 = vrot.slane %v2588, 4
        %v2596 = vsel %vm2032, %v2593, %v2595
        %2597 = vrot.lane.b32.xlu0 %v2594, 126
        %v2598 = vpop.permute.xlu0 %2597
        %2599 = vrot.lane.b32.xlu0 %v2596, 126
        %v2600 = vpop.permute.xlu0 %2599
        %v2603 = vadd.f32 %v2582, %v2598
        %v2604 = vadd.f32 %v2583, %v2600
        %s2605 = sld [smem:[#allocation5 + $0x25]]
        %v2606 = vstv %s2605
        %v2607 = vmul.f32 %v2606, %v1901
        %v2608 = vmul.f32 %v2606, %v1902
        %v2609 = vmul.f32 %v2606, %v1903
        %v2613 = vrot.slane %v2607, 5
        %v2614 = vrot.slane %v2608, 5
        %v2615 = vsel %vm2067, %v2613, %v2614
        %v2616 = vrot.slane %v2609, 5
        %v2617 = vsel %vm2067, %v2614, %v2616
        %2618 = vrot.lane.b32.xlu0 %v2615, 126
        %v2619 = vpop.permute.xlu0 %2618
        %2620 = vrot.lane.b32.xlu0 %v2617, 126
        %v2621 = vpop.permute.xlu0 %2620
        %v2624 = vadd.f32 %v2603, %v2619
        %v2625 = vadd.f32 %v2604, %v2621
        %s2626 = sld [smem:[#allocation5 + $0x56]]
        %v2627 = vstv %s2626
        %v2628 = vmul.f32 %v2627, %v1904
        %v2629 = vmul.f32 %v2627, %v1905
        %v2630 = vmul.f32 %v2627, %v1906
        %v2634 = vrot.slane %v2628, 5
        %v2635 = vrot.slane %v2629, 5
        %v2636 = vsel %vm2067, %v2634, %v2635
        %v2637 = vrot.slane %v2630, 5
        %v2638 = vsel %vm2067, %v2635, %v2637
        %2639 = vrot.lane.b32.xlu0 %v2636, 126
        %v2640 = vpop.permute.xlu0 %2639
        %2641 = vrot.lane.b32.xlu0 %v2638, 126
        %v2642 = vpop.permute.xlu0 %2641
        %v2645 = vadd.f32 %v2624, %v2640
        %v2646 = vadd.f32 %v2625, %v2642
        %s2647 = sld [smem:[#allocation5 + $0x2c]]
        %v2648 = vstv %s2647
        %v2649 = vmul.f32 %v2648, %v1901
        %v2650 = vmul.f32 %v2648, %v1902
        %v2651 = vmul.f32 %v2648, %v1903
        %v2655 = vrot.slane %v2649, 6
        %v2656 = vrot.slane %v2650, 6
        %v2657 = vsel %vm2102, %v2655, %v2656
        %v2658 = vrot.slane %v2651, 6
        %v2659 = vsel %vm2102, %v2656, %v2658
        %2660 = vrot.lane.b32.xlu0 %v2657, 126
        %v2661 = vpop.permute.xlu0 %2660
        %2662 = vrot.lane.b32.xlu0 %v2659, 126
        %v2663 = vpop.permute.xlu0 %2662
        %v2666 = vadd.f32 %v2645, %v2661
        %v2667 = vadd.f32 %v2646, %v2663
        %s2668 = sld [smem:[#allocation5 + $0x5d]]
        %v2669 = vstv %s2668
        %v2670 = vmul.f32 %v2669, %v1904
        %v2671 = vmul.f32 %v2669, %v1905
        %v2672 = vmul.f32 %v2669, %v1906
        %v2676 = vrot.slane %v2670, 6
        %v2677 = vrot.slane %v2671, 6
        %v2678 = vsel %vm2102, %v2676, %v2677
        %v2679 = vrot.slane %v2672, 6
        %v2680 = vsel %vm2102, %v2677, %v2679
        %2681 = vrot.lane.b32.xlu0 %v2678, 126
        %v2682 = vpop.permute.xlu0 %2681
        %2683 = vrot.lane.b32.xlu0 %v2680, 126
        %v2684 = vpop.permute.xlu0 %2683
        %v2687 = vadd.f32 %v2666, %v2682
        %v2688 = vadd.f32 %v2667, %v2684
        %s2689 = sld [smem:[#allocation5 + $0x3]]
        %v2690 = vstv %s2689
        %v2691 = vmul.f32 %v2690, %v1901
        %v2692 = vmul.f32 %v2690, %v1902
        %2695 = vrot.lane.b32.xlu0 %v2691, 125
        %v2696 = vpop.permute.xlu0 %2695
        %2697 = vrot.lane.b32.xlu0 %v2692, 125
        %v2698 = vpop.permute.xlu0 %2697
        %v2701 = vadd.f32 %v2687, %v2696
        %v2702 = vadd.f32 %v2688, %v2698
        %s2703 = sld [smem:[#allocation5 + $0x34]]
        %v2704 = vstv %s2703
        %v2705 = vmul.f32 %v2704, %v1904
        %v2706 = vmul.f32 %v2704, %v1905
        %2709 = vrot.lane.b32.xlu0 %v2705, 125
        %v2710 = vpop.permute.xlu0 %2709
        %2711 = vrot.lane.b32.xlu0 %v2706, 125
        %v2712 = vpop.permute.xlu0 %2711
        %v2715 = vadd.f32 %v2701, %v2710
        %v2716 = vadd.f32 %v2702, %v2712
        %s2717 = sld [smem:[#allocation5 + $0xa]]
        %v2718 = vstv %s2717
        %v2719 = vmul.f32 %v2718, %v1901
        %v2720 = vmul.f32 %v2718, %v1902
        %v2721 = vmul.f32 %v2718, %v1903
        %v2725 = vrot.slane %v2719, 1
        %v2726 = vrot.slane %v2720, 1
        %v2727 = vsel %vm1927, %v2725, %v2726
        %v2728 = vrot.slane %v2721, 1
        %v2729 = vsel %vm1927, %v2726, %v2728
        %2730 = vrot.lane.b32.xlu0 %v2727, 125
        %v2731 = vpop.permute.xlu0 %2730
        %2732 = vrot.lane.b32.xlu0 %v2729, 125
        %v2733 = vpop.permute.xlu0 %2732
        %v2736 = vadd.f32 %v2715, %v2731
        %v2737 = vadd.f32 %v2716, %v2733
        %s2738 = sld [smem:[#allocation5 + $0x3b]]
        %v2739 = vstv %s2738
        %v2740 = vmul.f32 %v2739, %v1904
        %v2741 = vmul.f32 %v2739, %v1905
        %v2742 = vmul.f32 %v2739, %v1906
        %v2746 = vrot.slane %v2740, 1
        %v2747 = vrot.slane %v2741, 1
        %v2748 = vsel %vm1927, %v2746, %v2747
        %v2749 = vrot.slane %v2742, 1
        %v2750 = vsel %vm1927, %v2747, %v2749
        %2751 = vrot.lane.b32.xlu0 %v2748, 125
        %v2752 = vpop.permute.xlu0 %2751
        %2753 = vrot.lane.b32.xlu0 %v2750, 125
        %v2754 = vpop.permute.xlu0 %2753
        %v2757 = vadd.f32 %v2736, %v2752
        %v2758 = vadd.f32 %v2737, %v2754
        %s2759 = sld [smem:[#allocation5 + $0x11]]
        %v2760 = vstv %s2759
        %v2761 = vmul.f32 %v2760, %v1901
        %v2762 = vmul.f32 %v2760, %v1902
        %v2763 = vmul.f32 %v2760, %v1903
        %v2767 = vrot.slane %v2761, 2
        %v2768 = vrot.slane %v2762, 2
        %v2769 = vsel %vm1962, %v2767, %v2768
        %v2770 = vrot.slane %v2763, 2
        %v2771 = vsel %vm1962, %v2768, %v2770
        %2772 = vrot.lane.b32.xlu0 %v2769, 125
        %v2773 = vpop.permute.xlu0 %2772
        %2774 = vrot.lane.b32.xlu0 %v2771, 125
        %v2775 = vpop.permute.xlu0 %2774
        %v2778 = vadd.f32 %v2757, %v2773
        %v2779 = vadd.f32 %v2758, %v2775
        %s2780 = sld [smem:[#allocation5 + $0x42]]
        %v2781 = vstv %s2780
        %v2782 = vmul.f32 %v2781, %v1904
        %v2783 = vmul.f32 %v2781, %v1905
        %v2784 = vmul.f32 %v2781, %v1906
        %v2788 = vrot.slane %v2782, 2
        %v2789 = vrot.slane %v2783, 2
        %v2790 = vsel %vm1962, %v2788, %v2789
        %v2791 = vrot.slane %v2784, 2
        %v2792 = vsel %vm1962, %v2789, %v2791
        %2793 = vrot.lane.b32.xlu0 %v2790, 125
        %v2794 = vpop.permute.xlu0 %2793
        %2795 = vrot.lane.b32.xlu0 %v2792, 125
        %v2796 = vpop.permute.xlu0 %2795
        %v2799 = vadd.f32 %v2778, %v2794
        %v2800 = vadd.f32 %v2779, %v2796
        %s2801 = sld [smem:[#allocation5 + $0x18]]
        %v2802 = vstv %s2801
        %v2803 = vmul.f32 %v2802, %v1901
        %v2804 = vmul.f32 %v2802, %v1902
        %v2805 = vmul.f32 %v2802, %v1903
        %v2809 = vrot.slane %v2803, 3
        %v2810 = vrot.slane %v2804, 3
        %v2811 = vsel %vm1997, %v2809, %v2810
        %v2812 = vrot.slane %v2805, 3
        %v2813 = vsel %vm1997, %v2810, %v2812
        %2814 = vrot.lane.b32.xlu0 %v2811, 125
        %v2815 = vpop.permute.xlu0 %2814
        %2816 = vrot.lane.b32.xlu0 %v2813, 125
        %v2817 = vpop.permute.xlu0 %2816
        %v2820 = vadd.f32 %v2799, %v2815
        %v2821 = vadd.f32 %v2800, %v2817
        %s2822 = sld [smem:[#allocation5 + $0x49]]
        %v2823 = vstv %s2822
        %v2824 = vmul.f32 %v2823, %v1904
        %v2825 = vmul.f32 %v2823, %v1905
        %v2826 = vmul.f32 %v2823, %v1906
        %v2830 = vrot.slane %v2824, 3
        %v2831 = vrot.slane %v2825, 3
        %v2832 = vsel %vm1997, %v2830, %v2831
        %v2833 = vrot.slane %v2826, 3
        %v2834 = vsel %vm1997, %v2831, %v2833
        %2835 = vrot.lane.b32.xlu0 %v2832, 125
        %v2836 = vpop.permute.xlu0 %2835
        %2837 = vrot.lane.b32.xlu0 %v2834, 125
        %v2838 = vpop.permute.xlu0 %2837
        %v2841 = vadd.f32 %v2820, %v2836
        %v2842 = vadd.f32 %v2821, %v2838
        %s2843 = sld [smem:[#allocation5 + $0x1f]]
        %v2844 = vstv %s2843
        %v2845 = vmul.f32 %v2844, %v1901
        %v2846 = vmul.f32 %v2844, %v1902
        %v2847 = vmul.f32 %v2844, %v1903
        %v2851 = vrot.slane %v2845, 4
        %v2852 = vrot.slane %v2846, 4
        %v2853 = vsel %vm2032, %v2851, %v2852
        %v2854 = vrot.slane %v2847, 4
        %v2855 = vsel %vm2032, %v2852, %v2854
        %2856 = vrot.lane.b32.xlu0 %v2853, 125
        %v2857 = vpop.permute.xlu0 %2856
        %2858 = vrot.lane.b32.xlu0 %v2855, 125
        %v2859 = vpop.permute.xlu0 %2858
        %v2862 = vadd.f32 %v2841, %v2857
        %v2863 = vadd.f32 %v2842, %v2859
        %s2864 = sld [smem:[#allocation5 + $0x50]]
        %v2865 = vstv %s2864
        %v2866 = vmul.f32 %v2865, %v1904
        %v2867 = vmul.f32 %v2865, %v1905
        %v2868 = vmul.f32 %v2865, %v1906
        %v2872 = vrot.slane %v2866, 4
        %v2873 = vrot.slane %v2867, 4
        %v2874 = vsel %vm2032, %v2872, %v2873
        %v2875 = vrot.slane %v2868, 4
        %v2876 = vsel %vm2032, %v2873, %v2875
        %2877 = vrot.lane.b32.xlu0 %v2874, 125
        %v2878 = vpop.permute.xlu0 %2877
        %2879 = vrot.lane.b32.xlu0 %v2876, 125
        %v2880 = vpop.permute.xlu0 %2879
        %v2883 = vadd.f32 %v2862, %v2878
        %v2884 = vadd.f32 %v2863, %v2880
        %s2885 = sld [smem:[#allocation5 + $0x26]]
        %v2886 = vstv %s2885
        %v2887 = vmul.f32 %v2886, %v1901
        %v2888 = vmul.f32 %v2886, %v1902
        %v2889 = vmul.f32 %v2886, %v1903
        %v2893 = vrot.slane %v2887, 5
        %v2894 = vrot.slane %v2888, 5
        %v2895 = vsel %vm2067, %v2893, %v2894
        %v2896 = vrot.slane %v2889, 5
        %v2897 = vsel %vm2067, %v2894, %v2896
        %2898 = vrot.lane.b32.xlu0 %v2895, 125
        %v2899 = vpop.permute.xlu0 %2898
        %2900 = vrot.lane.b32.xlu0 %v2897, 125
        %v2901 = vpop.permute.xlu0 %2900
        %v2904 = vadd.f32 %v2883, %v2899
        %v2905 = vadd.f32 %v2884, %v2901
        %s2906 = sld [smem:[#allocation5 + $0x57]]
        %v2907 = vstv %s2906
        %v2908 = vmul.f32 %v2907, %v1904
        %v2909 = vmul.f32 %v2907, %v1905
        %v2910 = vmul.f32 %v2907, %v1906
        %v2914 = vrot.slane %v2908, 5
        %v2915 = vrot.slane %v2909, 5
        %v2916 = vsel %vm2067, %v2914, %v2915
        %v2917 = vrot.slane %v2910, 5
        %v2918 = vsel %vm2067, %v2915, %v2917
        %2919 = vrot.lane.b32.xlu0 %v2916, 125
        %v2920 = vpop.permute.xlu0 %2919
        %2921 = vrot.lane.b32.xlu0 %v2918, 125
        %v2922 = vpop.permute.xlu0 %2921
        %v2925 = vadd.f32 %v2904, %v2920
        %v2926 = vadd.f32 %v2905, %v2922
        %s2927 = sld [smem:[#allocation5 + $0x2d]]
        %v2928 = vstv %s2927
        %v2929 = vmul.f32 %v2928, %v1901
        %v2930 = vmul.f32 %v2928, %v1902
        %v2931 = vmul.f32 %v2928, %v1903
        %v2935 = vrot.slane %v2929, 6
        %v2936 = vrot.slane %v2930, 6
        %v2937 = vsel %vm2102, %v2935, %v2936
        %v2938 = vrot.slane %v2931, 6
        %v2939 = vsel %vm2102, %v2936, %v2938
        %2940 = vrot.lane.b32.xlu0 %v2937, 125
        %v2941 = vpop.permute.xlu0 %2940
        %2942 = vrot.lane.b32.xlu0 %v2939, 125
        %v2943 = vpop.permute.xlu0 %2942
        %v2946 = vadd.f32 %v2925, %v2941
        %v2947 = vadd.f32 %v2926, %v2943
        %s2948 = sld [smem:[#allocation5 + $0x5e]]
        %v2949 = vstv %s2948
        %v2950 = vmul.f32 %v2949, %v1904
        %v2951 = vmul.f32 %v2949, %v1905
        %v2952 = vmul.f32 %v2949, %v1906
        %v2956 = vrot.slane %v2950, 6
        %v2957 = vrot.slane %v2951, 6
        %v2958 = vsel %vm2102, %v2956, %v2957
        %v2959 = vrot.slane %v2952, 6
        %v2960 = vsel %vm2102, %v2957, %v2959
        %2961 = vrot.lane.b32.xlu0 %v2958, 125
        %v2962 = vpop.permute.xlu0 %2961
        %2963 = vrot.lane.b32.xlu0 %v2960, 125
        %v2964 = vpop.permute.xlu0 %2963
        %v2967 = vadd.f32 %v2946, %v2962
        %v2968 = vadd.f32 %v2947, %v2964
        %s2969 = sld [smem:[#allocation5 + $0x4]]
        %v2970 = vstv %s2969
        %v2971 = vmul.f32 %v2970, %v1901
        %v2972 = vmul.f32 %v2970, %v1902
        %2975 = vrot.lane.b32.xlu0 %v2971, 124
        %v2976 = vpop.permute.xlu0 %2975
        %2977 = vrot.lane.b32.xlu0 %v2972, 124
        %v2978 = vpop.permute.xlu0 %2977
        %v2981 = vadd.f32 %v2967, %v2976
        %v2982 = vadd.f32 %v2968, %v2978
        %s2983 = sld [smem:[#allocation5 + $0x35]]
        %v2984 = vstv %s2983
        %v2985 = vmul.f32 %v2984, %v1904
        %v2986 = vmul.f32 %v2984, %v1905
        %2989 = vrot.lane.b32.xlu0 %v2985, 124
        %v2990 = vpop.permute.xlu0 %2989
        %2991 = vrot.lane.b32.xlu0 %v2986, 124
        %v2992 = vpop.permute.xlu0 %2991
        %v2995 = vadd.f32 %v2981, %v2990
        %v2996 = vadd.f32 %v2982, %v2992
        %s2997 = sld [smem:[#allocation5 + $0xb]]
        %v2998 = vstv %s2997
        %v2999 = vmul.f32 %v2998, %v1901
        %v3000 = vmul.f32 %v2998, %v1902
        %v3001 = vmul.f32 %v2998, %v1903
        %v3005 = vrot.slane %v2999, 1
        %v3006 = vrot.slane %v3000, 1
        %v3007 = vsel %vm1927, %v3005, %v3006
        %v3008 = vrot.slane %v3001, 1
        %v3009 = vsel %vm1927, %v3006, %v3008
        %3010 = vrot.lane.b32.xlu0 %v3007, 124
        %v3011 = vpop.permute.xlu0 %3010
        %3012 = vrot.lane.b32.xlu0 %v3009, 124
        %v3013 = vpop.permute.xlu0 %3012
        %v3016 = vadd.f32 %v2995, %v3011
        %v3017 = vadd.f32 %v2996, %v3013
        %s3018 = sld [smem:[#allocation5 + $0x3c]]
        %v3019 = vstv %s3018
        %v3020 = vmul.f32 %v3019, %v1904
        %v3021 = vmul.f32 %v3019, %v1905
        %v3022 = vmul.f32 %v3019, %v1906
        %v3026 = vrot.slane %v3020, 1
        %v3027 = vrot.slane %v3021, 1
        %v3028 = vsel %vm1927, %v3026, %v3027
        %v3029 = vrot.slane %v3022, 1
        %v3030 = vsel %vm1927, %v3027, %v3029
        %3031 = vrot.lane.b32.xlu0 %v3028, 124
        %v3032 = vpop.permute.xlu0 %3031
        %3033 = vrot.lane.b32.xlu0 %v3030, 124
        %v3034 = vpop.permute.xlu0 %3033
        %v3037 = vadd.f32 %v3016, %v3032
        %v3038 = vadd.f32 %v3017, %v3034
        %s3039 = sld [smem:[#allocation5 + $0x12]]
        %v3040 = vstv %s3039
        %v3041 = vmul.f32 %v3040, %v1901
        %v3042 = vmul.f32 %v3040, %v1902
        %v3043 = vmul.f32 %v3040, %v1903
        %v3047 = vrot.slane %v3041, 2
        %v3048 = vrot.slane %v3042, 2
        %v3049 = vsel %vm1962, %v3047, %v3048
        %v3050 = vrot.slane %v3043, 2
        %v3051 = vsel %vm1962, %v3048, %v3050
        %3052 = vrot.lane.b32.xlu0 %v3049, 124
        %v3053 = vpop.permute.xlu0 %3052
        %3054 = vrot.lane.b32.xlu0 %v3051, 124
        %v3055 = vpop.permute.xlu0 %3054
        %v3058 = vadd.f32 %v3037, %v3053
        %v3059 = vadd.f32 %v3038, %v3055
        %s3060 = sld [smem:[#allocation5 + $0x43]]
        %v3061 = vstv %s3060
        %v3062 = vmul.f32 %v3061, %v1904
        %v3063 = vmul.f32 %v3061, %v1905
        %v3064 = vmul.f32 %v3061, %v1906
        %v3068 = vrot.slane %v3062, 2
        %v3069 = vrot.slane %v3063, 2
        %v3070 = vsel %vm1962, %v3068, %v3069
        %v3071 = vrot.slane %v3064, 2
        %v3072 = vsel %vm1962, %v3069, %v3071
        %3073 = vrot.lane.b32.xlu0 %v3070, 124
        %v3074 = vpop.permute.xlu0 %3073
        %3075 = vrot.lane.b32.xlu0 %v3072, 124
        %v3076 = vpop.permute.xlu0 %3075
        %v3079 = vadd.f32 %v3058, %v3074
        %v3080 = vadd.f32 %v3059, %v3076
        %s3081 = sld [smem:[#allocation5 + $0x19]]
        %v3082 = vstv %s3081
        %v3083 = vmul.f32 %v3082, %v1901
        %v3084 = vmul.f32 %v3082, %v1902
        %v3085 = vmul.f32 %v3082, %v1903
        %v3089 = vrot.slane %v3083, 3
        %v3090 = vrot.slane %v3084, 3
        %v3091 = vsel %vm1997, %v3089, %v3090
        %v3092 = vrot.slane %v3085, 3
        %v3093 = vsel %vm1997, %v3090, %v3092
        %3094 = vrot.lane.b32.xlu0 %v3091, 124
        %v3095 = vpop.permute.xlu0 %3094
        %3096 = vrot.lane.b32.xlu0 %v3093, 124
        %v3097 = vpop.permute.xlu0 %3096
        %v3100 = vadd.f32 %v3079, %v3095
        %v3101 = vadd.f32 %v3080, %v3097
        %s3102 = sld [smem:[#allocation5 + $0x4a]]
        %v3103 = vstv %s3102
        %v3104 = vmul.f32 %v3103, %v1904
        %v3105 = vmul.f32 %v3103, %v1905
        %v3106 = vmul.f32 %v3103, %v1906
        %v3110 = vrot.slane %v3104, 3
        %v3111 = vrot.slane %v3105, 3
        %v3112 = vsel %vm1997, %v3110, %v3111
        %v3113 = vrot.slane %v3106, 3
        %v3114 = vsel %vm1997, %v3111, %v3113
        %3115 = vrot.lane.b32.xlu0 %v3112, 124
        %v3116 = vpop.permute.xlu0 %3115
        %3117 = vrot.lane.b32.xlu0 %v3114, 124
        %v3118 = vpop.permute.xlu0 %3117
        %v3121 = vadd.f32 %v3100, %v3116
        %v3122 = vadd.f32 %v3101, %v3118
        %s3123 = sld [smem:[#allocation5 + $0x20]]
        %v3124 = vstv %s3123
        %v3125 = vmul.f32 %v3124, %v1901
        %v3126 = vmul.f32 %v3124, %v1902
        %v3127 = vmul.f32 %v3124, %v1903
        %v3131 = vrot.slane %v3125, 4
        %v3132 = vrot.slane %v3126, 4
        %v3133 = vsel %vm2032, %v3131, %v3132
        %v3134 = vrot.slane %v3127, 4
        %v3135 = vsel %vm2032, %v3132, %v3134
        %3136 = vrot.lane.b32.xlu0 %v3133, 124
        %v3137 = vpop.permute.xlu0 %3136
        %3138 = vrot.lane.b32.xlu0 %v3135, 124
        %v3139 = vpop.permute.xlu0 %3138
        %v3142 = vadd.f32 %v3121, %v3137
        %v3143 = vadd.f32 %v3122, %v3139
        %s3144 = sld [smem:[#allocation5 + $0x51]]
        %v3145 = vstv %s3144
        %v3146 = vmul.f32 %v3145, %v1904
        %v3147 = vmul.f32 %v3145, %v1905
        %v3148 = vmul.f32 %v3145, %v1906
        %v3152 = vrot.slane %v3146, 4
        %v3153 = vrot.slane %v3147, 4
        %v3154 = vsel %vm2032, %v3152, %v3153
        %v3155 = vrot.slane %v3148, 4
        %v3156 = vsel %vm2032, %v3153, %v3155
        %3157 = vrot.lane.b32.xlu0 %v3154, 124
        %v3158 = vpop.permute.xlu0 %3157
        %3159 = vrot.lane.b32.xlu0 %v3156, 124
        %v3160 = vpop.permute.xlu0 %3159
        %v3163 = vadd.f32 %v3142, %v3158
        %v3164 = vadd.f32 %v3143, %v3160
        %s3165 = sld [smem:[#allocation5 + $0x27]]
        %v3166 = vstv %s3165
        %v3167 = vmul.f32 %v3166, %v1901
        %v3168 = vmul.f32 %v3166, %v1902
        %v3169 = vmul.f32 %v3166, %v1903
        %v3173 = vrot.slane %v3167, 5
        %v3174 = vrot.slane %v3168, 5
        %v3175 = vsel %vm2067, %v3173, %v3174
        %v3176 = vrot.slane %v3169, 5
        %v3177 = vsel %vm2067, %v3174, %v3176
        %3178 = vrot.lane.b32.xlu0 %v3175, 124
        %v3179 = vpop.permute.xlu0 %3178
        %3180 = vrot.lane.b32.xlu0 %v3177, 124
        %v3181 = vpop.permute.xlu0 %3180
        %v3184 = vadd.f32 %v3163, %v3179
        %v3185 = vadd.f32 %v3164, %v3181
        %s3186 = sld [smem:[#allocation5 + $0x58]]
        %v3187 = vstv %s3186
        %v3188 = vmul.f32 %v3187, %v1904
        %v3189 = vmul.f32 %v3187, %v1905
        %v3190 = vmul.f32 %v3187, %v1906
        %v3194 = vrot.slane %v3188, 5
        %v3195 = vrot.slane %v3189, 5
        %v3196 = vsel %vm2067, %v3194, %v3195
        %v3197 = vrot.slane %v3190, 5
        %v3198 = vsel %vm2067, %v3195, %v3197
        %3199 = vrot.lane.b32.xlu0 %v3196, 124
        %v3200 = vpop.permute.xlu0 %3199
        %3201 = vrot.lane.b32.xlu0 %v3198, 124
        %v3202 = vpop.permute.xlu0 %3201
        %v3205 = vadd.f32 %v3184, %v3200
        %v3206 = vadd.f32 %v3185, %v3202
        %s3207 = sld [smem:[#allocation5 + $0x2e]]
        %v3208 = vstv %s3207
        %v3209 = vmul.f32 %v3208, %v1901
        %v3210 = vmul.f32 %v3208, %v1902
        %v3211 = vmul.f32 %v3208, %v1903
        %v3215 = vrot.slane %v3209, 6
        %v3216 = vrot.slane %v3210, 6
        %v3217 = vsel %vm2102, %v3215, %v3216
        %v3218 = vrot.slane %v3211, 6
        %v3219 = vsel %vm2102, %v3216, %v3218
        %3220 = vrot.lane.b32.xlu0 %v3217, 124
        %v3221 = vpop.permute.xlu0 %3220
        %3222 = vrot.lane.b32.xlu0 %v3219, 124
        %v3223 = vpop.permute.xlu0 %3222
        %v3226 = vadd.f32 %v3205, %v3221
        %v3227 = vadd.f32 %v3206, %v3223
        %s3228 = sld [smem:[#allocation5 + $0x5f]]
        %v3229 = vstv %s3228
        %v3230 = vmul.f32 %v3229, %v1904
        %v3231 = vmul.f32 %v3229, %v1905
        %v3232 = vmul.f32 %v3229, %v1906
        %v3236 = vrot.slane %v3230, 6
        %v3237 = vrot.slane %v3231, 6
        %v3238 = vsel %vm2102, %v3236, %v3237
        %v3239 = vrot.slane %v3232, 6
        %v3240 = vsel %vm2102, %v3237, %v3239
        %3241 = vrot.lane.b32.xlu0 %v3238, 124
        %v3242 = vpop.permute.xlu0 %3241
        %3243 = vrot.lane.b32.xlu0 %v3240, 124
        %v3244 = vpop.permute.xlu0 %3243
        %v3247 = vadd.f32 %v3226, %v3242
        %v3248 = vadd.f32 %v3227, %v3244
        %s3249 = sld [smem:[#allocation5 + $0x5]]
        %v3250 = vstv %s3249
        %v3251 = vmul.f32 %v3250, %v1901
        %v3252 = vmul.f32 %v3250, %v1902
        %3255 = vrot.lane.b32.xlu0 %v3251, 123
        %v3256 = vpop.permute.xlu0 %3255
        %3257 = vrot.lane.b32.xlu0 %v3252, 123
        %v3258 = vpop.permute.xlu0 %3257
        %v3261 = vadd.f32 %v3247, %v3256
        %v3262 = vadd.f32 %v3248, %v3258
        %s3263 = sld [smem:[#allocation5 + $0x36]]
        %v3264 = vstv %s3263
        %v3265 = vmul.f32 %v3264, %v1904
        %v3266 = vmul.f32 %v3264, %v1905
        %3269 = vrot.lane.b32.xlu0 %v3265, 123
        %v3270 = vpop.permute.xlu0 %3269
        %3271 = vrot.lane.b32.xlu0 %v3266, 123
        %v3272 = vpop.permute.xlu0 %3271
        %v3275 = vadd.f32 %v3261, %v3270
        %v3276 = vadd.f32 %v3262, %v3272
        %s3277 = sld [smem:[#allocation5 + $0xc]]
        %v3278 = vstv %s3277
        %v3279 = vmul.f32 %v3278, %v1901
        %v3280 = vmul.f32 %v3278, %v1902
        %v3281 = vmul.f32 %v3278, %v1903
        %v3285 = vrot.slane %v3279, 1
        %v3286 = vrot.slane %v3280, 1
        %v3287 = vsel %vm1927, %v3285, %v3286
        %v3288 = vrot.slane %v3281, 1
        %v3289 = vsel %vm1927, %v3286, %v3288
        %3290 = vrot.lane.b32.xlu0 %v3287, 123
        %v3291 = vpop.permute.xlu0 %3290
        %3292 = vrot.lane.b32.xlu0 %v3289, 123
        %v3293 = vpop.permute.xlu0 %3292
        %v3296 = vadd.f32 %v3275, %v3291
        %v3297 = vadd.f32 %v3276, %v3293
        %s3298 = sld [smem:[#allocation5 + $0x3d]]
        %v3299 = vstv %s3298
        %v3300 = vmul.f32 %v3299, %v1904
        %v3301 = vmul.f32 %v3299, %v1905
        %v3302 = vmul.f32 %v3299, %v1906
        %v3306 = vrot.slane %v3300, 1
        %v3307 = vrot.slane %v3301, 1
        %v3308 = vsel %vm1927, %v3306, %v3307
        %v3309 = vrot.slane %v3302, 1
        %v3310 = vsel %vm1927, %v3307, %v3309
        %3311 = vrot.lane.b32.xlu0 %v3308, 123
        %v3312 = vpop.permute.xlu0 %3311
        %3313 = vrot.lane.b32.xlu0 %v3310, 123
        %v3314 = vpop.permute.xlu0 %3313
        %v3317 = vadd.f32 %v3296, %v3312
        %v3318 = vadd.f32 %v3297, %v3314
        %s3319 = sld [smem:[#allocation5 + $0x13]]
        %v3320 = vstv %s3319
        %v3321 = vmul.f32 %v3320, %v1901
        %v3322 = vmul.f32 %v3320, %v1902
        %v3323 = vmul.f32 %v3320, %v1903
        %v3327 = vrot.slane %v3321, 2
        %v3328 = vrot.slane %v3322, 2
        %v3329 = vsel %vm1962, %v3327, %v3328
        %v3330 = vrot.slane %v3323, 2
        %v3331 = vsel %vm1962, %v3328, %v3330
        %3332 = vrot.lane.b32.xlu0 %v3329, 123
        %v3333 = vpop.permute.xlu0 %3332
        %3334 = vrot.lane.b32.xlu0 %v3331, 123
        %v3335 = vpop.permute.xlu0 %3334
        %v3338 = vadd.f32 %v3317, %v3333
        %v3339 = vadd.f32 %v3318, %v3335
        %s3340 = sld [smem:[#allocation5 + $0x44]]
        %v3341 = vstv %s3340
        %v3342 = vmul.f32 %v3341, %v1904
        %v3343 = vmul.f32 %v3341, %v1905
        %v3344 = vmul.f32 %v3341, %v1906
        %v3348 = vrot.slane %v3342, 2
        %v3349 = vrot.slane %v3343, 2
        %v3350 = vsel %vm1962, %v3348, %v3349
        %v3351 = vrot.slane %v3344, 2
        %v3352 = vsel %vm1962, %v3349, %v3351
        %3353 = vrot.lane.b32.xlu0 %v3350, 123
        %v3354 = vpop.permute.xlu0 %3353
        %3355 = vrot.lane.b32.xlu0 %v3352, 123
        %v3356 = vpop.permute.xlu0 %3355
        %v3359 = vadd.f32 %v3338, %v3354
        %v3360 = vadd.f32 %v3339, %v3356
        %s3361 = sld [smem:[#allocation5 + $0x1a]]
        %v3362 = vstv %s3361
        %v3363 = vmul.f32 %v3362, %v1901
        %v3364 = vmul.f32 %v3362, %v1902
        %v3365 = vmul.f32 %v3362, %v1903
        %v3369 = vrot.slane %v3363, 3
        %v3370 = vrot.slane %v3364, 3
        %v3371 = vsel %vm1997, %v3369, %v3370
        %v3372 = vrot.slane %v3365, 3
        %v3373 = vsel %vm1997, %v3370, %v3372
        %3374 = vrot.lane.b32.xlu0 %v3371, 123
        %v3375 = vpop.permute.xlu0 %3374
        %3376 = vrot.lane.b32.xlu0 %v3373, 123
        %v3377 = vpop.permute.xlu0 %3376
        %v3380 = vadd.f32 %v3359, %v3375
        %v3381 = vadd.f32 %v3360, %v3377
        %s3382 = sld [smem:[#allocation5 + $0x4b]]
        %v3383 = vstv %s3382
        %v3384 = vmul.f32 %v3383, %v1904
        %v3385 = vmul.f32 %v3383, %v1905
        %v3386 = vmul.f32 %v3383, %v1906
        %v3390 = vrot.slane %v3384, 3
        %v3391 = vrot.slane %v3385, 3
        %v3392 = vsel %vm1997, %v3390, %v3391
        %v3393 = vrot.slane %v3386, 3
        %v3394 = vsel %vm1997, %v3391, %v3393
        %3395 = vrot.lane.b32.xlu0 %v3392, 123
        %v3396 = vpop.permute.xlu0 %3395
        %3397 = vrot.lane.b32.xlu0 %v3394, 123
        %v3398 = vpop.permute.xlu0 %3397
        %v3401 = vadd.f32 %v3380, %v3396
        %v3402 = vadd.f32 %v3381, %v3398
        %s3403 = sld [smem:[#allocation5 + $0x21]]
        %v3404 = vstv %s3403
        %v3405 = vmul.f32 %v3404, %v1901
        %v3406 = vmul.f32 %v3404, %v1902
        %v3407 = vmul.f32 %v3404, %v1903
        %v3411 = vrot.slane %v3405, 4
        %v3412 = vrot.slane %v3406, 4
        %v3413 = vsel %vm2032, %v3411, %v3412
        %v3414 = vrot.slane %v3407, 4
        %v3415 = vsel %vm2032, %v3412, %v3414
        %3416 = vrot.lane.b32.xlu0 %v3413, 123
        %v3417 = vpop.permute.xlu0 %3416
        %3418 = vrot.lane.b32.xlu0 %v3415, 123
        %v3419 = vpop.permute.xlu0 %3418
        %v3422 = vadd.f32 %v3401, %v3417
        %v3423 = vadd.f32 %v3402, %v3419
        %s3424 = sld [smem:[#allocation5 + $0x52]]
        %v3425 = vstv %s3424
        %v3426 = vmul.f32 %v3425, %v1904
        %v3427 = vmul.f32 %v3425, %v1905
        %v3428 = vmul.f32 %v3425, %v1906
        %v3432 = vrot.slane %v3426, 4
        %v3433 = vrot.slane %v3427, 4
        %v3434 = vsel %vm2032, %v3432, %v3433
        %v3435 = vrot.slane %v3428, 4
        %v3436 = vsel %vm2032, %v3433, %v3435
        %3437 = vrot.lane.b32.xlu0 %v3434, 123
        %v3438 = vpop.permute.xlu0 %3437
        %3439 = vrot.lane.b32.xlu0 %v3436, 123
        %v3440 = vpop.permute.xlu0 %3439
        %v3443 = vadd.f32 %v3422, %v3438
        %v3444 = vadd.f32 %v3423, %v3440
        %s3445 = sld [smem:[#allocation5 + $0x28]]
        %v3446 = vstv %s3445
        %v3447 = vmul.f32 %v3446, %v1901
        %v3448 = vmul.f32 %v3446, %v1902
        %v3449 = vmul.f32 %v3446, %v1903
        %v3453 = vrot.slane %v3447, 5
        %v3454 = vrot.slane %v3448, 5
        %v3455 = vsel %vm2067, %v3453, %v3454
        %v3456 = vrot.slane %v3449, 5
        %v3457 = vsel %vm2067, %v3454, %v3456
        %3458 = vrot.lane.b32.xlu0 %v3455, 123
        %v3459 = vpop.permute.xlu0 %3458
        %3460 = vrot.lane.b32.xlu0 %v3457, 123
        %v3461 = vpop.permute.xlu0 %3460
        %v3464 = vadd.f32 %v3443, %v3459
        %v3465 = vadd.f32 %v3444, %v3461
        %s3466 = sld [smem:[#allocation5 + $0x59]]
        %v3467 = vstv %s3466
        %v3468 = vmul.f32 %v3467, %v1904
        %v3469 = vmul.f32 %v3467, %v1905
        %v3470 = vmul.f32 %v3467, %v1906
        %v3474 = vrot.slane %v3468, 5
        %v3475 = vrot.slane %v3469, 5
        %v3476 = vsel %vm2067, %v3474, %v3475
        %v3477 = vrot.slane %v3470, 5
        %v3478 = vsel %vm2067, %v3475, %v3477
        %3479 = vrot.lane.b32.xlu0 %v3476, 123
        %v3480 = vpop.permute.xlu0 %3479
        %3481 = vrot.lane.b32.xlu0 %v3478, 123
        %v3482 = vpop.permute.xlu0 %3481
        %v3485 = vadd.f32 %v3464, %v3480
        %v3486 = vadd.f32 %v3465, %v3482
        %s3487 = sld [smem:[#allocation5 + $0x2f]]
        %v3488 = vstv %s3487
        %v3489 = vmul.f32 %v3488, %v1901
        %v3490 = vmul.f32 %v3488, %v1902
        %v3491 = vmul.f32 %v3488, %v1903
        %v3495 = vrot.slane %v3489, 6
        %v3496 = vrot.slane %v3490, 6
        %v3497 = vsel %vm2102, %v3495, %v3496
        %v3498 = vrot.slane %v3491, 6
        %v3499 = vsel %vm2102, %v3496, %v3498
        %3500 = vrot.lane.b32.xlu0 %v3497, 123
        %v3501 = vpop.permute.xlu0 %3500
        %3502 = vrot.lane.b32.xlu0 %v3499, 123
        %v3503 = vpop.permute.xlu0 %3502
        %v3506 = vadd.f32 %v3485, %v3501
        %v3507 = vadd.f32 %v3486, %v3503
        %s3508 = sld [smem:[#allocation5 + $0x60]]
        %v3509 = vstv %s3508
        %v3510 = vmul.f32 %v3509, %v1904
        %v3511 = vmul.f32 %v3509, %v1905
        %v3512 = vmul.f32 %v3509, %v1906
        %v3516 = vrot.slane %v3510, 6
        %v3517 = vrot.slane %v3511, 6
        %v3518 = vsel %vm2102, %v3516, %v3517
        %v3519 = vrot.slane %v3512, 6
        %v3520 = vsel %vm2102, %v3517, %v3519
        %3521 = vrot.lane.b32.xlu0 %v3518, 123
        %v3522 = vpop.permute.xlu0 %3521
        %3523 = vrot.lane.b32.xlu0 %v3520, 123
        %v3524 = vpop.permute.xlu0 %3523
        %v3527 = vadd.f32 %v3506, %v3522
        %v3528 = vadd.f32 %v3507, %v3524
        %s3529 = sld [smem:[#allocation5 + $0x6]]
        %v3530 = vstv %s3529
        %v3531 = vmul.f32 %v3530, %v1901
        %v3532 = vmul.f32 %v3530, %v1902
        %3535 = vrot.lane.b32.xlu0 %v3531, 122
        %v3536 = vpop.permute.xlu0 %3535
        %3537 = vrot.lane.b32.xlu0 %v3532, 122
        %v3538 = vpop.permute.xlu0 %3537
        %v3541 = vadd.f32 %v3527, %v3536
        %v3542 = vadd.f32 %v3528, %v3538
        %s3543 = sld [smem:[#allocation5 + $0x37]]
        %v3544 = vstv %s3543
        %v3545 = vmul.f32 %v3544, %v1904
        %v3546 = vmul.f32 %v3544, %v1905
        %3549 = vrot.lane.b32.xlu0 %v3545, 122
        %v3550 = vpop.permute.xlu0 %3549
        %3551 = vrot.lane.b32.xlu0 %v3546, 122
        %v3552 = vpop.permute.xlu0 %3551
        %v3555 = vadd.f32 %v3541, %v3550
        %v3556 = vadd.f32 %v3542, %v3552
        %s3557 = sld [smem:[#allocation5 + $0xd]]
        %v3558 = vstv %s3557
        %v3559 = vmul.f32 %v3558, %v1901
        %v3560 = vmul.f32 %v3558, %v1902
        %v3561 = vmul.f32 %v3558, %v1903
        %v3565 = vrot.slane %v3559, 1
        %v3566 = vrot.slane %v3560, 1
        %v3567 = vsel %vm1927, %v3565, %v3566
        %v3568 = vrot.slane %v3561, 1
        %v3569 = vsel %vm1927, %v3566, %v3568
        %3570 = vrot.lane.b32.xlu0 %v3567, 122
        %v3571 = vpop.permute.xlu0 %3570
        %3572 = vrot.lane.b32.xlu0 %v3569, 122
        %v3573 = vpop.permute.xlu0 %3572
        %v3576 = vadd.f32 %v3555, %v3571
        %v3577 = vadd.f32 %v3556, %v3573
        %s3578 = sld [smem:[#allocation5 + $0x3e]]
        %v3579 = vstv %s3578
        %v3580 = vmul.f32 %v3579, %v1904
        %v3581 = vmul.f32 %v3579, %v1905
        %v3582 = vmul.f32 %v3579, %v1906
        %v3586 = vrot.slane %v3580, 1
        %v3587 = vrot.slane %v3581, 1
        %v3588 = vsel %vm1927, %v3586, %v3587
        %v3589 = vrot.slane %v3582, 1
        %v3590 = vsel %vm1927, %v3587, %v3589
        %3591 = vrot.lane.b32.xlu0 %v3588, 122
        %v3592 = vpop.permute.xlu0 %3591
        %3593 = vrot.lane.b32.xlu0 %v3590, 122
        %v3594 = vpop.permute.xlu0 %3593
        %v3597 = vadd.f32 %v3576, %v3592
        %v3598 = vadd.f32 %v3577, %v3594
        %s3599 = sld [smem:[#allocation5 + $0x14]]
        %v3600 = vstv %s3599
        %v3601 = vmul.f32 %v3600, %v1901
        %v3602 = vmul.f32 %v3600, %v1902
        %v3603 = vmul.f32 %v3600, %v1903
        %v3607 = vrot.slane %v3601, 2
        %v3608 = vrot.slane %v3602, 2
        %v3609 = vsel %vm1962, %v3607, %v3608
        %v3610 = vrot.slane %v3603, 2
        %v3611 = vsel %vm1962, %v3608, %v3610
        %3612 = vrot.lane.b32.xlu0 %v3609, 122
        %v3613 = vpop.permute.xlu0 %3612
        %3614 = vrot.lane.b32.xlu0 %v3611, 122
        %v3615 = vpop.permute.xlu0 %3614
        %v3618 = vadd.f32 %v3597, %v3613
        %v3619 = vadd.f32 %v3598, %v3615
        %s3620 = sld [smem:[#allocation5 + $0x45]]
        %v3621 = vstv %s3620
        %v3622 = vmul.f32 %v3621, %v1904
        %v3623 = vmul.f32 %v3621, %v1905
        %v3624 = vmul.f32 %v3621, %v1906
        %v3628 = vrot.slane %v3622, 2
        %v3629 = vrot.slane %v3623, 2
        %v3630 = vsel %vm1962, %v3628, %v3629
        %v3631 = vrot.slane %v3624, 2
        %v3632 = vsel %vm1962, %v3629, %v3631
        %3633 = vrot.lane.b32.xlu0 %v3630, 122
        %v3634 = vpop.permute.xlu0 %3633
        %3635 = vrot.lane.b32.xlu0 %v3632, 122
        %v3636 = vpop.permute.xlu0 %3635
        %v3639 = vadd.f32 %v3618, %v3634
        %v3640 = vadd.f32 %v3619, %v3636
        %s3641 = sld [smem:[#allocation5 + $0x1b]]
        %v3642 = vstv %s3641
        %v3643 = vmul.f32 %v3642, %v1901
        %v3644 = vmul.f32 %v3642, %v1902
        %v3645 = vmul.f32 %v3642, %v1903
        %v3649 = vrot.slane %v3643, 3
        %v3650 = vrot.slane %v3644, 3
        %v3651 = vsel %vm1997, %v3649, %v3650
        %v3652 = vrot.slane %v3645, 3
        %v3653 = vsel %vm1997, %v3650, %v3652
        %3654 = vrot.lane.b32.xlu0 %v3651, 122
        %v3655 = vpop.permute.xlu0 %3654
        %3656 = vrot.lane.b32.xlu0 %v3653, 122
        %v3657 = vpop.permute.xlu0 %3656
        %v3660 = vadd.f32 %v3639, %v3655
        %v3661 = vadd.f32 %v3640, %v3657
        %s3662 = sld [smem:[#allocation5 + $0x4c]]
        %v3663 = vstv %s3662
        %v3664 = vmul.f32 %v3663, %v1904
        %v3665 = vmul.f32 %v3663, %v1905
        %v3666 = vmul.f32 %v3663, %v1906
        %v3670 = vrot.slane %v3664, 3
        %v3671 = vrot.slane %v3665, 3
        %v3672 = vsel %vm1997, %v3670, %v3671
        %v3673 = vrot.slane %v3666, 3
        %v3674 = vsel %vm1997, %v3671, %v3673
        %3675 = vrot.lane.b32.xlu0 %v3672, 122
        %v3676 = vpop.permute.xlu0 %3675
        %3677 = vrot.lane.b32.xlu0 %v3674, 122
        %v3678 = vpop.permute.xlu0 %3677
        %v3681 = vadd.f32 %v3660, %v3676
        %v3682 = vadd.f32 %v3661, %v3678
        %s3683 = sld [smem:[#allocation5 + $0x22]]
        %v3684 = vstv %s3683
        %v3685 = vmul.f32 %v3684, %v1901
        %v3686 = vmul.f32 %v3684, %v1902
        %v3687 = vmul.f32 %v3684, %v1903
        %v3691 = vrot.slane %v3685, 4
        %v3692 = vrot.slane %v3686, 4
        %v3693 = vsel %vm2032, %v3691, %v3692
        %v3694 = vrot.slane %v3687, 4
        %v3695 = vsel %vm2032, %v3692, %v3694
        %3696 = vrot.lane.b32.xlu0 %v3693, 122
        %v3697 = vpop.permute.xlu0 %3696
        %3698 = vrot.lane.b32.xlu0 %v3695, 122
        %v3699 = vpop.permute.xlu0 %3698
        %v3702 = vadd.f32 %v3681, %v3697
        %v3703 = vadd.f32 %v3682, %v3699
        %s3704 = sld [smem:[#allocation5 + $0x53]]
        %v3705 = vstv %s3704
        %v3706 = vmul.f32 %v3705, %v1904
        %v3707 = vmul.f32 %v3705, %v1905
        %v3708 = vmul.f32 %v3705, %v1906
        %v3712 = vrot.slane %v3706, 4
        %v3713 = vrot.slane %v3707, 4
        %v3714 = vsel %vm2032, %v3712, %v3713
        %v3715 = vrot.slane %v3708, 4
        %v3716 = vsel %vm2032, %v3713, %v3715
        %3717 = vrot.lane.b32.xlu0 %v3714, 122
        %v3718 = vpop.permute.xlu0 %3717
        %3719 = vrot.lane.b32.xlu0 %v3716, 122
        %v3720 = vpop.permute.xlu0 %3719
        %v3723 = vadd.f32 %v3702, %v3718
        %v3724 = vadd.f32 %v3703, %v3720
        %s3725 = sld [smem:[#allocation5 + $0x29]]
        %v3726 = vstv %s3725
        %v3727 = vmul.f32 %v3726, %v1901
        %v3728 = vmul.f32 %v3726, %v1902
        %v3729 = vmul.f32 %v3726, %v1903
        %v3733 = vrot.slane %v3727, 5
        %v3734 = vrot.slane %v3728, 5
        %v3735 = vsel %vm2067, %v3733, %v3734
        %v3736 = vrot.slane %v3729, 5
        %v3737 = vsel %vm2067, %v3734, %v3736
        %3738 = vrot.lane.b32.xlu0 %v3735, 122
        %v3739 = vpop.permute.xlu0 %3738
        %3740 = vrot.lane.b32.xlu0 %v3737, 122
        %v3741 = vpop.permute.xlu0 %3740
        %v3744 = vadd.f32 %v3723, %v3739
        %v3745 = vadd.f32 %v3724, %v3741
        %s3746 = sld [smem:[#allocation5 + $0x5a]]
        %v3747 = vstv %s3746
        %v3748 = vmul.f32 %v3747, %v1904
        %v3749 = vmul.f32 %v3747, %v1905
        %v3750 = vmul.f32 %v3747, %v1906
        %v3754 = vrot.slane %v3748, 5
        %v3755 = vrot.slane %v3749, 5
        %v3756 = vsel %vm2067, %v3754, %v3755
        %v3757 = vrot.slane %v3750, 5
        %v3758 = vsel %vm2067, %v3755, %v3757
        %3759 = vrot.lane.b32.xlu0 %v3756, 122
        %v3760 = vpop.permute.xlu0 %3759
        %3761 = vrot.lane.b32.xlu0 %v3758, 122
        %v3762 = vpop.permute.xlu0 %3761
        %v3765 = vadd.f32 %v3744, %v3760
        %v3766 = vadd.f32 %v3745, %v3762
        %s3767 = sld [smem:[#allocation5 + $0x30]]
        %v3768 = vstv %s3767
        %v3769 = vmul.f32 %v3768, %v1901
        %v3770 = vmul.f32 %v3768, %v1902
        %v3771 = vmul.f32 %v3768, %v1903
        %v3775 = vrot.slane %v3769, 6
        %v3776 = vrot.slane %v3770, 6
        %v3777 = vsel %vm2102, %v3775, %v3776
        %v3778 = vrot.slane %v3771, 6
        %v3779 = vsel %vm2102, %v3776, %v3778
        %3780 = vrot.lane.b32.xlu0 %v3777, 122
        %v3781 = vpop.permute.xlu0 %3780
        %3782 = vrot.lane.b32.xlu0 %v3779, 122
        %v3783 = vpop.permute.xlu0 %3782
        %v3786 = vadd.f32 %v3765, %v3781
        %v3787 = vadd.f32 %v3766, %v3783
        %s3788 = sld [smem:[#allocation5 + $0x61]]
        %v3789 = vstv %s3788
        %v3790 = vmul.f32 %v3789, %v1904
        %v3791 = vmul.f32 %v3789, %v1905
        %v3792 = vmul.f32 %v3789, %v1906
        %v3796 = vrot.slane %v3790, 6
        %v3797 = vrot.slane %v3791, 6
        %v3798 = vsel %vm2102, %v3796, %v3797
        %v3799 = vrot.slane %v3792, 6
        %v3800 = vsel %vm2102, %v3797, %v3799
        %3801 = vrot.lane.b32.xlu0 %v3798, 122
        %v3802 = vpop.permute.xlu0 %3801
        %3803 = vrot.lane.b32.xlu0 %v3800, 122
        %v3804 = vpop.permute.xlu0 %3803
        %v3807 = vadd.f32 %v3786, %v3802
        %v3808 = vadd.f32 %v3787, %v3804
        %v3809 = vlaneseq
        %vm3810 = vcmp.ge.s32.totalorder %v3809, 0
        %vm3811 = vcmp.lt.s32.totalorder %v3809, 16
        %vm3812 = vmand %vm3810, %vm3811
        %3813 = vst.msk [vmem:[#allocation3] sm:$0x1] %vm3812, %v3807
        %v3816 = vunpack.c.l.s4 1966171168
        %v3817 = vunpack.c.0.s8 %v3816
        %v3818 = vlaneseq
        %v3819 = vshrl.u32 %v3818, 7
        %v3820 = vsub.s32 %v3817, %v3819
        %v3821 = vrot.slane %v3807, %v3820
        %v3822 = vcombine.high %v3821, %v3821
        %v3824 = vunpack.c.l.s4 1966171168
        %v3825 = vunpack.c.0.s8 %v3824
        %v3826 = vlaneseq
        %v3827 = vshrl.u32 %v3826, 7
        %v3828 = vsub.s32 %v3825, %v3827
        %v3829 = vrot.slane %v3821, %v3828
        %v3831 = vunpack.c.l.s4 1966171168
        %v3832 = vunpack.c.0.s8 %v3831
        %v3833 = vlaneseq
        %v3834 = vshrl.u32 %v3833, 7
        %v3835 = vsub.s32 %v3832, %v3834
        %v3836 = vrot.slane %v3822, %v3835
        %3837 = vrot.lane.b32.xlu0 %v3836, 16
        %v3838 = vpop.permute.xlu0 %3837
        %vm3840 = vcmp.ge.s32.totalorder %v3809, 16
        %vm3841 = vcmp.lt.s32.totalorder %v3809, 32
        %vm3842 = vmand %vm3840, %vm3841
        %3843 = vst.msk [vmem:[#allocation3] sm:$0x1] %vm3842, %v3838
        %v3844 = vcombine.high %v3829, %v3829
        %3845 = vrot.lane.b32.xlu0 %v3844, 32
        %v3846 = vpop.permute.xlu0 %3845
        %vm3848 = vcmp.ge.s32.totalorder %v3809, 32
        %vm3849 = vcmp.lt.s32.totalorder %v3809, 48
        %vm3850 = vmand %vm3848, %vm3849
        %3851 = vst.msk [vmem:[#allocation3] sm:$0x1] %vm3850, %v3846
        %v3852 = vcombine.high %v3836, %v3836
        %3853 = vrot.lane.b32.xlu0 %v3852, 48
        %v3854 = vpop.permute.xlu0 %3853
        %vm3856 = vcmp.ge.s32.totalorder %v3809, 48
        %vm3857 = vcmp.lt.s32.totalorder %v3809, 64
        %vm3858 = vmand %vm3856, %vm3857
        %3859 = vst.msk [vmem:[#allocation3] sm:$0x1] %vm3858, %v3854
        %v3860 = vcombine.high %v3807, %v3807
        %v3862 = vunpack.c.l.s4 1966171168
        %v3863 = vunpack.c.0.s8 %v3862
        %v3864 = vlaneseq
        %v3865 = vshrl.u32 %v3864, 7
        %v3866 = vsub.s32 %v3863, %v3865
        %v3867 = vrot.slane %v3860, %v3866
        %v3869 = vunpack.c.l.s4 1966171168
        %v3870 = vunpack.c.0.s8 %v3869
        %v3871 = vlaneseq
        %v3872 = vshrl.u32 %v3871, 7
        %v3873 = vsub.s32 %v3870, %v3872
        %v3874 = vrot.slane %v3867, %v3873
        %3875 = vrot.lane.b32.xlu0 %v3874, 64
        %v3876 = vpop.permute.xlu0 %3875
        %vm3878 = vcmp.ge.s32.totalorder %v3809, 64
        %vm3879 = vcmp.lt.s32.totalorder %v3809, 80
        %vm3880 = vmand %vm3878, %vm3879
        %3881 = vst.msk [vmem:[#allocation3] sm:$0x1] %vm3880, %v3876
        %v3882 = vcombine.high %v3867, %v3867
        %v3884 = vunpack.c.l.s4 1966171168
        %v3885 = vunpack.c.0.s8 %v3884
        %v3886 = vlaneseq
        %v3887 = vshrl.u32 %v3886, 7
        %v3888 = vsub.s32 %v3885, %v3887
        %v3889 = vrot.slane %v3882, %v3888
        %3890 = vrot.lane.b32.xlu0 %v3889, 80
        %v3891 = vpop.permute.xlu0 %3890
        %vm3893 = vcmp.ge.s32.totalorder %v3809, 80
        %vm3894 = vcmp.lt.s32.totalorder %v3809, 96
        %vm3895 = vmand %vm3893, %vm3894
        %3896 = vst.msk [vmem:[#allocation3] sm:$0x1] %vm3895, %v3891
        %v3897 = vcombine.high %v3874, %v3874
        %3898 = vrot.lane.b32.xlu0 %v3897, 96
        %v3899 = vpop.permute.xlu0 %3898
        %vm3901 = vcmp.ge.s32.totalorder %v3809, 96
        %vm3902 = vcmp.lt.s32.totalorder %v3809, 112
        %vm3903 = vmand %vm3901, %vm3902
        %3904 = vst.msk [vmem:[#allocation3] sm:$0x1] %vm3903, %v3899
        %v3905 = vcombine.high %v3889, %v3889
        %3906 = vrot.lane.b32.xlu0 %v3905, 112
        %v3907 = vpop.permute.xlu0 %3906
        %vm3909 = vcmp.ge.s32.totalorder %v3809, 112
        %vm3910 = vcmp.lt.s32.totalorder %v3809, 128
        %vm3911 = vmand %vm3909, %vm3910
        %3912 = vst.msk [vmem:[#allocation3] sm:$0x1] %vm3911, %v3907
        %3913 = vst.msk [vmem:[#allocation3 + $0x1] sm:$0x1] %vm3812, %v3808
        %v3916 = vunpack.c.l.s4 1966171168
        %v3917 = vunpack.c.0.s8 %v3916
        %v3918 = vlaneseq
        %v3919 = vshrl.u32 %v3918, 7
        %v3920 = vsub.s32 %v3917, %v3919
        %v3921 = vrot.slane %v3808, %v3920
        %v3922 = vcombine.high %v3921, %v3921
        %v3924 = vunpack.c.l.s4 1966171168
        %v3925 = vunpack.c.0.s8 %v3924
        %v3926 = vlaneseq
        %v3927 = vshrl.u32 %v3926, 7
        %v3928 = vsub.s32 %v3925, %v3927
        %v3929 = vrot.slane %v3921, %v3928
        %v3931 = vunpack.c.l.s4 1966171168
        %v3932 = vunpack.c.0.s8 %v3931
        %v3933 = vlaneseq
        %v3934 = vshrl.u32 %v3933, 7
        %v3935 = vsub.s32 %v3932, %v3934
        %v3936 = vrot.slane %v3922, %v3935
        %3937 = vrot.lane.b32.xlu0 %v3936, 16
        %v3938 = vpop.permute.xlu0 %3937
        %3940 = vst.msk [vmem:[#allocation3 + $0x1] sm:$0x1] %vm3842, %v3938
        %v3941 = vcombine.high %v3929, %v3929
        %3942 = vrot.lane.b32.xlu0 %v3941, 32
        %v3943 = vpop.permute.xlu0 %3942
        %3945 = vst.msk [vmem:[#allocation3 + $0x1] sm:$0x1] %vm3850, %v3943
        %v3946 = vcombine.high %v3936, %v3936
        %3947 = vrot.lane.b32.xlu0 %v3946, 48
        %v3948 = vpop.permute.xlu0 %3947
        %3950 = vst.msk [vmem:[#allocation3 + $0x1] sm:$0x1] %vm3858, %v3948
        %v3951 = vcombine.high %v3808, %v3808
        %v3953 = vunpack.c.l.s4 1966171168
        %v3954 = vunpack.c.0.s8 %v3953
        %v3955 = vlaneseq
        %v3956 = vshrl.u32 %v3955, 7
        %v3957 = vsub.s32 %v3954, %v3956
        %v3958 = vrot.slane %v3951, %v3957
        %v3960 = vunpack.c.l.s4 1966171168
        %v3961 = vunpack.c.0.s8 %v3960
        %v3962 = vlaneseq
        %v3963 = vshrl.u32 %v3962, 7
        %v3964 = vsub.s32 %v3961, %v3963
        %v3965 = vrot.slane %v3958, %v3964
        %3966 = vrot.lane.b32.xlu0 %v3965, 64
        %v3967 = vpop.permute.xlu0 %3966
        %3969 = vst.msk [vmem:[#allocation3 + $0x1] sm:$0x1] %vm3880, %v3967
        %v3970 = vcombine.high %v3958, %v3958
        %v3972 = vunpack.c.l.s4 1966171168
        %v3973 = vunpack.c.0.s8 %v3972
        %v3974 = vlaneseq
        %v3975 = vshrl.u32 %v3974, 7
        %v3976 = vsub.s32 %v3973, %v3975
        %v3977 = vrot.slane %v3970, %v3976
        %3978 = vrot.lane.b32.xlu0 %v3977, 80
        %v3979 = vpop.permute.xlu0 %3978
        %3981 = vst.msk [vmem:[#allocation3 + $0x1] sm:$0x1] %vm3895, %v3979
        %v3982 = vcombine.high %v3965, %v3965
        %3983 = vrot.lane.b32.xlu0 %v3982, 96
        %v3984 = vpop.permute.xlu0 %3983
        %3986 = vst.msk [vmem:[#allocation3 + $0x1] sm:$0x1] %vm3903, %v3984
        %v3987 = vcombine.high %v3977, %v3977
        %3988 = vrot.lane.b32.xlu0 %v3987, 112
        %v3989 = vpop.permute.xlu0 %3988
        %3991 = vst.msk [vmem:[#allocation3 + $0x1] sm:$0x1] %vm3911, %v3989
        %v3992 = vld [vmem:[#allocation3] sm:$0x3]
        %v3993 = vsub.f32 0.0, %v3992
        %v3994 = vmul.f32 %v3993, 1.442695
        %v3995 = vpow.pop %v3994
        %v3996 = vadd.f32 %v3995, 1.0
        %v3997 = vrcp.pop %v3996
        %v3998 = vmul.f32 1.0, %v3997
        %v4000 = vlaneseq
        %v4001 = vshrl.u32 %v4000, 7
        %v4002 = vsub.s32 0, %v4001
        %v4003 = vrot.slane %v3998, %v4002
        %v4004 = vlaneseq
        %v4005 = vshrl.u32 %v4004, 7
        %v4006 = vsub.s32 1, %v4005
        %v4007 = vrot.slane %v3998, %v4006
        %v4010 = vmul.f32 %v1545, %v4003
        %v4011 = vmul.f32 %v1546, %v4007
        %v4012 = vmul.f32 %v1547, %v4003
        %v4013 = vmul.f32 %v1548, %v4007
        %v4014 = vmul.f32 %v1549, %v4003
        %v4015 = vmul.f32 %v1550, %v4007
        %v4016 = vmul.f32 %v1551, %v4003
        %v4017 = vmul.f32 %v1552, %v4007
        %v4018 = vmul.f32 %v1553, %v4003
        %v4019 = vmul.f32 %v1554, %v4007
        %v4020 = vmul.f32 %v1555, %v4003
        %v4021 = vmul.f32 %v1556, %v4007
        %v4022 = vmul.f32 %v1557, %v4003
        %v4023 = vmul.f32 %v1558, %v4007
        %v4024 = vmul.f32 %v1559, %v4003
        %v4025 = vmul.f32 %v1560, %v4007
        %v4026 = vmul.f32 %v1561, %v4003
        %v4027 = vmul.f32 %v1562, %v4007
        %v4028 = vmul.f32 %v1563, %v4003
        %v4029 = vmul.f32 %v1564, %v4007
        %v4030 = vmul.f32 %v1565, %v4003
        %v4031 = vmul.f32 %v1566, %v4007
        %v4032 = vmul.f32 %v1567, %v4003
        %v4033 = vmul.f32 %v1568, %v4007
        %v4034 = vmul.f32 %v1569, %v4003
        %v4035 = vmul.f32 %v1570, %v4007
        %v4036 = vmul.f32 %v1571, %v4003
        %v4037 = vmul.f32 %v1572, %v4007
        %v4038 = vmul.f32 %v1573, %v4003
        %v4039 = vmul.f32 %v1574, %v4007
        %v4040 = vmul.f32 %v1575, %v4003
        %v4041 = vmul.f32 %v1576, %v4007
        %v4042 = vmul.f32 %v1577, %v4003
        %v4043 = vmul.f32 %v1578, %v4007
        %v4044 = vmul.f32 %v1579, %v4003
        %v4045 = vmul.f32 %v1580, %v4007
        %v4046 = vmul.f32 %v1581, %v4003
        %v4047 = vmul.f32 %v1582, %v4007
        %v4048 = vmul.f32 %v1583, %v4003
        %v4049 = vmul.f32 %v1584, %v4007
        %v4050 = vmul.f32 %v1585, %v4003
        %v4051 = vmul.f32 %v1586, %v4007
        %v4052 = vmul.f32 %v1587, %v4003
        %v4053 = vmul.f32 %v1588, %v4007
        %v4054 = vmul.f32 %v1589, %v4003
        %v4055 = vmul.f32 %v1590, %v4007
        %v4056 = vmul.f32 %v1591, %v4003
        %v4057 = vmul.f32 %v1592, %v4007
        %v4058 = vmul.f32 %v1593, %v4003
        %v4059 = vmul.f32 %v1594, %v4007
        %v4060 = vmul.f32 %v1595, %v4003
        %v4061 = vmul.f32 %v1596, %v4007
        %v4062 = vmul.f32 %v1597, %v4003
        %v4063 = vmul.f32 %v1598, %v4007
        %v4064 = vmul.f32 %v1599, %v4003
        %v4065 = vmul.f32 %v1600, %v4007
        %v4066 = vmul.f32 %v1601, %v4003
        %v4067 = vmul.f32 %v1602, %v4007
        %v4068 = vmul.f32 %v1603, %v4003
        %v4069 = vmul.f32 %v1604, %v4007
        %v4070 = vmul.f32 %v1605, %v4003
        %v4071 = vmul.f32 %v1606, %v4007
        %v4072 = vmul.f32 %v1607, %v4003
        %v4073 = vmul.f32 %v1608, %v4007
        %4074 = vst [vmem:[%s211] sm:$0xff] %v4010
        %4075 = vst [vmem:[%s211 + $0x8] sm:$0xff] %v4011
        %4076 = vst [vmem:[%s211 + $0x10] sm:$0xff] %v4012
        %4077 = vst [vmem:[%s211 + $0x18] sm:$0xff] %v4013
        %4078 = vst [vmem:[%s211 + $0x20] sm:$0xff] %v4014
        %4079 = vst [vmem:[%s211 + $0x28] sm:$0xff] %v4015
        %4080 = vst [vmem:[%s211 + $0x30] sm:$0xff] %v4016
        %4081 = vst [vmem:[%s211 + $0x38] sm:$0xff] %v4017
        %4082 = vst [vmem:[%s211 + $0x40] sm:$0xff] %v4018
        %4083 = vst [vmem:[%s211 + $0x48] sm:$0xff] %v4019
        %4084 = vst [vmem:[%s211 + $0x50] sm:$0xff] %v4020
        %4085 = vst [vmem:[%s211 + $0x58] sm:$0xff] %v4021
        %4086 = vst [vmem:[%s211 + $0x60] sm:$0xff] %v4022
        %4087 = vst [vmem:[%s211 + $0x68] sm:$0xff] %v4023
        %4088 = vst [vmem:[%s211 + $0x70] sm:$0xff] %v4024
        %4089 = vst [vmem:[%s211 + $0x78] sm:$0xff] %v4025
        %4090 = vst [vmem:[%s211 + $0x80] sm:$0xff] %v4026
        %4091 = vst [vmem:[%s211 + $0x88] sm:$0xff] %v4027
        %4092 = vst [vmem:[%s211 + $0x90] sm:$0xff] %v4028
        %4093 = vst [vmem:[%s211 + $0x98] sm:$0xff] %v4029
        %4094 = vst [vmem:[%s211 + $0xa0] sm:$0xff] %v4030
        %4095 = vst [vmem:[%s211 + $0xa8] sm:$0xff] %v4031
        %4096 = vst [vmem:[%s211 + $0xb0] sm:$0xff] %v4032
        %4097 = vst [vmem:[%s211 + $0xb8] sm:$0xff] %v4033
        %4098 = vst [vmem:[%s211 + $0xc0] sm:$0xff] %v4034
        %4099 = vst [vmem:[%s211 + $0xc8] sm:$0xff] %v4035
        %4100 = vst [vmem:[%s211 + $0xd0] sm:$0xff] %v4036
        %4101 = vst [vmem:[%s211 + $0xd8] sm:$0xff] %v4037
        %4102 = vst [vmem:[%s211 + $0xe0] sm:$0xff] %v4038
        %4103 = vst [vmem:[%s211 + $0xe8] sm:$0xff] %v4039
        %4104 = vst [vmem:[%s211 + $0xf0] sm:$0xff] %v4040
        %4105 = vst [vmem:[%s211 + $0xf8] sm:$0xff] %v4041
        %4106 = vst [vmem:[%s211 + $0x100] sm:$0xff] %v4042
        %4107 = vst [vmem:[%s211 + $0x108] sm:$0xff] %v4043
        %4108 = vst [vmem:[%s211 + $0x110] sm:$0xff] %v4044
        %4109 = vst [vmem:[%s211 + $0x118] sm:$0xff] %v4045
        %4110 = vst [vmem:[%s211 + $0x120] sm:$0xff] %v4046
        %4111 = vst [vmem:[%s211 + $0x128] sm:$0xff] %v4047
        %4112 = vst [vmem:[%s211 + $0x130] sm:$0xff] %v4048
        %4113 = vst [vmem:[%s211 + $0x138] sm:$0xff] %v4049
        %4114 = vst [vmem:[%s211 + $0x140] sm:$0xff] %v4050
        %4115 = vst [vmem:[%s211 + $0x148] sm:$0xff] %v4051
        %4116 = vst [vmem:[%s211 + $0x150] sm:$0xff] %v4052
        %4117 = vst [vmem:[%s211 + $0x158] sm:$0xff] %v4053
        %4118 = vst [vmem:[%s211 + $0x160] sm:$0xff] %v4054
        %4119 = vst [vmem:[%s211 + $0x168] sm:$0xff] %v4055
        %4120 = vst [vmem:[%s211 + $0x170] sm:$0xff] %v4056
        %4121 = vst [vmem:[%s211 + $0x178] sm:$0xff] %v4057
        %4122 = vst [vmem:[%s211 + $0x180] sm:$0xff] %v4058
        %4123 = vst [vmem:[%s211 + $0x188] sm:$0xff] %v4059
        %4124 = vst [vmem:[%s211 + $0x190] sm:$0xff] %v4060
        %4125 = vst [vmem:[%s211 + $0x198] sm:$0xff] %v4061
        %4126 = vst [vmem:[%s211 + $0x1a0] sm:$0xff] %v4062
        %4127 = vst [vmem:[%s211 + $0x1a8] sm:$0xff] %v4063
        %4128 = vst [vmem:[%s211 + $0x1b0] sm:$0xff] %v4064
        %4129 = vst [vmem:[%s211 + $0x1b8] sm:$0xff] %v4065
        %4130 = vst [vmem:[%s211 + $0x1c0] sm:$0xff] %v4066
        %4131 = vst [vmem:[%s211 + $0x1c8] sm:$0xff] %v4067
        %4132 = vst [vmem:[%s211 + $0x1d0] sm:$0xff] %v4068
        %4133 = vst [vmem:[%s211 + $0x1d8] sm:$0xff] %v4069
        %4134 = vst [vmem:[%s211 + $0x1e0] sm:$0xff] %v4070
        %4135 = vst [vmem:[%s211 + $0x1e8] sm:$0xff] %v4071
        %4136 = vst [vmem:[%s211 + $0x1f0] sm:$0xff] %v4072
        %4137 = vst [vmem:[%s211 + $0x1f8] sm:$0xff] %v4073
        %p4138 = scmp.lt.s32.totalorder %s16, 1
        %s4139 = scalar_select %p4138, %s16, 1
        %s4140 = smul.addr %s4139, 64
        %s4141 = smul.addr %s4140, 8
        %s4142 = scalar_lea.vmem %s4, %s4141
        // Predicated region
        $region41: #{cbam2d_forward.1} parent=35 // pred_check
          %p4143 = pneg %p123
        $region42: #{cbam2d_forward.1} parent=35 // pred_check_branch
          %4145 = sbr.rel (%p4143) target = $region44
        $region43: #{cbam2d_forward.1} parent=35 // pred_region
          _
        $region44: #{cbam2d_forward.1} parent=35 // pred_fallthru
          _
      $region36: #{cbam2d_forward.1} parent=5 // pred_fallthru
        _
      %p4146 = scmp.le.s32.totalorder 2, %s11
      // Predicated region
      $region45: #{cbam2d_forward.1} parent=5 // pred_check
        %p4147 = pneg %p4146
      $region46: #{cbam2d_forward.1} parent=5 // pred_check_branch
        %4149 = sbr.rel (%p4147) target = $region48
      $region47: #{cbam2d_forward.1} parent=5 // pred_region
        %s4150 = ssub.s32 %s11, 2
        // Predicated region
        $region49: #{cbam2d_forward.1} parent=47 // pred_check
          %p4151 = pneg %p129
        $region50: #{cbam2d_forward.1} parent=47 // pred_check_branch
          %4153 = sbr.rel (%p4151) target = $region52
        $region51: #{cbam2d_forward.1} parent=47 // pred_region
          %p4154 = scmp.lt.s32.totalorder %s17, 1
          %s4155 = scalar_select %p4154, %s17, 1
          %s4156 = smul.addr %s4155, 64
          %s4157 = smul.addr %s4156, 8
          %s4158 = scalar_lea.vmem %s4, %s4157
        $region52: #{cbam2d_forward.1} parent=47 // pred_fallthru
          _
      $region48: #{cbam2d_forward.1} parent=5 // pred_fallthru
        _
    $region6: #{cbam2d_forward.1} parent=1 // loop_footer
      %s15 = sadd.s32 1, %s11
    $region7: #{cbam2d_forward.1} parent=1 // loop_footer_branch
      %10 = sbr.rel target = $region3
    $region8: #{cbam2d_forward.1} parent=1 // loop_exit
      _
    %4159 = vsyncpa [#allocation6], 1
    %s4160 = scalar_lea.sflag [#allocation6], 1
    %4161 = vsyncpa %s4160, 1

</llo_original>
